<compile_context>
chip_gen: v7x
topology: tpu7x:2x2x1
jax: 0.10.0
libtpu: 0.0.40
codegen_flags: <defaults>
</compile_context>

<pallas_src>
import math

import jax
import jax.numpy as jnp
from jax.experimental import pallas as pl
from jax.experimental.pallas import tpu as pltpu

# ---- config (matches module __init__ semantics at small sizes) ----
B = 2            # batch size (= attended sequence length of the policy trm)
A = 4            # aug_num   (= "batch" axis of the policy trm)
L = 8            # MAX_ITEM_LIST_LENGTH (d_model of policy transformer)
H = 32           # hidden_size
H4 = H // 4
INNER = 64       # inner_size (dim_feedforward)
NL = 2           # policy_trm_num_layers
V = 64           # item vocabulary size for item_embeddings
EPS = 1e-5       # LayerNorm eps (PyTorch default)
N = B * A * L    # tokens per instance


# ---------------- packed parameter layout (static, host + kernel agree) ----
def _round8(n):
    return -(-n // 8) * 8

# 2-D weights, stored (in, out) so kernel computes y = x @ W (+ b).
_W_SHAPES = [("emb_fc1", (V, H4)),      # host-side fold of emb @ fc1_w
             ("wf_t", (A * L, A))]      # host-side transpose of fc_after weight
for _l in range(NL):
    _W_SHAPES += [(f"wq{_l}", (L, L)), (f"wk{_l}", (L, L)), (f"wv{_l}", (L, L)),
                  (f"wout{_l}", (L, L)),
                  (f"wff1{_l}", (L, INNER)), (f"wff2{_l}", (INNER, L))]

# 1-D parameters, one 128-lane row each.
_B_SHAPES = [("fc1_b", H4), ("fc2_w", H4), ("fc2_b", 1), ("bf", A)]
for _l in range(NL):
    _B_SHAPES += [(f"bq{_l}", L), (f"bk{_l}", L), (f"bv{_l}", L),
                  (f"bout{_l}", L), (f"g1{_l}", L), (f"be1{_l}", L),
                  (f"bff1{_l}", INNER), (f"bff2{_l}", L),
                  (f"g2{_l}", L), (f"be2{_l}", L)]

PACK_COLS = 128
_W_OFF = {}
_row = 0
for _name, (_r, _c) in _W_SHAPES:
    _W_OFF[_name] = (_row, _r, _c)     # 8-aligned sublane start, rows, cols
    _row += _round8(_r)
_B_OFF = {}
for _i, (_name, _w) in enumerate(_B_SHAPES):
    _B_OFF[_name] = (_row + _i, _w)
PACK_ROWS = _round8(_row + len(_B_SHAPES))        # = 328


def pack_params(p):
    """Host-side folds + packing into one (PACK_ROWS, 128) f32 buffer."""
    prepared = dict(p)
    # Exact eval-mode folds (no nonlinearity between emb lookup and fc1):
    prepared["emb_fc1"] = p["emb"] @ p["fc1_w"]            # (V, H4)
    prepared["wf_t"] = p["wf"].T                            # (A*L, A)
    buf = jnp.zeros((PACK_ROWS, PACK_COLS), jnp.float32)
    for name, (r0, r, c) in _W_OFF.items():
        buf = buf.at[r0:r0 + r, :c].set(prepared[name].astype(jnp.float32))
    for name, (r0, w) in _B_OFF.items():
        buf = buf.at[r0, :w].set(prepared[name].astype(jnp.float32))
    return buf


def _layer_norm(x, gamma, beta):
    # E[x^2] and E[x] are independent lane reductions (overlapping XLU pushes).
    mean = jnp.mean(x, axis=-1, keepdims=True)
    mean_sq = jnp.mean(x * x, axis=-1, keepdims=True)
    var = mean_sq - mean * mean
    return (x - mean) * jax.lax.rsqrt(var + EPS) * gamma + beta


# ------------------------------- kernel ------------------------------------
def policy_chooser_kernel(data_ref, p_ref, out_ref):
    def W(name):                       # 2-D weight view (rows, cols), lane-0 aligned
        r0, r, c = _W_OFF[name]
        return p_ref[pl.ds(r0, r), pl.ds(0, c)]

    def Bv(name):                      # (1, width) row-vector parameter
        r0, w = _B_OFF[name]
        return p_ref[pl.ds(r0, 1), pl.ds(0, w)]

    # ---- item_embeddings + fc_before_trm (emb folded into fc1 host-side) ----
    ids = data_ref[0]                                                    # (N, 1) int32
    cols = jax.lax.broadcasted_iota(jnp.int32, (N, V), 1)
    onehot = (ids == cols).astype(jnp.float32)                           # (N, V)
    h = jnp.dot(onehot, W("emb_fc1"), preferred_element_type=jnp.float32) + Bv("fc1_b")
    h = jnp.maximum(h, 0.0)                                              # Dropout = id, ReLU
    # 1-unit Linear as broadcast-mul + lane reduce (fc2_w kept in (1,H/4) layout)
    s = jnp.sum(h * Bv("fc2_w"), axis=-1, keepdims=True) + Bv("fc2_b")   # (N, 1)

    # policy-transformer tokens: row = b*A + a, feature dim = L.
    # This is the single remaining small (64-value) sublane->lane relayout.
    x = s.reshape(B * A, L)                                              # (8, 8)

    # ---- policy_trm_encoder: post-LN layers, nhead=1, d_model=L, seq axis = B ----
    scale = 1.0 / math.sqrt(L)
    for l in range(NL):                                                  # static unroll
        # three independent MXU dots (overlap in the MXU pipeline), no lane slicing
        q = jnp.dot(x, W(f"wq{l}"), preferred_element_type=jnp.float32) + Bv(f"bq{l}")
        k = jnp.dot(x, W(f"wk{l}"), preferred_element_type=jnp.float32) + Bv(f"bk{l}")
        v = jnp.dot(x, W(f"wv{l}"), preferred_element_type=jnp.float32) + Bv(f"bv{l}")
        # seq length is 2: roll by A swaps the two sequence positions (per a)
        k_sw = pltpu.roll(k, A, axis=0)                                  # partner keys
        v_sw = pltpu.roll(v, A, axis=0)                                  # partner values
        s_self = jnp.sum(q * k, axis=-1, keepdims=True) * scale          # (2A, 1)
        s_cross = jnp.sum(q * k_sw, axis=-1, keepdims=True) * scale
        m = jnp.maximum(s_self, s_cross)
        e_self = jnp.exp(s_self - m)
        e_cross = jnp.exp(s_cross - m)
        inv = pl.reciprocal(e_self + e_cross)                            # exact
        attn = (e_self * inv) * v + (e_cross * inv) * v_sw               # (2A, L)
        attn = (jnp.dot(attn, W(f"wout{l}"), preferred_element_type=jnp.float32)
                + Bv(f"bout{l}"))
        x = _layer_norm(x + attn, Bv(f"g1{l}"), Bv(f"be1{l}"))
        ff = (jnp.dot(x, W(f"wff1{l}"), preferred_element_type=jnp.float32)
              + Bv(f"bff1{l}"))
        ff = jnp.maximum(ff, 0.0)
        ff = (jnp.dot(ff, W(f"wff2{l}"), preferred_element_type=jnp.float32)
              + Bv(f"bff2{l}"))
        x = _layer_norm(x + ff, Bv(f"g2{l}"), Bv(f"be2{l}"))

    # ---- out.reshape(len(data), -1) ; fc_after_trm: Dropout(id) -> Linear ----
    flat = x.reshape(B, A * L)                                           # (B, A*L)
    out = jnp.dot(flat, W("wf_t"), preferred_element_type=jnp.float32) + Bv("bf")
    out_ref[0] = out                                                     # (B, A)


# ------------------------------- wrapper ------------------------------------
@jax.jit
def policy_chooser(data, packed_params):
    """data: (NB, B, A, L) int32 — NB independent PolicyChooser forward passes."""
    nb = data.shape[0]
    data_flat = data.reshape(nb, N, 1)          # ship tokens pre-flattened per instance

    flops_per = 2 * (N * V * H4 + N * H4
                     + NL * (4 * (B * A) * L * L + 2 * (B * A) * L * INNER)
                     + B * (A * L) * A)
    return pl.pallas_call(
        policy_chooser_kernel,
        grid=(nb,),
        in_specs=[
            # per-instance token ids
            pl.BlockSpec((1, N, 1), lambda i: (i, 0, 0)),
            # packed params: constant block index -> DMA'd once, resident for all steps
            pl.BlockSpec((PACK_ROWS, PACK_COLS), lambda i: (0, 0)),
        ],
        out_specs=pl.BlockSpec((1, B, A), lambda i: (i, 0, 0)),
        out_shape=jax.ShapeDtypeStruct((nb, B, A), jnp.float32),
        compiler_params=pltpu.CompilerParams(
            dimension_semantics=("parallel",),    # instances independent; v7x megacore
            vmem_limit_bytes=8 * 1024 * 1024,
        ),
        cost_estimate=pl.CostEstimate(
            flops=nb * flops_per,
            transcendentals=nb * (NL * 2 * (B * A) + 4 * (B * A)),
            bytes_accessed=PACK_ROWS * PACK_COLS * 4 + nb * (N * 4 + B * A * 4),
        ),
    )(data_flat, packed_params)


# ------------------------------- params -------------------------------------
def init_params(key):
    ks = jax.random.split(key, 9)
    std = 0.1
    p = {}
    p["emb"] = jax.random.normal(ks[0], (V, H), jnp.float32) * std
    p["fc1_w"] = jax.random.normal(ks[1], (H, H4), jnp.float32) * std     # (in, out)
    p["fc1_b"] = jnp.zeros((H4,), jnp.float32)
    p["fc2_w"] = jax.random.normal(ks[2], (H4,), jnp.float32) * std       # torch (1, H/4) row
    p["fc2_b"] = jnp.zeros((1,), jnp.float32)
    kq = jax.random.split(ks[3], NL)
    kk = jax.random.split(ks[4], NL)
    kv = jax.random.split(ks[5], NL)
    ko = jax.random.split(ks[6], NL)
    kf = jax.random.split(ks[7], 2 * NL)
    for l in range(NL):
        p[f"wq{l}"] = jax.random.normal(kq[l], (L, L), jnp.float32) * std
        p[f"wk{l}"] = jax.random.normal(kk[l], (L, L), jnp.float32) * std
        p[f"wv{l}"] = jax.random.normal(kv[l], (L, L), jnp.float32) * std
        p[f"bq{l}"] = jnp.zeros((L,), jnp.float32)
        p[f"bk{l}"] = jnp.zeros((L,), jnp.float32)
        p[f"bv{l}"] = jnp.zeros((L,), jnp.float32)
        p[f"wout{l}"] = jax.random.normal(ko[l], (L, L), jnp.float32) * std
        p[f"bout{l}"] = jnp.zeros((L,), jnp.float32)
        p[f"g1{l}"] = jnp.ones((L,), jnp.float32)
        p[f"be1{l}"] = jnp.zeros((L,), jnp.float32)
        p[f"wff1{l}"] = jax.random.normal(kf[2 * l], (L, INNER), jnp.float32) * std
        p[f"bff1{l}"] = jnp.zeros((INNER,), jnp.float32)
        p[f"wff2{l}"] = jax.random.normal(kf[2 * l + 1], (INNER, L), jnp.float32) * std
        p[f"bff2{l}"] = jnp.zeros((L,), jnp.float32)
        p[f"g2{l}"] = jnp.ones((L,), jnp.float32)
        p[f"be2{l}"] = jnp.zeros((L,), jnp.float32)
    p["wf"] = jax.random.normal(ks[8], (A, A * L), jnp.float32) * std     # torch (out, in)
    p["bf"] = jnp.zeros((A,), jnp.float32)
    return pack_params(p)


if __name__ == "__main__":
    NB = 8   # number of independent PolicyChooser evaluations batched over the grid
    key = jax.random.PRNGKey(0)
    kd, kp = jax.random.split(key)
    data = jax.random.randint(kd, (NB, B, A, L), 0, V, dtype=jnp.int32)
    params = init_params(kp)
    out = policy_chooser(data, params)
    jax.block_until_ready(out)
    assert out.shape == (NB, B, A) and out.dtype == jnp.float32
    assert bool(jnp.all(jnp.isfinite(out)))
    print("KERNEL_OK")
</pallas_src>

<mosaic_0001>
module attributes {stable_mosaic.version = 11 : i64} {
  func.func @policy_chooser_kernel(%arg0: i32, %arg1: memref<1x64x1xi32, #tpu.memory_space<vmem>>, %arg2: memref<328x128xf32, #tpu.memory_space<vmem>>, %arg3: memref<1x2x4xf32, #tpu.memory_space<vmem>>) attributes {dimension_semantics = [#tpu.dimension_semantics<parallel>], iteration_bounds = array<i64: 8>, scalar_prefetch = 0 : i64, scratch_operands = 0 : i64, tpu.core_type = #tpu.core_type<tc>, window_params = [{transform_indices = @transform_0, window_bounds = array<i64: 1, 64, 1>}, {pipeline_mode = #tpu.pipeline_mode<synchronous>, transform_indices = @transform_1, window_bounds = array<i64: 328, 128>}, {transform_indices = @transform_2, window_bounds = array<i64: 1, 2, 4>}]} {
    %c0 = arith.constant 0 : index
    %c0_0 = arith.constant 0 : index
    %c0_1 = arith.constant 0 : index
    %0 = vector.load %arg1[%c0, %c0_0, %c0_1] : memref<1x64x1xi32, #tpu.memory_space<vmem>>, vector<1x64x1xi32>
    %1 = vector.shape_cast %0 : vector<1x64x1xi32> to vector<64x1xi32>
    %2 = tpu.iota {dimensions = array<i32: 1>} : vector<64x64xi32>
    %3 = vector.broadcast %1 : vector<64x1xi32> to vector<64x64xi32>
    %4 = arith.cmpi eq, %3, %2 : vector<64x64xi32>
    %5 = arith.extui %4 : vector<64x64xi1> to vector<64x64xi32>
    %6 = arith.sitofp %5 : vector<64x64xi32> to vector<64x64xf32>
    %c0_2 = arith.constant 0 : index
    %c0_3 = arith.constant 0 : index
    %7 = vector.load %arg2[%c0_2, %c0_3] : memref<328x128xf32, #tpu.memory_space<vmem>>, vector<64x8xf32>
    %cst = arith.constant dense<0.000000e+00> : vector<64x8xf32>
    %8 = tpu.matmul %6, %7, %cst {dimension_numbers = #tpu.dot_dimension_numbers<[1], [0], [0], [1], [0, 0, 1, 1], [], []>} : vector<64x64xf32>, vector<64x8xf32>, vector<64x8xf32> -> vector<64x8xf32>
    %c304 = arith.constant 304 : index
    %c0_4 = arith.constant 0 : index
    %9 = vector.load %arg2[%c304, %c0_4] : memref<328x128xf32, #tpu.memory_space<vmem>>, vector<1x8xf32>
    %10 = vector.broadcast %9 : vector<1x8xf32> to vector<64x8xf32>
    %11 = arith.addf %8, %10 : vector<64x8xf32>
    %cst_5 = arith.constant 0.000000e+00 : f32
    %12 = vector.broadcast %cst_5 : f32 to vector<64x8xf32>
    %13 = arith.maximumf %11, %12 : vector<64x8xf32>
    %c305 = arith.constant 305 : index
    %c0_6 = arith.constant 0 : index
    %14 = vector.load %arg2[%c305, %c0_6] : memref<328x128xf32, #tpu.memory_space<vmem>>, vector<1x8xf32>
    %15 = vector.broadcast %14 : vector<1x8xf32> to vector<64x8xf32>
    %16 = arith.mulf %13, %15 : vector<64x8xf32>
    %cst_7 = arith.constant dense<0.000000e+00> : vector<64xf32>
    %17 = vector.multi_reduction <add>, %16, %cst_7 [1] : vector<64x8xf32> to vector<64xf32>
    %18 = vector.shape_cast %17 : vector<64xf32> to vector<64x1xf32>
    %c306 = arith.constant 306 : index
    %c0_8 = arith.constant 0 : index
    %19 = vector.load %arg2[%c306, %c0_8] : memref<328x128xf32, #tpu.memory_space<vmem>>, vector<1x1xf32>
    %20 = vector.broadcast %19 : vector<1x1xf32> to vector<64x1xf32>
    %21 = arith.addf %18, %20 : vector<64x1xf32>
    %22 = vector.shape_cast %21 : vector<64x1xf32> to vector<8x8xf32>
    %c96 = arith.constant 96 : index
    %c0_9 = arith.constant 0 : index
    %23 = vector.load %arg2[%c96, %c0_9] : memref<328x128xf32, #tpu.memory_space<vmem>>, vector<8x8xf32>
    %cst_10 = arith.constant dense<0.000000e+00> : vector<8x8xf32>
    %24 = tpu.matmul %22, %23, %cst_10 {dimension_numbers = #tpu.dot_dimension_numbers<[1], [0], [0], [1], [0, 0, 1, 1], [], []>} : vector<8x8xf32>, vector<8x8xf32>, vector<8x8xf32> -> vector<8x8xf32>
    %c308 = arith.constant 308 : index
    %c0_11 = arith.constant 0 : index
    %25 = vector.load %arg2[%c308, %c0_11] : memref<328x128xf32, #tpu.memory_space<vmem>>, vector<1x8xf32>
    %26 = vector.broadcast %25 : vector<1x8xf32> to vector<8x8xf32>
    %27 = arith.addf %24, %26 : vector<8x8xf32>
    %c104 = arith.constant 104 : index
    %c0_12 = arith.constant 0 : index
    %28 = vector.load %arg2[%c104, %c0_12] : memref<328x128xf32, #tpu.memory_space<vmem>>, vector<8x8xf32>
    %cst_13 = arith.constant dense<0.000000e+00> : vector<8x8xf32>
    %29 = tpu.matmul %22, %28, %cst_13 {dimension_numbers = #tpu.dot_dimension_numbers<[1], [0], [0], [1], [0, 0, 1, 1], [], []>} : vector<8x8xf32>, vector<8x8xf32>, vector<8x8xf32> -> vector<8x8xf32>
    %c309 = arith.constant 309 : index
    %c0_14 = arith.constant 0 : index
    %30 = vector.load %arg2[%c309, %c0_14] : memref<328x128xf32, #tpu.memory_space<vmem>>, vector<1x8xf32>
    %31 = vector.broadcast %30 : vector<1x8xf32> to vector<8x8xf32>
    %32 = arith.addf %29, %31 : vector<8x8xf32>
    %c112 = arith.constant 112 : index
    %c0_15 = arith.constant 0 : index
    %33 = vector.load %arg2[%c112, %c0_15] : memref<328x128xf32, #tpu.memory_space<vmem>>, vector<8x8xf32>
    %cst_16 = arith.constant dense<0.000000e+00> : vector<8x8xf32>
    %34 = tpu.matmul %22, %33, %cst_16 {dimension_numbers = #tpu.dot_dimension_numbers<[1], [0], [0], [1], [0, 0, 1, 1], [], []>} : vector<8x8xf32>, vector<8x8xf32>, vector<8x8xf32> -> vector<8x8xf32>
    %c310 = arith.constant 310 : index
    %c0_17 = arith.constant 0 : index
    %35 = vector.load %arg2[%c310, %c0_17] : memref<328x128xf32, #tpu.memory_space<vmem>>, vector<1x8xf32>
    %36 = vector.broadcast %35 : vector<1x8xf32> to vector<8x8xf32>
    %37 = arith.addf %34, %36 : vector<8x8xf32>
    %c4_i32 = arith.constant 4 : i32
    %38 = tpu.dynamic_rotate %32 by %c4_i32 dim 0 : vector<8x8xf32>, i32 -> vector<8x8xf32>
    %c4_i32_18 = arith.constant 4 : i32
    %39 = tpu.dynamic_rotate %37 by %c4_i32_18 dim 0 : vector<8x8xf32>, i32 -> vector<8x8xf32>
    %40 = arith.mulf %27, %32 : vector<8x8xf32>
    %cst_19 = arith.constant dense<0.000000e+00> : vector<8xf32>
    %41 = vector.multi_reduction <add>, %40, %cst_19 [1] : vector<8x8xf32> to vector<8xf32>
    %42 = vector.shape_cast %41 : vector<8xf32> to vector<8x1xf32>
    %cst_20 = arith.constant 0.353553385 : f32
    %43 = vector.broadcast %cst_20 : f32 to vector<8x1xf32>
    %44 = arith.mulf %42, %43 : vector<8x1xf32>
    %45 = arith.mulf %27, %38 : vector<8x8xf32>
    %cst_21 = arith.constant dense<0.000000e+00> : vector<8xf32>
    %46 = vector.multi_reduction <add>, %45, %cst_21 [1] : vector<8x8xf32> to vector<8xf32>
    %47 = vector.shape_cast %46 : vector<8xf32> to vector<8x1xf32>
    %cst_22 = arith.constant 0.353553385 : f32
    %48 = vector.broadcast %cst_22 : f32 to vector<8x1xf32>
    %49 = arith.mulf %47, %48 : vector<8x1xf32>
    %50 = arith.maximumf %44, %49 : vector<8x1xf32>
    %51 = arith.subf %44, %50 : vector<8x1xf32>
    %52 = math.exp %51 : vector<8x1xf32>
    %53 = arith.subf %49, %50 : vector<8x1xf32>
    %54 = math.exp %53 : vector<8x1xf32>
    %55 = arith.addf %52, %54 : vector<8x1xf32>
    %56 = tpu.reciprocal %55 : vector<8x1xf32> -> vector<8x1xf32>
    %57 = arith.mulf %52, %56 : vector<8x1xf32>
    %58 = vector.broadcast %57 : vector<8x1xf32> to vector<8x8xf32>
    %59 = arith.mulf %58, %37 : vector<8x8xf32>
    %60 = arith.mulf %54, %56 : vector<8x1xf32>
    %61 = vector.broadcast %60 : vector<8x1xf32> to vector<8x8xf32>
    %62 = arith.mulf %61, %39 : vector<8x8xf32>
    %63 = arith.addf %59, %62 : vector<8x8xf32>
    %c120 = arith.constant 120 : index
    %c0_23 = arith.constant 0 : index
    %64 = vector.load %arg2[%c120, %c0_23] : memref<328x128xf32, #tpu.memory_space<vmem>>, vector<8x8xf32>
    %cst_24 = arith.constant dense<0.000000e+00> : vector<8x8xf32>
    %65 = tpu.matmul %63, %64, %cst_24 {dimension_numbers = #tpu.dot_dimension_numbers<[1], [0], [0], [1], [0, 0, 1, 1], [], []>} : vector<8x8xf32>, vector<8x8xf32>, vector<8x8xf32> -> vector<8x8xf32>
    %c311 = arith.constant 311 : index
    %c0_25 = arith.constant 0 : index
    %66 = vector.load %arg2[%c311, %c0_25] : memref<328x128xf32, #tpu.memory_space<vmem>>, vector<1x8xf32>
    %67 = vector.broadcast %66 : vector<1x8xf32> to vector<8x8xf32>
    %68 = arith.addf %65, %67 : vector<8x8xf32>
    %69 = arith.addf %22, %68 : vector<8x8xf32>
    %c312 = arith.constant 312 : index
    %c0_26 = arith.constant 0 : index
    %70 = vector.load %arg2[%c312, %c0_26] : memref<328x128xf32, #tpu.memory_space<vmem>>, vector<1x8xf32>
    %c313 = arith.constant 313 : index
    %c0_27 = arith.constant 0 : index
    %71 = vector.load %arg2[%c313, %c0_27] : memref<328x128xf32, #tpu.memory_space<vmem>>, vector<1x8xf32>
    %cst_28 = arith.constant dense<0.000000e+00> : vector<8xf32>
    %72 = vector.multi_reduction <add>, %69, %cst_28 [1] : vector<8x8xf32> to vector<8xf32>
    %73 = vector.shape_cast %72 : vector<8xf32> to vector<8x1xf32>
    %cst_29 = arith.constant 8.000000e+00 : f32
    %74 = vector.broadcast %cst_29 : f32 to vector<8x1xf32>
    %75 = arith.divf %73, %74 : vector<8x1xf32>
    %76 = arith.mulf %69, %69 : vector<8x8xf32>
    %cst_30 = arith.constant dense<0.000000e+00> : vector<8xf32>
    %77 = vector.multi_reduction <add>, %76, %cst_30 [1] : vector<8x8xf32> to vector<8xf32>
    %78 = vector.shape_cast %77 : vector<8xf32> to vector<8x1xf32>
    %cst_31 = arith.constant 8.000000e+00 : f32
    %79 = vector.broadcast %cst_31 : f32 to vector<8x1xf32>
    %80 = arith.divf %78, %79 : vector<8x1xf32>
    %81 = arith.mulf %75, %75 : vector<8x1xf32>
    %82 = arith.subf %80, %81 : vector<8x1xf32>
    %83 = vector.broadcast %75 : vector<8x1xf32> to vector<8x8xf32>
    %84 = arith.subf %69, %83 : vector<8x8xf32>
    %cst_32 = arith.constant 9.99999974E-6 : f32
    %85 = vector.broadcast %cst_32 : f32 to vector<8x1xf32>
    %86 = arith.addf %82, %85 : vector<8x1xf32>
    %87 = math.rsqrt %86 : vector<8x1xf32>
    %88 = vector.broadcast %87 : vector<8x1xf32> to vector<8x8xf32>
    %89 = arith.mulf %84, %88 : vector<8x8xf32>
    %90 = vector.broadcast %70 : vector<1x8xf32> to vector<8x8xf32>
    %91 = arith.mulf %89, %90 : vector<8x8xf32>
    %92 = vector.broadcast %71 : vector<1x8xf32> to vector<8x8xf32>
    %93 = arith.addf %91, %92 : vector<8x8xf32>
    %c128 = arith.constant 128 : index
    %c0_33 = arith.constant 0 : index
    %94 = vector.load %arg2[%c128, %c0_33] : memref<328x128xf32, #tpu.memory_space<vmem>>, vector<8x64xf32>
    %cst_34 = arith.constant dense<0.000000e+00> : vector<8x64xf32>
    %95 = tpu.matmul %93, %94, %cst_34 {dimension_numbers = #tpu.dot_dimension_numbers<[1], [0], [0], [1], [0, 0, 1, 1], [], []>} : vector<8x8xf32>, vector<8x64xf32>, vector<8x64xf32> -> vector<8x64xf32>
    %c314 = arith.constant 314 : index
    %c0_35 = arith.constant 0 : index
    %96 = vector.load %arg2[%c314, %c0_35] : memref<328x128xf32, #tpu.memory_space<vmem>>, vector<1x64xf32>
    %97 = vector.broadcast %96 : vector<1x64xf32> to vector<8x64xf32>
    %98 = arith.addf %95, %97 : vector<8x64xf32>
    %cst_36 = arith.constant 0.000000e+00 : f32
    %99 = vector.broadcast %cst_36 : f32 to vector<8x64xf32>
    %100 = arith.maximumf %98, %99 : vector<8x64xf32>
    %c136 = arith.constant 136 : index
    %c0_37 = arith.constant 0 : index
    %101 = vector.load %arg2[%c136, %c0_37] : memref<328x128xf32, #tpu.memory_space<vmem>>, vector<64x8xf32>
    %cst_38 = arith.constant dense<0.000000e+00> : vector<8x8xf32>
    %102 = tpu.matmul %100, %101, %cst_38 {dimension_numbers = #tpu.dot_dimension_numbers<[1], [0], [0], [1], [0, 0, 1, 1], [], []>} : vector<8x64xf32>, vector<64x8xf32>, vector<8x8xf32> -> vector<8x8xf32>
    %c315 = arith.constant 315 : index
    %c0_39 = arith.constant 0 : index
    %103 = vector.load %arg2[%c315, %c0_39] : memref<328x128xf32, #tpu.memory_space<vmem>>, vector<1x8xf32>
    %104 = vector.broadcast %103 : vector<1x8xf32> to vector<8x8xf32>
    %105 = arith.addf %102, %104 : vector<8x8xf32>
    %106 = arith.addf %93, %105 : vector<8x8xf32>
    %c316 = arith.constant 316 : index
    %c0_40 = arith.constant 0 : index
    %107 = vector.load %arg2[%c316, %c0_40] : memref<328x128xf32, #tpu.memory_space<vmem>>, vector<1x8xf32>
    %c317 = arith.constant 317 : index
    %c0_41 = arith.constant 0 : index
    %108 = vector.load %arg2[%c317, %c0_41] : memref<328x128xf32, #tpu.memory_space<vmem>>, vector<1x8xf32>
    %cst_42 = arith.constant dense<0.000000e+00> : vector<8xf32>
    %109 = vector.multi_reduction <add>, %106, %cst_42 [1] : vector<8x8xf32> to vector<8xf32>
    %110 = vector.shape_cast %109 : vector<8xf32> to vector<8x1xf32>
    %cst_43 = arith.constant 8.000000e+00 : f32
    %111 = vector.broadcast %cst_43 : f32 to vector<8x1xf32>
    %112 = arith.divf %110, %111 : vector<8x1xf32>
    %113 = arith.mulf %106, %106 : vector<8x8xf32>
    %cst_44 = arith.constant dense<0.000000e+00> : vector<8xf32>
    %114 = vector.multi_reduction <add>, %113, %cst_44 [1] : vector<8x8xf32> to vector<8xf32>
    %115 = vector.shape_cast %114 : vector<8xf32> to vector<8x1xf32>
    %cst_45 = arith.constant 8.000000e+00 : f32
    %116 = vector.broadcast %cst_45 : f32 to vector<8x1xf32>
    %117 = arith.divf %115, %116 : vector<8x1xf32>
    %118 = arith.mulf %112, %112 : vector<8x1xf32>
    %119 = arith.subf %117, %118 : vector<8x1xf32>
    %120 = vector.broadcast %112 : vector<8x1xf32> to vector<8x8xf32>
    %121 = arith.subf %106, %120 : vector<8x8xf32>
    %cst_46 = arith.constant 9.99999974E-6 : f32
    %122 = vector.broadcast %cst_46 : f32 to vector<8x1xf32>
    %123 = arith.addf %119, %122 : vector<8x1xf32>
    %124 = math.rsqrt %123 : vector<8x1xf32>
    %125 = vector.broadcast %124 : vector<8x1xf32> to vector<8x8xf32>
    %126 = arith.mulf %121, %125 : vector<8x8xf32>
    %127 = vector.broadcast %107 : vector<1x8xf32> to vector<8x8xf32>
    %128 = arith.mulf %126, %127 : vector<8x8xf32>
    %129 = vector.broadcast %108 : vector<1x8xf32> to vector<8x8xf32>
    %130 = arith.addf %128, %129 : vector<8x8xf32>
    %c200 = arith.constant 200 : index
    %c0_47 = arith.constant 0 : index
    %131 = vector.load %arg2[%c200, %c0_47] : memref<328x128xf32, #tpu.memory_space<vmem>>, vector<8x8xf32>
    %cst_48 = arith.constant dense<0.000000e+00> : vector<8x8xf32>
    %132 = tpu.matmul %130, %131, %cst_48 {dimension_numbers = #tpu.dot_dimension_numbers<[1], [0], [0], [1], [0, 0, 1, 1], [], []>} : vector<8x8xf32>, vector<8x8xf32>, vector<8x8xf32> -> vector<8x8xf32>
    %c318 = arith.constant 318 : index
    %c0_49 = arith.constant 0 : index
    %133 = vector.load %arg2[%c318, %c0_49] : memref<328x128xf32, #tpu.memory_space<vmem>>, vector<1x8xf32>
    %134 = vector.broadcast %133 : vector<1x8xf32> to vector<8x8xf32>
    %135 = arith.addf %132, %134 : vector<8x8xf32>
    %c208 = arith.constant 208 : index
    %c0_50 = arith.constant 0 : index
    %136 = vector.load %arg2[%c208, %c0_50] : memref<328x128xf32, #tpu.memory_space<vmem>>, vector<8x8xf32>
    %cst_51 = arith.constant dense<0.000000e+00> : vector<8x8xf32>
    %137 = tpu.matmul %130, %136, %cst_51 {dimension_numbers = #tpu.dot_dimension_numbers<[1], [0], [0], [1], [0, 0, 1, 1], [], []>} : vector<8x8xf32>, vector<8x8xf32>, vector<8x8xf32> -> vector<8x8xf32>
    %c319 = arith.constant 319 : index
    %c0_52 = arith.constant 0 : index
    %138 = vector.load %arg2[%c319, %c0_52] : memref<328x128xf32, #tpu.memory_space<vmem>>, vector<1x8xf32>
    %139 = vector.broadcast %138 : vector<1x8xf32> to vector<8x8xf32>
    %140 = arith.addf %137, %139 : vector<8x8xf32>
    %c216 = arith.constant 216 : index
    %c0_53 = arith.constant 0 : index
    %141 = vector.load %arg2[%c216, %c0_53] : memref<328x128xf32, #tpu.memory_space<vmem>>, vector<8x8xf32>
    %cst_54 = arith.constant dense<0.000000e+00> : vector<8x8xf32>
    %142 = tpu.matmul %130, %141, %cst_54 {dimension_numbers = #tpu.dot_dimension_numbers<[1], [0], [0], [1], [0, 0, 1, 1], [], []>} : vector<8x8xf32>, vector<8x8xf32>, vector<8x8xf32> -> vector<8x8xf32>
    %c320 = arith.constant 320 : index
    %c0_55 = arith.constant 0 : index
    %143 = vector.load %arg2[%c320, %c0_55] : memref<328x128xf32, #tpu.memory_space<vmem>>, vector<1x8xf32>
    %144 = vector.broadcast %143 : vector<1x8xf32> to vector<8x8xf32>
    %145 = arith.addf %142, %144 : vector<8x8xf32>
    %c4_i32_56 = arith.constant 4 : i32
    %146 = tpu.dynamic_rotate %140 by %c4_i32_56 dim 0 : vector<8x8xf32>, i32 -> vector<8x8xf32>
    %c4_i32_57 = arith.constant 4 : i32
    %147 = tpu.dynamic_rotate %145 by %c4_i32_57 dim 0 : vector<8x8xf32>, i32 -> vector<8x8xf32>
    %148 = arith.mulf %135, %140 : vector<8x8xf32>
    %cst_58 = arith.constant dense<0.000000e+00> : vector<8xf32>
    %149 = vector.multi_reduction <add>, %148, %cst_58 [1] : vector<8x8xf32> to vector<8xf32>
    %150 = vector.shape_cast %149 : vector<8xf32> to vector<8x1xf32>
    %cst_59 = arith.constant 0.353553385 : f32
    %151 = vector.broadcast %cst_59 : f32 to vector<8x1xf32>
    %152 = arith.mulf %150, %151 : vector<8x1xf32>
    %153 = arith.mulf %135, %146 : vector<8x8xf32>
    %cst_60 = arith.constant dense<0.000000e+00> : vector<8xf32>
    %154 = vector.multi_reduction <add>, %153, %cst_60 [1] : vector<8x8xf32> to vector<8xf32>
    %155 = vector.shape_cast %154 : vector<8xf32> to vector<8x1xf32>
    %cst_61 = arith.constant 0.353553385 : f32
    %156 = vector.broadcast %cst_61 : f32 to vector<8x1xf32>
    %157 = arith.mulf %155, %156 : vector<8x1xf32>
    %158 = arith.maximumf %152, %157 : vector<8x1xf32>
    %159 = arith.subf %152, %158 : vector<8x1xf32>
    %160 = math.exp %159 : vector<8x1xf32>
    %161 = arith.subf %157, %158 : vector<8x1xf32>
    %162 = math.exp %161 : vector<8x1xf32>
    %163 = arith.addf %160, %162 : vector<8x1xf32>
    %164 = tpu.reciprocal %163 : vector<8x1xf32> -> vector<8x1xf32>
    %165 = arith.mulf %160, %164 : vector<8x1xf32>
    %166 = vector.broadcast %165 : vector<8x1xf32> to vector<8x8xf32>
    %167 = arith.mulf %166, %145 : vector<8x8xf32>
    %168 = arith.mulf %162, %164 : vector<8x1xf32>
    %169 = vector.broadcast %168 : vector<8x1xf32> to vector<8x8xf32>
    %170 = arith.mulf %169, %147 : vector<8x8xf32>
    %171 = arith.addf %167, %170 : vector<8x8xf32>
    %c224 = arith.constant 224 : index
    %c0_62 = arith.constant 0 : index
    %172 = vector.load %arg2[%c224, %c0_62] : memref<328x128xf32, #tpu.memory_space<vmem>>, vector<8x8xf32>
    %cst_63 = arith.constant dense<0.000000e+00> : vector<8x8xf32>
    %173 = tpu.matmul %171, %172, %cst_63 {dimension_numbers = #tpu.dot_dimension_numbers<[1], [0], [0], [1], [0, 0, 1, 1], [], []>} : vector<8x8xf32>, vector<8x8xf32>, vector<8x8xf32> -> vector<8x8xf32>
    %c321 = arith.constant 321 : index
    %c0_64 = arith.constant 0 : index
    %174 = vector.load %arg2[%c321, %c0_64] : memref<328x128xf32, #tpu.memory_space<vmem>>, vector<1x8xf32>
    %175 = vector.broadcast %174 : vector<1x8xf32> to vector<8x8xf32>
    %176 = arith.addf %173, %175 : vector<8x8xf32>
    %177 = arith.addf %130, %176 : vector<8x8xf32>
    %c322 = arith.constant 322 : index
    %c0_65 = arith.constant 0 : index
    %178 = vector.load %arg2[%c322, %c0_65] : memref<328x128xf32, #tpu.memory_space<vmem>>, vector<1x8xf32>
    %c323 = arith.constant 323 : index
    %c0_66 = arith.constant 0 : index
    %179 = vector.load %arg2[%c323, %c0_66] : memref<328x128xf32, #tpu.memory_space<vmem>>, vector<1x8xf32>
    %cst_67 = arith.constant dense<0.000000e+00> : vector<8xf32>
    %180 = vector.multi_reduction <add>, %177, %cst_67 [1] : vector<8x8xf32> to vector<8xf32>
    %181 = vector.shape_cast %180 : vector<8xf32> to vector<8x1xf32>
    %cst_68 = arith.constant 8.000000e+00 : f32
    %182 = vector.broadcast %cst_68 : f32 to vector<8x1xf32>
    %183 = arith.divf %181, %182 : vector<8x1xf32>
    %184 = arith.mulf %177, %177 : vector<8x8xf32>
    %cst_69 = arith.constant dense<0.000000e+00> : vector<8xf32>
    %185 = vector.multi_reduction <add>, %184, %cst_69 [1] : vector<8x8xf32> to vector<8xf32>
    %186 = vector.shape_cast %185 : vector<8xf32> to vector<8x1xf32>
    %cst_70 = arith.constant 8.000000e+00 : f32
    %187 = vector.broadcast %cst_70 : f32 to vector<8x1xf32>
    %188 = arith.divf %186, %187 : vector<8x1xf32>
    %189 = arith.mulf %183, %183 : vector<8x1xf32>
    %190 = arith.subf %188, %189 : vector<8x1xf32>
    %191 = vector.broadcast %183 : vector<8x1xf32> to vector<8x8xf32>
    %192 = arith.subf %177, %191 : vector<8x8xf32>
    %cst_71 = arith.constant 9.99999974E-6 : f32
    %193 = vector.broadcast %cst_71 : f32 to vector<8x1xf32>
    %194 = arith.addf %190, %193 : vector<8x1xf32>
    %195 = math.rsqrt %194 : vector<8x1xf32>
    %196 = vector.broadcast %195 : vector<8x1xf32> to vector<8x8xf32>
    %197 = arith.mulf %192, %196 : vector<8x8xf32>
    %198 = vector.broadcast %178 : vector<1x8xf32> to vector<8x8xf32>
    %199 = arith.mulf %197, %198 : vector<8x8xf32>
    %200 = vector.broadcast %179 : vector<1x8xf32> to vector<8x8xf32>
    %201 = arith.addf %199, %200 : vector<8x8xf32>
    %c232 = arith.constant 232 : index
    %c0_72 = arith.constant 0 : index
    %202 = vector.load %arg2[%c232, %c0_72] : memref<328x128xf32, #tpu.memory_space<vmem>>, vector<8x64xf32>
    %cst_73 = arith.constant dense<0.000000e+00> : vector<8x64xf32>
    %203 = tpu.matmul %201, %202, %cst_73 {dimension_numbers = #tpu.dot_dimension_numbers<[1], [0], [0], [1], [0, 0, 1, 1], [], []>} : vector<8x8xf32>, vector<8x64xf32>, vector<8x64xf32> -> vector<8x64xf32>
    %c324 = arith.constant 324 : index
    %c0_74 = arith.constant 0 : index
    %204 = vector.load %arg2[%c324, %c0_74] : memref<328x128xf32, #tpu.memory_space<vmem>>, vector<1x64xf32>
    %205 = vector.broadcast %204 : vector<1x64xf32> to vector<8x64xf32>
    %206 = arith.addf %203, %205 : vector<8x64xf32>
    %cst_75 = arith.constant 0.000000e+00 : f32
    %207 = vector.broadcast %cst_75 : f32 to vector<8x64xf32>
    %208 = arith.maximumf %206, %207 : vector<8x64xf32>
    %c240 = arith.constant 240 : index
    %c0_76 = arith.constant 0 : index
    %209 = vector.load %arg2[%c240, %c0_76] : memref<328x128xf32, #tpu.memory_space<vmem>>, vector<64x8xf32>
    %cst_77 = arith.constant dense<0.000000e+00> : vector<8x8xf32>
    %210 = tpu.matmul %208, %209, %cst_77 {dimension_numbers = #tpu.dot_dimension_numbers<[1], [0], [0], [1], [0, 0, 1, 1], [], []>} : vector<8x64xf32>, vector<64x8xf32>, vector<8x8xf32> -> vector<8x8xf32>
    %c325 = arith.constant 325 : index
    %c0_78 = arith.constant 0 : index
    %211 = vector.load %arg2[%c325, %c0_78] : memref<328x128xf32, #tpu.memory_space<vmem>>, vector<1x8xf32>
    %212 = vector.broadcast %211 : vector<1x8xf32> to vector<8x8xf32>
    %213 = arith.addf %210, %212 : vector<8x8xf32>
    %214 = arith.addf %201, %213 : vector<8x8xf32>
    %c326 = arith.constant 326 : index
    %c0_79 = arith.constant 0 : index
    %215 = vector.load %arg2[%c326, %c0_79] : memref<328x128xf32, #tpu.memory_space<vmem>>, vector<1x8xf32>
    %c327 = arith.constant 327 : index
    %c0_80 = arith.constant 0 : index
    %216 = vector.load %arg2[%c327, %c0_80] : memref<328x128xf32, #tpu.memory_space<vmem>>, vector<1x8xf32>
    %cst_81 = arith.constant dense<0.000000e+00> : vector<8xf32>
    %217 = vector.multi_reduction <add>, %214, %cst_81 [1] : vector<8x8xf32> to vector<8xf32>
    %218 = vector.shape_cast %217 : vector<8xf32> to vector<8x1xf32>
    %cst_82 = arith.constant 8.000000e+00 : f32
    %219 = vector.broadcast %cst_82 : f32 to vector<8x1xf32>
    %220 = arith.divf %218, %219 : vector<8x1xf32>
    %221 = arith.mulf %214, %214 : vector<8x8xf32>
    %cst_83 = arith.constant dense<0.000000e+00> : vector<8xf32>
    %222 = vector.multi_reduction <add>, %221, %cst_83 [1] : vector<8x8xf32> to vector<8xf32>
    %223 = vector.shape_cast %222 : vector<8xf32> to vector<8x1xf32>
    %cst_84 = arith.constant 8.000000e+00 : f32
    %224 = vector.broadcast %cst_84 : f32 to vector<8x1xf32>
    %225 = arith.divf %223, %224 : vector<8x1xf32>
    %226 = arith.mulf %220, %220 : vector<8x1xf32>
    %227 = arith.subf %225, %226 : vector<8x1xf32>
    %228 = vector.broadcast %220 : vector<8x1xf32> to vector<8x8xf32>
    %229 = arith.subf %214, %228 : vector<8x8xf32>
    %cst_85 = arith.constant 9.99999974E-6 : f32
    %230 = vector.broadcast %cst_85 : f32 to vector<8x1xf32>
    %231 = arith.addf %227, %230 : vector<8x1xf32>
    %232 = math.rsqrt %231 : vector<8x1xf32>
    %233 = vector.broadcast %232 : vector<8x1xf32> to vector<8x8xf32>
    %234 = arith.mulf %229, %233 : vector<8x8xf32>
    %235 = vector.broadcast %215 : vector<1x8xf32> to vector<8x8xf32>
    %236 = arith.mulf %234, %235 : vector<8x8xf32>
    %237 = vector.broadcast %216 : vector<1x8xf32> to vector<8x8xf32>
    %238 = arith.addf %236, %237 : vector<8x8xf32>
    %239 = vector.shape_cast %238 : vector<8x8xf32> to vector<2x32xf32>
    %c64 = arith.constant 64 : index
    %c0_86 = arith.constant 0 : index
    %240 = vector.load %arg2[%c64, %c0_86] : memref<328x128xf32, #tpu.memory_space<vmem>>, vector<32x4xf32>
    %cst_87 = arith.constant dense<0.000000e+00> : vector<2x4xf32>
    %241 = tpu.matmul %239, %240, %cst_87 {dimension_numbers = #tpu.dot_dimension_numbers<[1], [0], [0], [1], [0, 0, 1, 1], [], []>} : vector<2x32xf32>, vector<32x4xf32>, vector<2x4xf32> -> vector<2x4xf32>
    %c307 = arith.constant 307 : index
    %c0_88 = arith.constant 0 : index
    %242 = vector.load %arg2[%c307, %c0_88] : memref<328x128xf32, #tpu.memory_space<vmem>>, vector<1x4xf32>
    %243 = vector.broadcast %242 : vector<1x4xf32> to vector<2x4xf32>
    %244 = arith.addf %241, %243 : vector<2x4xf32>
    %c0_89 = arith.constant 0 : index
    %c0_90 = arith.constant 0 : index
    %c0_91 = arith.constant 0 : index
    %245 = vector.load %arg3[%c0_89, %c0_90, %c0_91] : memref<1x2x4xf32, #tpu.memory_space<vmem>>, vector<1x2x4xf32>
    %246 = vector.shape_cast %245 : vector<1x2x4xf32> to vector<2x4xf32>
    %247 = vector.shape_cast %244 : vector<2x4xf32> to vector<1x2x4xf32>
    tpu.vector_store %arg3[%c0_89, %c0_90, %c0_91], %247 {strides = array<i32>} : memref<1x2x4xf32, #tpu.memory_space<vmem>>, vector<1x2x4xf32>,
    return
  }
  func.func @transform_0(%arg0: i32) -> (i32, i32, i32) {
    %c0_i32 = arith.constant 0 : i32
    %c0_i32_0 = arith.constant 0 : i32
    %c0_i32_1 = arith.constant 0 : i32
    return %arg0, %c0_i32, %c0_i32_0 : i32, i32, i32
  }
  func.func @transform_1(%arg0: i32) -> (i32, i32) {
    %c0_i32 = arith.constant 0 : i32
    %c0_i32_0 = arith.constant 0 : i32
    %c0_i32_1 = arith.constant 0 : i32
    return %c0_i32, %c0_i32_0 : i32, i32
  }
  func.func @transform_2(%arg0: i32) -> (i32, i32, i32) {
    %c0_i32 = arith.constant 0 : i32
    %c0_i32_0 = arith.constant 0 : i32
    %c0_i32_1 = arith.constant 0 : i32
    return %arg0, %c0_i32, %c0_i32_0 : i32, i32, i32
  }
}

</mosaic_0001>

<llo_original>
// kernel: policy_chooser.1
$region0: #{policy_chooser.1}
  #allocation0 [shape = 'u32[]', space=smem, size = 0x4, offset = 0x4, fixed_abs, tag = 'smem constant byte address 0x4 - core index']
  #allocation1 [shape = 'u32[144,128]{1,0:T(1,128)}', space=vmem, size = 0x12000, scoped, tag = 'internal scratch']
  %s0 = inlined_call_operand.vmem [shape: s32[8,64,1], index: 0, kind: input, shape index: {}]
  %s1 = inlined_call_operand.vmem [shape: f32[328,128], index: 1, kind: input, shape index: {}]
  %s2 = inlined_call_operand.vmem [shape: f32[8,2,4], index: 2, kind: output, shape index: {}]
  %s3 = sld [smem:[#allocation0]]
  $region41: #{policy_chooser.1} parent=0
    _
  %s5 = ssub.s32 1, %s3
  %s6 = scalar_select 0, %s5, %s3
  loop: start=0, step=1, limit=10
  $region2: #{policy_chooser.1} parent=0 // loop_pre_header
    _
  $region3: #{policy_chooser.1} parent=0 // loop_header
    %s8 = sphi 0, %s12
    %p9 = scmp.ge.s32.totalorder %s8, 10
    %s18 = sphi 0, %s20
    %s21 = sphi 0, %s18
    %s22 = sphi 0, %s21
    %s38 = sphi 0, %s22
    %s42 = sphi 0, %s42
    %s44 = sphi 0, %s42
    %s45 = sphi 0, %s44
    %s59 = sphi 0, %s45
    %s65 = sphi 0, %s67
    %s68 = sphi 0, %s65
    %s69 = sphi 0, %s68
    %s85 = sphi 0, %s69
  $region4: #{policy_chooser.1} parent=0 // loop_header_branch
    %11 = sbr.rel (%p9) target = $region8
  $region5: #{policy_chooser.1} parent=0 // loop_body
    %s13 = ssub.s32 %s8, 1
    %s14 = ssub.s32 %s8, 2
    %s15 = sadd.s32 %s8, 1
    %s16 = ssub.s32 %s8, %s15
    %p17 = scmp.eq.s32.totalorder %s16, 0
    %s19 = sadd.s32 %s18, 1
    %s20 = scalar_select %p17, %s18, %s19
    %p23 = pneg %p17
    %p24 = scmp.eq.s32.totalorder %s8, 7
    %p25 = por %p23, %p24
    %p26 = scmp.ne.s32.totalorder %s18, %s21
    %p27 = scmp.eq.s32.totalorder %s8, 0
    %p28 = por %p26, %p27
    %p29 = scmp.ne.s32.totalorder %s18, %s21
    %p30 = scmp.eq.s32.totalorder %s13, 7
    %p31 = por %p29, %p30
    %p32 = scmp.ne.s32.totalorder %s21, %s22
    %p33 = scmp.eq.s32.totalorder %s13, 0
    %p34 = por %p32, %p33
    %p35 = scmp.ne.s32.totalorder %s21, %s22
    %p36 = scmp.eq.s32.totalorder %s14, 7
    %p37 = por %p35, %p36
    %p39 = scmp.ne.s32.totalorder %s22, %s38
    %p40 = scmp.eq.s32.totalorder %s14, 0
    %p41 = por %p39, %p40
    %s43 = sadd.s32 %s42, 1
    %p46 = scmp.eq.s32.totalorder %s8, 7
    %p47 = scmp.ne.s32.totalorder %s42, %s44
    %p48 = scmp.eq.s32.totalorder %s8, 0
    %p49 = por %p47, %p48
    %p50 = scmp.ne.s32.totalorder %s42, %s44
    %p51 = scmp.eq.s32.totalorder %s13, 7
    %p52 = por %p50, %p51
    %p53 = scmp.ne.s32.totalorder %s44, %s45
    %p54 = scmp.eq.s32.totalorder %s13, 0
    %p55 = por %p53, %p54
    %p56 = scmp.ne.s32.totalorder %s44, %s45
    %p57 = scmp.eq.s32.totalorder %s14, 7
    %p58 = por %p56, %p57
    %p60 = scmp.ne.s32.totalorder %s45, %s59
    %p61 = scmp.eq.s32.totalorder %s14, 0
    %p62 = por %p60, %p61
    %s63 = ssub.s32 %s8, %s15
    %p64 = scmp.eq.s32.totalorder %s63, 0
    %s66 = sadd.s32 %s65, 1
    %s67 = scalar_select %p64, %s65, %s66
    %p70 = pneg %p64
    %p71 = scmp.eq.s32.totalorder %s8, 7
    %p72 = por %p70, %p71
    %p73 = scmp.ne.s32.totalorder %s65, %s68
    %p74 = scmp.eq.s32.totalorder %s8, 0
    %p75 = por %p73, %p74
    %p76 = scmp.ne.s32.totalorder %s65, %s68
    %p77 = scmp.eq.s32.totalorder %s13, 7
    %p78 = por %p76, %p77
    %p79 = scmp.ne.s32.totalorder %s68, %s69
    %p80 = scmp.eq.s32.totalorder %s13, 0
    %p81 = por %p79, %p80
    %p82 = scmp.ne.s32.totalorder %s68, %s69
    %p83 = scmp.eq.s32.totalorder %s14, 7
    %p84 = por %p82, %p83
    %p86 = scmp.ne.s32.totalorder %s69, %s85
    %p87 = scmp.eq.s32.totalorder %s14, 0
    %p88 = por %p86, %p87
    %p89 = scmp.le.s32.totalorder 1, %s8
    %p90 = scmp.lt.s32.totalorder %s8, 9
    %p91 = pnand %p89, %p90
    %p92 = pneg %p91
    // Predicated region
    $region9: #{policy_chooser.1} parent=5 // pred_check
      _
    $region10: #{policy_chooser.1} parent=5 // pred_check_branch
      %94 = sbr.rel (%p91) target = $region12
    $region11: #{policy_chooser.1} parent=5 // pred_region
      %s95 = ssub.s32 %s8, 1
      // Predicated region
      $region13: #{policy_chooser.1} parent=11 // pred_check
        %p96 = pneg %p55
      $region14: #{policy_chooser.1} parent=11 // pred_check_branch
        %98 = sbr.rel (%p96) target = $region16
      $region15: #{policy_chooser.1} parent=11 // pred_region
        _
      $region16: #{policy_chooser.1} parent=11 // pred_fallthru
        _
    $region12: #{policy_chooser.1} parent=5 // pred_fallthru
      _
    %p99 = scmp.lt.s32.totalorder %s8, 8
    // Predicated region
    $region17: #{policy_chooser.1} parent=5 // pred_check
      %p100 = pneg %p99
    $region18: #{policy_chooser.1} parent=5 // pred_check_branch
      %102 = sbr.rel (%p100) target = $region20
    $region19: #{policy_chooser.1} parent=5 // pred_region
      // Predicated region
      $region21: #{policy_chooser.1} parent=19 // pred_check
        %p103 = pneg %p28
      $region22: #{policy_chooser.1} parent=19 // pred_check_branch
        %105 = sbr.rel (%p103) target = $region24
      $region23: #{policy_chooser.1} parent=19 // pred_region
        %p106 = scmp.lt.s32.totalorder %s8, 7
        %s107 = scalar_select %p106, %s8, 7
        %s108 = smul.addr %s107, 8
        %s109 = smul.addr %s108, 8
        %s110 = scalar_lea.vmem %s0, %s109
      $region24: #{policy_chooser.1} parent=19 // pred_fallthru
        _
    $region20: #{policy_chooser.1} parent=5 // pred_fallthru
      _
    %p111 = scmp.le.s32.totalorder 1, %s8
    %p112 = scmp.lt.s32.totalorder %s8, 9
    %p113 = pnand %p111, %p112
    %p114 = pneg %p113
    // Predicated region
    $region25: #{policy_chooser.1} parent=5 // pred_check
      _
    $region26: #{policy_chooser.1} parent=5 // pred_check_branch
      %116 = sbr.rel (%p113) target = $region28
    $region27: #{policy_chooser.1} parent=5 // pred_region
      %s117 = ssub.s32 %s8, 1
      %p118 = scmp.lt.s32.totalorder %s13, 7
      %s119 = scalar_select %p118, %s13, 7
      %s120 = smul.addr %s119, 8
      %s121 = smul.addr %s120, 8
      %s122 = scalar_lea.vmem %s0, %s121
      %p123 = pneg %p34
      %p124 = pneg %p31
      %p125 = pneg %p55
      %p126 = pneg %p52
      %p127 = pneg %p81
      %p128 = pneg %p78
      %p129 = scmp.lt.s32.totalorder %s13, 7
      %s130 = scalar_select %p129, %s13, 7
      %s131 = smul.addr %s130, 2
      %s132 = scalar_lea.vmem %s2, %s131
      %p133 = scmp.lt.s32.totalorder %s13, 7
      %s134 = scalar_select %p133, %s13, 7
      %s135 = smul.addr %s134, 8
      %s136 = smul.addr %s135, 8
      %s137 = scalar_lea.vmem %s0, %s136
      %p138 = scmp.lt.s32.totalorder %s13, 7
      %s139 = scalar_select %p138, %s13, 7
      %s140 = smul.addr %s139, 2
      %s141 = scalar_lea.vmem %s2, %s140
      %v142 = vld [vmem:[%s137] sm:$0xff]
      %v143 = vld [vmem:[%s137 + $0x8] sm:$0xff]
      %v144 = vld [vmem:[%s137 + $0x10] sm:$0xff]
      %v145 = vld [vmem:[%s137 + $0x18] sm:$0xff]
      %v146 = vld [vmem:[%s137 + $0x20] sm:$0xff]
      %v147 = vld [vmem:[%s137 + $0x28] sm:$0xff]
      %v148 = vld [vmem:[%s137 + $0x30] sm:$0xff]
      %v149 = vld [vmem:[%s137 + $0x38] sm:$0xff]
      %v150 = vlaneseq
      %v151 = vand.u32 %v150, 127
      %152 = vset.pattern.permute.xlu0 0
      %153 = vperm.xlu0 %152, %v142
      %v154 = vpop.permute.xlu0 %153
      %155 = vset.pattern.permute.xlu0 0
      %156 = vperm.xlu0 %155, %v143
      %v157 = vpop.permute.xlu0 %156
      %158 = vset.pattern.permute.xlu0 0
      %159 = vperm.xlu0 %158, %v144
      %v160 = vpop.permute.xlu0 %159
      %161 = vset.pattern.permute.xlu0 0
      %162 = vperm.xlu0 %161, %v145
      %v163 = vpop.permute.xlu0 %162
      %164 = vset.pattern.permute.xlu0 0
      %165 = vperm.xlu0 %164, %v146
      %v166 = vpop.permute.xlu0 %165
      %167 = vset.pattern.permute.xlu0 0
      %168 = vperm.xlu0 %167, %v147
      %v169 = vpop.permute.xlu0 %168
      %170 = vset.pattern.permute.xlu0 0
      %171 = vperm.xlu0 %170, %v148
      %v172 = vpop.permute.xlu0 %171
      %173 = vset.pattern.permute.xlu0 0
      %174 = vperm.xlu0 %173, %v149
      %v175 = vpop.permute.xlu0 %174
      %vm176 = vcmp.eq.s32.totalorder %v154, %v151
      %vm177 = vcmp.eq.s32.totalorder %v157, %v151
      %vm178 = vcmp.eq.s32.totalorder %v160, %v151
      %vm179 = vcmp.eq.s32.totalorder %v163, %v151
      %vm180 = vcmp.eq.s32.totalorder %v166, %v151
      %vm181 = vcmp.eq.s32.totalorder %v169, %v151
      %vm182 = vcmp.eq.s32.totalorder %v172, %v151
      %vm183 = vcmp.eq.s32.totalorder %v175, %v151
      %v184 = vsel %vm176, 1, 0
      %v185 = vsel %vm177, 1, 0
      %v186 = vsel %vm178, 1, 0
      %v187 = vsel %vm179, 1, 0
      %v188 = vsel %vm180, 1, 0
      %v189 = vsel %vm181, 1, 0
      %v190 = vsel %vm182, 1, 0
      %v191 = vsel %vm183, 1, 0
      %v192 = vcvt.s32.f32 %v184
      %v193 = vcvt.s32.f32 %v185
      %v194 = vcvt.s32.f32 %v186
      %v195 = vcvt.s32.f32 %v187
      %v196 = vcvt.s32.f32 %v188
      %v197 = vcvt.s32.f32 %v189
      %v198 = vcvt.s32.f32 %v190
      %v199 = vcvt.s32.f32 %v191
      %v200 = vld [vmem:[%s1] sm:$0xff]
      %v201 = vld [vmem:[%s1 + $0x8] sm:$0xff]
      %v202 = vld [vmem:[%s1 + $0x10] sm:$0xff]
      %v203 = vld [vmem:[%s1 + $0x18] sm:$0xff]
      %v204 = vld [vmem:[%s1 + $0x20] sm:$0xff]
      %v205 = vld [vmem:[%s1 + $0x28] sm:$0xff]
      %v206 = vld [vmem:[%s1 + $0x30] sm:$0xff]
      %v207 = vld [vmem:[%s1 + $0x38] sm:$0xff]
      %v208 = vld [vmem:[%s1 + $0x130] sm:$0x1]
      %v209 = vlaneseq
      %v210 = vshrl.u32 %v209, 7
      %v211 = vsub.s32 0, %v210
      %v212 = vrot.slane %v208, %v211
      %vm213 = vcmask 523264
      %v215 = vsel %vm213, %v192, 0
      %v218 = vsel %vm213, %v193, 0
      %v221 = vsel %vm213, %v194, 0
      %v224 = vsel %vm213, %v195, 0
      %v227 = vsel %vm213, %v196, 0
      %v230 = vsel %vm213, %v197, 0
      %v233 = vsel %vm213, %v198, 0
      %v236 = vsel %vm213, %v199, 0
      %238 = vmatprep.subr.mxu0 0.0
      %239 = vmatpush1.msra.mxu0 %v200
      %240 = vmatprep.subr.mxu0 0.0
      %241 = vmatpush1.msra.mxu0 %v201
      %242 = vmatprep.subr.mxu0 0.0
      %243 = vmatpush1.msra.mxu0 %v202
      %244 = vmatprep.subr.mxu0 0.0
      %245 = vmatpush1.msra.mxu0 %v203
      %246 = vmatprep.subr.mxu0 0.0
      %247 = vmatpush1.msra.mxu0 %v204
      %248 = vmatprep.subr.mxu0 0.0
      %249 = vmatpush1.msra.mxu0 %v205
      %250 = vmatprep.subr.mxu0 0.0
      %251 = vmatpush1.msra.mxu0 %v206
      %252 = vmatprep.subr.mxu0 0.0
      %253 = vmatpush1.msra.mxu0 %v207
      %254 = vmatprep.subr.mxu0 0.0
      %255 = vmatpush1.msra.mxu0 0.0
      %256 = vmatprep.subr.mxu0 0.0
      %257 = vmatpush1.msra.mxu0 0.0
      %258 = vmatprep.subr.mxu0 0.0
      %259 = vmatpush1.msra.mxu0 0.0
      %260 = vmatprep.subr.mxu0 0.0
      %261 = vmatpush1.msra.mxu0 0.0
      %262 = vmatprep.subr.mxu0 0.0
      %263 = vmatpush1.msra.mxu0 0.0
      %264 = vmatprep.subr.mxu0 0.0
      %265 = vmatpush1.msra.mxu0 0.0
      %266 = vmatprep.subr.mxu0 0.0
      %267 = vmatpush1.msra.mxu0 0.0
      %268 = vmatprep.subr.mxu0 0.0
      %269 = vmatpush1.msra.mxu0 0.0
      %270 = vmatprep.subr.mxu0 0.0
      %271 = vmatpush1.msra.mxu0 0.0
      %272 = vmatprep.subr.mxu0 0.0
      %273 = vmatpush1.msra.mxu0 0.0
      %274 = vmatprep.subr.mxu0 0.0
      %275 = vmatpush1.msra.mxu0 0.0
      %276 = vmatprep.subr.mxu0 0.0
      %277 = vmatpush1.msra.mxu0 0.0
      %278 = vmatprep.subr.mxu0 0.0
      %279 = vmatpush1.msra.mxu0 0.0
      %280 = vmatprep.subr.mxu0 0.0
      %281 = vmatpush1.msra.mxu0 0.0
      %282 = vmatprep.subr.mxu0 0.0
      %283 = vmatpush1.msra.mxu0 0.0
      %284 = vmatprep.subr.mxu0 0.0
      %285 = vmatpush1.msra.mxu0 0.0
      %286 = vmatprep.subr.mxu0 0.0
      %287 = vmatpush1.msra.mxu0 0.0
      %288 = vmatprep.subr.mxu0 0.0
      %289 = vmatpush1.msra.mxu0 0.0
      %290 = vmatprep.subr.mxu0 0.0
      %291 = vmatpush1.msra.mxu0 0.0
      %292 = vmatprep.subr.mxu0 0.0
      %293 = vmatpush1.msra.mxu0 0.0
      %294 = vmatprep.subr.mxu0 0.0
      %295 = vmatpush1.msra.mxu0 0.0
      %296 = vmatprep.subr.mxu0 0.0
      %297 = vmatpush1.msra.mxu0 0.0
      %298 = vmatprep.subr.mxu0 0.0
      %299 = vmatpush1.msra.mxu0 0.0
      %300 = vmatprep.subr.mxu0 0.0
      %301 = vmatpush1.msra.mxu0 0.0
      %302 = vmatprep.mubr.f32.mxu0 0.0
      %303 = vmatmul.mubr.f32.gmra.mrb[0].mxu0 %v215
      %v304 = vpop.f32.mrb[0].mxu0
      %v305 = vadd.f32 %v212, %v304
      %v306 = vpop.f32.mrb[0].mxu0
      %307 = vmatprep.mubr.f32.mxu0 0.0
      %308 = vmatmul.mubr.f32.gmra.mrb[0].mxu0 %v218
      %v309 = vpop.f32.mrb[0].mxu0
      %v310 = vadd.f32 %v212, %v309
      %v311 = vpop.f32.mrb[0].mxu0
      %312 = vmatprep.mubr.f32.mxu0 0.0
      %313 = vmatmul.mubr.f32.gmra.mrb[0].mxu0 %v221
      %v314 = vpop.f32.mrb[0].mxu0
      %v315 = vadd.f32 %v212, %v314
      %v316 = vpop.f32.mrb[0].mxu0
      %317 = vmatprep.mubr.f32.mxu0 0.0
      %318 = vmatmul.mubr.f32.gmra.mrb[0].mxu0 %v224
      %v319 = vpop.f32.mrb[0].mxu0
      %v320 = vadd.f32 %v212, %v319
      %v321 = vpop.f32.mrb[0].mxu0
      %322 = vmatprep.mubr.f32.mxu0 0.0
      %323 = vmatmul.mubr.f32.gmra.mrb[0].mxu0 %v227
      %v324 = vpop.f32.mrb[0].mxu0
      %v325 = vadd.f32 %v212, %v324
      %v326 = vpop.f32.mrb[0].mxu0
      %327 = vmatprep.mubr.f32.mxu0 0.0
      %328 = vmatmul.mubr.f32.gmra.mrb[0].mxu0 %v230
      %v329 = vpop.f32.mrb[0].mxu0
      %v330 = vadd.f32 %v212, %v329
      %v331 = vpop.f32.mrb[0].mxu0
      %332 = vmatprep.mubr.f32.mxu0 0.0
      %333 = vmatmul.mubr.f32.gmra.mrb[0].mxu0 %v233
      %v334 = vpop.f32.mrb[0].mxu0
      %v335 = vadd.f32 %v212, %v334
      %v336 = vpop.f32.mrb[0].mxu0
      %337 = vmatprep.mubr.f32.mxu0 0.0
      %338 = vmatmul.mubr.f32.gmra.mrb[0].mxu0 %v236
      %v339 = vpop.f32.mrb[0].mxu0
      %v340 = vadd.f32 %v212, %v339
      %v341 = vpop.f32.mrb[0].mxu0
      %342 = vdwg.mxu0
      %v343 = vmax.f32 %v305, 0.0
      %v344 = vmax.f32 %v310, 0.0
      %v345 = vmax.f32 %v315, 0.0
      %v346 = vmax.f32 %v320, 0.0
      %v347 = vmax.f32 %v325, 0.0
      %v348 = vmax.f32 %v330, 0.0
      %v349 = vmax.f32 %v335, 0.0
      %v350 = vmax.f32 %v340, 0.0
      %v351 = vld [vmem:[%s1 + $0x131] sm:$0x1]
      %v352 = vlaneseq
      %v353 = vshrl.u32 %v352, 7
      %v354 = vsub.s32 0, %v353
      %v355 = vrot.slane %v351, %v354
      %v356 = vmul.f32 %v343, %v355
      %v357 = vmul.f32 %v344, %v355
      %v358 = vmul.f32 %v345, %v355
      %v359 = vmul.f32 %v346, %v355
      %v360 = vmul.f32 %v347, %v355
      %v361 = vmul.f32 %v348, %v355
      %v362 = vmul.f32 %v349, %v355
      %v363 = vmul.f32 %v350, %v355
      %vm364 = vcmask 64512
      %v365 = vsel %vm364, %v356, 0.0
      %366 = vadd.xlane.f32.xlu0 %v365
      %v367 = vpop.xlane.xlu0 %366
      %v368 = vsel %vm364, %v357, 0.0
      %369 = vadd.xlane.f32.xlu0 %v368
      %v370 = vpop.xlane.xlu0 %369
      %v371 = vsel %vm364, %v358, 0.0
      %372 = vadd.xlane.f32.xlu0 %v371
      %v373 = vpop.xlane.xlu0 %372
      %v374 = vsel %vm364, %v359, 0.0
      %375 = vadd.xlane.f32.xlu0 %v374
      %v376 = vpop.xlane.xlu0 %375
      %v377 = vsel %vm364, %v360, 0.0
      %378 = vadd.xlane.f32.xlu0 %v377
      %v379 = vpop.xlane.xlu0 %378
      %v380 = vsel %vm364, %v361, 0.0
      %381 = vadd.xlane.f32.xlu0 %v380
      %v382 = vpop.xlane.xlu0 %381
      %v383 = vsel %vm364, %v362, 0.0
      %384 = vadd.xlane.f32.xlu0 %v383
      %v385 = vpop.xlane.xlu0 %384
      %v386 = vsel %vm364, %v363, 0.0
      %387 = vadd.xlane.f32.xlu0 %v386
      %v388 = vpop.xlane.xlu0 %387
      %v389 = vld [vmem:[%s1 + $0x132] sm:$0x1]
      %v390 = vlaneseq
      %v391 = vshrl.u32 %v390, 7
      %v392 = vsub.s32 0, %v391
      %v393 = vrot.slane %v389, %v392
      %v394 = vadd.f32 %v367, %v393
      %v395 = vadd.f32 %v370, %v393
      %v396 = vadd.f32 %v373, %v393
      %v397 = vadd.f32 %v376, %v393
      %v398 = vadd.f32 %v379, %v393
      %v399 = vadd.f32 %v382, %v393
      %v400 = vadd.f32 %v385, %v393
      %v401 = vadd.f32 %v388, %v393
      %v402 = vld [vmem:[%s1 + $0x60] sm:$0xff]
      %v403 = vld [vmem:[%s1 + $0x134] sm:$0x1]
      %v404 = vlaneseq
      %v405 = vshrl.u32 %v404, 7
      %v406 = vsub.s32 0, %v405
      %v407 = vrot.slane %v403, %v406
      %416 = vset.pattern.permute.xlu0 0
      %417 = vperm.xlu0 %416, %v394
      %v418 = vpop.permute.xlu0 %417
      %419 = vset.pattern.permute.xlu0 0
      %420 = vperm.xlu0 %419, %v395
      %v421 = vpop.permute.xlu0 %420
      %422 = vset.pattern.permute.xlu0 0
      %423 = vperm.xlu0 %422, %v396
      %v424 = vpop.permute.xlu0 %423
      %425 = vset.pattern.permute.xlu0 0
      %426 = vperm.xlu0 %425, %v397
      %v427 = vpop.permute.xlu0 %426
      %428 = vset.pattern.permute.xlu0 0
      %429 = vperm.xlu0 %428, %v398
      %v430 = vpop.permute.xlu0 %429
      %431 = vset.pattern.permute.xlu0 0
      %432 = vperm.xlu0 %431, %v399
      %v433 = vpop.permute.xlu0 %432
      %434 = vset.pattern.permute.xlu0 0
      %435 = vperm.xlu0 %434, %v400
      %v436 = vpop.permute.xlu0 %435
      %437 = vset.pattern.permute.xlu0 0
      %438 = vperm.xlu0 %437, %v401
      %v439 = vpop.permute.xlu0 %438
      %v440 = vlaneseq
      %v441 = vshrl.u32 %v440, 7
      %v442 = vsub.s32 %v151, %v441
      %v443 = vrot.slane %v418, %v442
      %v444 = vlaneseq
      %v445 = vshrl.u32 %v444, 7
      %v446 = vsub.s32 %v151, %v445
      %v447 = vrot.slane %v421, %v446
      %v448 = vlaneseq
      %v449 = vshrl.u32 %v448, 7
      %v450 = vsub.s32 %v151, %v449
      %v451 = vrot.slane %v424, %v450
      %v452 = vlaneseq
      %v453 = vshrl.u32 %v452, 7
      %v454 = vsub.s32 %v151, %v453
      %v455 = vrot.slane %v427, %v454
      %v456 = vlaneseq
      %v457 = vshrl.u32 %v456, 7
      %v458 = vsub.s32 %v151, %v457
      %v459 = vrot.slane %v430, %v458
      %v460 = vlaneseq
      %v461 = vshrl.u32 %v460, 7
      %v462 = vsub.s32 %v151, %v461
      %v463 = vrot.slane %v433, %v462
      %v464 = vlaneseq
      %v465 = vshrl.u32 %v464, 7
      %v466 = vsub.s32 %v151, %v465
      %v467 = vrot.slane %v436, %v466
      %v468 = vlaneseq
      %v469 = vshrl.u32 %v468, 7
      %v470 = vsub.s32 %v151, %v469
      %v471 = vrot.slane %v439, %v470
      %vm472 = vcmask 1041409
      %v473 = vsel %vm472, %v447, %v443
      %vm474 = vcmask 1042434
      %v475 = vsel %vm474, %v451, %v473
      %vm476 = vcmask 1043459
      %v477 = vsel %vm476, %v455, %v475
      %vm478 = vcmask 1044484
      %v479 = vsel %vm478, %v459, %v477
      %vm480 = vcmask 1045509
      %v481 = vsel %vm480, %v463, %v479
      %vm482 = vcmask 1046534
      %v483 = vsel %vm482, %v467, %v481
      %vm484 = vcmask 1047559
      %v485 = vsel %vm484, %v471, %v483
      %v486 = vsel %vm364, %v485, 0
      %488 = vmatprep.subr.mxu0 0.0
      %489 = vmatpush1.msra.mxu0 %v402
      %490 = vmatprep.subr.mxu0 0.0
      %491 = vmatpush1.msra.mxu0 0.0
      %492 = vmatprep.subr.mxu0 0.0
      %493 = vmatpush1.msra.mxu0 0.0
      %494 = vmatprep.subr.mxu0 0.0
      %495 = vmatpush1.msra.mxu0 0.0
      %496 = vmatprep.subr.mxu0 0.0
      %497 = vmatpush1.msra.mxu0 0.0
      %498 = vmatprep.subr.mxu0 0.0
      %499 = vmatpush1.msra.mxu0 0.0
      %500 = vmatprep.subr.mxu0 0.0
      %501 = vmatpush1.msra.mxu0 0.0
      %502 = vmatprep.subr.mxu0 0.0
      %503 = vmatpush1.msra.mxu0 0.0
      %504 = vmatprep.subr.mxu0 0.0
      %505 = vmatpush1.msra.mxu0 0.0
      %506 = vmatprep.subr.mxu0 0.0
      %507 = vmatpush1.msra.mxu0 0.0
      %508 = vmatprep.subr.mxu0 0.0
      %509 = vmatpush1.msra.mxu0 0.0
      %510 = vmatprep.subr.mxu0 0.0
      %511 = vmatpush1.msra.mxu0 0.0
      %512 = vmatprep.subr.mxu0 0.0
      %513 = vmatpush1.msra.mxu0 0.0
      %514 = vmatprep.subr.mxu0 0.0
      %515 = vmatpush1.msra.mxu0 0.0
      %516 = vmatprep.subr.mxu0 0.0
      %517 = vmatpush1.msra.mxu0 0.0
      %518 = vmatprep.subr.mxu0 0.0
      %519 = vmatpush1.msra.mxu0 0.0
      %520 = vmatprep.subr.mxu0 0.0
      %521 = vmatpush1.msra.mxu0 0.0
      %522 = vmatprep.subr.mxu0 0.0
      %523 = vmatpush1.msra.mxu0 0.0
      %524 = vmatprep.subr.mxu0 0.0
      %525 = vmatpush1.msra.mxu0 0.0
      %526 = vmatprep.subr.mxu0 0.0
      %527 = vmatpush1.msra.mxu0 0.0
      %528 = vmatprep.subr.mxu0 0.0
      %529 = vmatpush1.msra.mxu0 0.0
      %530 = vmatprep.subr.mxu0 0.0
      %531 = vmatpush1.msra.mxu0 0.0
      %532 = vmatprep.subr.mxu0 0.0
      %533 = vmatpush1.msra.mxu0 0.0
      %534 = vmatprep.subr.mxu0 0.0
      %535 = vmatpush1.msra.mxu0 0.0
      %536 = vmatprep.subr.mxu0 0.0
      %537 = vmatpush1.msra.mxu0 0.0
      %538 = vmatprep.subr.mxu0 0.0
      %539 = vmatpush1.msra.mxu0 0.0
      %540 = vmatprep.subr.mxu0 0.0
      %541 = vmatpush1.msra.mxu0 0.0
      %542 = vmatprep.subr.mxu0 0.0
      %543 = vmatpush1.msra.mxu0 0.0
      %544 = vmatprep.subr.mxu0 0.0
      %545 = vmatpush1.msra.mxu0 0.0
      %546 = vmatprep.subr.mxu0 0.0
      %547 = vmatpush1.msra.mxu0 0.0
      %548 = vmatprep.subr.mxu0 0.0
      %549 = vmatpush1.msra.mxu0 0.0
      %550 = vmatprep.subr.mxu0 0.0
      %551 = vmatpush1.msra.mxu0 0.0
      %552 = vmatprep.mubr.f32.mxu0 0.0
      %553 = vmatmul.mubr.f32.gmra.mrb[0].mxu0 %v486
      %v554 = vpop.f32.mrb[0].mxu0
      %v555 = vadd.f32 %v407, %v554
      %v556 = vpop.f32.mrb[0].mxu0
      %557 = vdwg.mxu0
      %v558 = vld [vmem:[%s1 + $0x68] sm:$0xff]
      %v559 = vld [vmem:[%s1 + $0x135] sm:$0x1]
      %v560 = vlaneseq
      %v561 = vshrl.u32 %v560, 7
      %v562 = vsub.s32 0, %v561
      %v563 = vrot.slane %v559, %v562
      %564 = vmatprep.subr.mxu0 0.0
      %565 = vmatpush1.msra.mxu0 %v558
      %566 = vmatprep.subr.mxu0 0.0
      %567 = vmatpush1.msra.mxu0 0.0
      %568 = vmatprep.subr.mxu0 0.0
      %569 = vmatpush1.msra.mxu0 0.0
      %570 = vmatprep.subr.mxu0 0.0
      %571 = vmatpush1.msra.mxu0 0.0
      %572 = vmatprep.subr.mxu0 0.0
      %573 = vmatpush1.msra.mxu0 0.0
      %574 = vmatprep.subr.mxu0 0.0
      %575 = vmatpush1.msra.mxu0 0.0
      %576 = vmatprep.subr.mxu0 0.0
      %577 = vmatpush1.msra.mxu0 0.0
      %578 = vmatprep.subr.mxu0 0.0
      %579 = vmatpush1.msra.mxu0 0.0
      %580 = vmatprep.subr.mxu0 0.0
      %581 = vmatpush1.msra.mxu0 0.0
      %582 = vmatprep.subr.mxu0 0.0
      %583 = vmatpush1.msra.mxu0 0.0
      %584 = vmatprep.subr.mxu0 0.0
      %585 = vmatpush1.msra.mxu0 0.0
      %586 = vmatprep.subr.mxu0 0.0
      %587 = vmatpush1.msra.mxu0 0.0
      %588 = vmatprep.subr.mxu0 0.0
      %589 = vmatpush1.msra.mxu0 0.0
      %590 = vmatprep.subr.mxu0 0.0
      %591 = vmatpush1.msra.mxu0 0.0
      %592 = vmatprep.subr.mxu0 0.0
      %593 = vmatpush1.msra.mxu0 0.0
      %594 = vmatprep.subr.mxu0 0.0
      %595 = vmatpush1.msra.mxu0 0.0
      %596 = vmatprep.subr.mxu0 0.0
      %597 = vmatpush1.msra.mxu0 0.0
      %598 = vmatprep.subr.mxu0 0.0
      %599 = vmatpush1.msra.mxu0 0.0
      %600 = vmatprep.subr.mxu0 0.0
      %601 = vmatpush1.msra.mxu0 0.0
      %602 = vmatprep.subr.mxu0 0.0
      %603 = vmatpush1.msra.mxu0 0.0
      %604 = vmatprep.subr.mxu0 0.0
      %605 = vmatpush1.msra.mxu0 0.0
      %606 = vmatprep.subr.mxu0 0.0
      %607 = vmatpush1.msra.mxu0 0.0
      %608 = vmatprep.subr.mxu0 0.0
      %609 = vmatpush1.msra.mxu0 0.0
      %610 = vmatprep.subr.mxu0 0.0
      %611 = vmatpush1.msra.mxu0 0.0
      %612 = vmatprep.subr.mxu0 0.0
      %613 = vmatpush1.msra.mxu0 0.0
      %614 = vmatprep.subr.mxu0 0.0
      %615 = vmatpush1.msra.mxu0 0.0
      %616 = vmatprep.subr.mxu0 0.0
      %617 = vmatpush1.msra.mxu0 0.0
      %618 = vmatprep.subr.mxu0 0.0
      %619 = vmatpush1.msra.mxu0 0.0
      %620 = vmatprep.subr.mxu0 0.0
      %621 = vmatpush1.msra.mxu0 0.0
      %622 = vmatprep.subr.mxu0 0.0
      %623 = vmatpush1.msra.mxu0 0.0
      %624 = vmatprep.subr.mxu0 0.0
      %625 = vmatpush1.msra.mxu0 0.0
      %626 = vmatprep.subr.mxu0 0.0
      %627 = vmatpush1.msra.mxu0 0.0
      %628 = vmatprep.mubr.f32.mxu0 0.0
      %629 = vmatmul.mubr.f32.gmra.mrb[0].mxu0 %v486
      %v630 = vpop.f32.mrb[0].mxu0
      %v631 = vadd.f32 %v563, %v630
      %v632 = vpop.f32.mrb[0].mxu0
      %633 = vdwg.mxu0
      %v634 = vld [vmem:[%s1 + $0x70] sm:$0xff]
      %v635 = vld [vmem:[%s1 + $0x136] sm:$0x1]
      %v636 = vlaneseq
      %v637 = vshrl.u32 %v636, 7
      %v638 = vsub.s32 0, %v637
      %v639 = vrot.slane %v635, %v638
      %640 = vmatprep.subr.mxu0 0.0
      %641 = vmatpush1.msra.mxu0 %v634
      %642 = vmatprep.subr.mxu0 0.0
      %643 = vmatpush1.msra.mxu0 0.0
      %644 = vmatprep.subr.mxu0 0.0
      %645 = vmatpush1.msra.mxu0 0.0
      %646 = vmatprep.subr.mxu0 0.0
      %647 = vmatpush1.msra.mxu0 0.0
      %648 = vmatprep.subr.mxu0 0.0
      %649 = vmatpush1.msra.mxu0 0.0
      %650 = vmatprep.subr.mxu0 0.0
      %651 = vmatpush1.msra.mxu0 0.0
      %652 = vmatprep.subr.mxu0 0.0
      %653 = vmatpush1.msra.mxu0 0.0
      %654 = vmatprep.subr.mxu0 0.0
      %655 = vmatpush1.msra.mxu0 0.0
      %656 = vmatprep.subr.mxu0 0.0
      %657 = vmatpush1.msra.mxu0 0.0
      %658 = vmatprep.subr.mxu0 0.0
      %659 = vmatpush1.msra.mxu0 0.0
      %660 = vmatprep.subr.mxu0 0.0
      %661 = vmatpush1.msra.mxu0 0.0
      %662 = vmatprep.subr.mxu0 0.0
      %663 = vmatpush1.msra.mxu0 0.0
      %664 = vmatprep.subr.mxu0 0.0
      %665 = vmatpush1.msra.mxu0 0.0
      %666 = vmatprep.subr.mxu0 0.0
      %667 = vmatpush1.msra.mxu0 0.0
      %668 = vmatprep.subr.mxu0 0.0
      %669 = vmatpush1.msra.mxu0 0.0
      %670 = vmatprep.subr.mxu0 0.0
      %671 = vmatpush1.msra.mxu0 0.0
      %672 = vmatprep.subr.mxu0 0.0
      %673 = vmatpush1.msra.mxu0 0.0
      %674 = vmatprep.subr.mxu0 0.0
      %675 = vmatpush1.msra.mxu0 0.0
      %676 = vmatprep.subr.mxu0 0.0
      %677 = vmatpush1.msra.mxu0 0.0
      %678 = vmatprep.subr.mxu0 0.0
      %679 = vmatpush1.msra.mxu0 0.0
      %680 = vmatprep.subr.mxu0 0.0
      %681 = vmatpush1.msra.mxu0 0.0
      %682 = vmatprep.subr.mxu0 0.0
      %683 = vmatpush1.msra.mxu0 0.0
      %684 = vmatprep.subr.mxu0 0.0
      %685 = vmatpush1.msra.mxu0 0.0
      %686 = vmatprep.subr.mxu0 0.0
      %687 = vmatpush1.msra.mxu0 0.0
      %688 = vmatprep.subr.mxu0 0.0
      %689 = vmatpush1.msra.mxu0 0.0
      %690 = vmatprep.subr.mxu0 0.0
      %691 = vmatpush1.msra.mxu0 0.0
      %692 = vmatprep.subr.mxu0 0.0
      %693 = vmatpush1.msra.mxu0 0.0
      %694 = vmatprep.subr.mxu0 0.0
      %695 = vmatpush1.msra.mxu0 0.0
      %696 = vmatprep.subr.mxu0 0.0
      %697 = vmatpush1.msra.mxu0 0.0
      %698 = vmatprep.subr.mxu0 0.0
      %699 = vmatpush1.msra.mxu0 0.0
      %700 = vmatprep.subr.mxu0 0.0
      %701 = vmatpush1.msra.mxu0 0.0
      %702 = vmatprep.subr.mxu0 0.0
      %703 = vmatpush1.msra.mxu0 0.0
      %704 = vmatprep.mubr.f32.mxu0 0.0
      %705 = vmatmul.mubr.f32.gmra.mrb[0].mxu0 %v486
      %v706 = vpop.f32.mrb[0].mxu0
      %v707 = vadd.f32 %v639, %v706
      %v708 = vpop.f32.mrb[0].mxu0
      %709 = vdwg.mxu0
      %v710 = vrot.slane %v631, 4
      %v711 = vrot.slane %v707, 4
      %v712 = vmul.f32 %v555, %v631
      %v713 = vsel %vm364, %v712, 0.0
      %714 = vadd.xlane.f32.xlu0 %v713
      %v715 = vpop.xlane.xlu0 %714
      %v716 = vmul.f32 %v715, 0.35355338
      %v717 = vmul.f32 %v555, %v710
      %v718 = vsel %vm364, %v717, 0.0
      %719 = vadd.xlane.f32.xlu0 %v718
      %v720 = vpop.xlane.xlu0 %719
      %v721 = vmul.f32 %v720, 0.35355338
      %v722 = vmax.f32 %v716, %v721
      %v723 = vsub.f32 %v716, %v722
      %v724 = vmul.f32 %v723, 1.442695
      %v725 = vpow.pop %v724
      %v726 = vsub.f32 %v721, %v722
      %v727 = vmul.f32 %v726, 1.442695
      %v728 = vpow.pop %v727
      %v729 = vadd.f32 %v725, %v728
      %v730 = vrcp.pop %v729
      %v731 = vmul.f32 %v725, %v730
      %v732 = vmul.f32 %v731, %v707
      %v733 = vmul.f32 %v728, %v730
      %v734 = vmul.f32 %v733, %v711
      %v735 = vadd.f32 %v732, %v734
      %v736 = vld [vmem:[%s1 + $0x78] sm:$0xff]
      %v737 = vld [vmem:[%s1 + $0x137] sm:$0x1]
      %v738 = vlaneseq
      %v739 = vshrl.u32 %v738, 7
      %v740 = vsub.s32 0, %v739
      %v741 = vrot.slane %v737, %v740
      %v743 = vsel %vm364, %v735, 0
      %745 = vmatprep.subr.mxu0 0.0
      %746 = vmatpush1.msra.mxu0 %v736
      %747 = vmatprep.subr.mxu0 0.0
      %748 = vmatpush1.msra.mxu0 0.0
      %749 = vmatprep.subr.mxu0 0.0
      %750 = vmatpush1.msra.mxu0 0.0
      %751 = vmatprep.subr.mxu0 0.0
      %752 = vmatpush1.msra.mxu0 0.0
      %753 = vmatprep.subr.mxu0 0.0
      %754 = vmatpush1.msra.mxu0 0.0
      %755 = vmatprep.subr.mxu0 0.0
      %756 = vmatpush1.msra.mxu0 0.0
      %757 = vmatprep.subr.mxu0 0.0
      %758 = vmatpush1.msra.mxu0 0.0
      %759 = vmatprep.subr.mxu0 0.0
      %760 = vmatpush1.msra.mxu0 0.0
      %761 = vmatprep.subr.mxu0 0.0
      %762 = vmatpush1.msra.mxu0 0.0
      %763 = vmatprep.subr.mxu0 0.0
      %764 = vmatpush1.msra.mxu0 0.0
      %765 = vmatprep.subr.mxu0 0.0
      %766 = vmatpush1.msra.mxu0 0.0
      %767 = vmatprep.subr.mxu0 0.0
      %768 = vmatpush1.msra.mxu0 0.0
      %769 = vmatprep.subr.mxu0 0.0
      %770 = vmatpush1.msra.mxu0 0.0
      %771 = vmatprep.subr.mxu0 0.0
      %772 = vmatpush1.msra.mxu0 0.0
      %773 = vmatprep.subr.mxu0 0.0
      %774 = vmatpush1.msra.mxu0 0.0
      %775 = vmatprep.subr.mxu0 0.0
      %776 = vmatpush1.msra.mxu0 0.0
      %777 = vmatprep.subr.mxu0 0.0
      %778 = vmatpush1.msra.mxu0 0.0
      %779 = vmatprep.subr.mxu0 0.0
      %780 = vmatpush1.msra.mxu0 0.0
      %781 = vmatprep.subr.mxu0 0.0
      %782 = vmatpush1.msra.mxu0 0.0
      %783 = vmatprep.subr.mxu0 0.0
      %784 = vmatpush1.msra.mxu0 0.0
      %785 = vmatprep.subr.mxu0 0.0
      %786 = vmatpush1.msra.mxu0 0.0
      %787 = vmatprep.subr.mxu0 0.0
      %788 = vmatpush1.msra.mxu0 0.0
      %789 = vmatprep.subr.mxu0 0.0
      %790 = vmatpush1.msra.mxu0 0.0
      %791 = vmatprep.subr.mxu0 0.0
      %792 = vmatpush1.msra.mxu0 0.0
      %793 = vmatprep.subr.mxu0 0.0
      %794 = vmatpush1.msra.mxu0 0.0
      %795 = vmatprep.subr.mxu0 0.0
      %796 = vmatpush1.msra.mxu0 0.0
      %797 = vmatprep.subr.mxu0 0.0
      %798 = vmatpush1.msra.mxu0 0.0
      %799 = vmatprep.subr.mxu0 0.0
      %800 = vmatpush1.msra.mxu0 0.0
      %801 = vmatprep.subr.mxu0 0.0
      %802 = vmatpush1.msra.mxu0 0.0
      %803 = vmatprep.subr.mxu0 0.0
      %804 = vmatpush1.msra.mxu0 0.0
      %805 = vmatprep.subr.mxu0 0.0
      %806 = vmatpush1.msra.mxu0 0.0
      %807 = vmatprep.subr.mxu0 0.0
      %808 = vmatpush1.msra.mxu0 0.0
      %809 = vmatprep.mubr.f32.mxu0 0.0
      %810 = vmatmul.mubr.f32.gmra.mrb[0].mxu0 %v743
      %v811 = vpop.f32.mrb[0].mxu0
      %v812 = vadd.f32 %v741, %v811
      %v813 = vpop.f32.mrb[0].mxu0
      %814 = vdwg.mxu0
      %v816 = vlaneseq
      %v817 = vshrl.u32 %v816, 7
      %v818 = vsub.s32 0, %v817
      %v819 = vrot.slane %v812, %v818
      %821 = vbcast.lane.b32.xlu0 %v819, 256
      %v822 = vpop.permute.xlu0 %821
      %v823 = vlaneseq
      %v824 = vshrl.u32 %v823, 7
      %v825 = vsub.s32 1, %v824
      %v826 = vrot.slane %v812, %v825
      %828 = vbcast.lane.b32.xlu0 %v826, 256
      %v829 = vpop.permute.xlu0 %828
      %v830 = vlaneseq
      %v831 = vshrl.u32 %v830, 7
      %v832 = vsub.s32 2, %v831
      %v833 = vrot.slane %v812, %v832
      %835 = vbcast.lane.b32.xlu0 %v833, 256
      %v836 = vpop.permute.xlu0 %835
      %v837 = vlaneseq
      %v838 = vshrl.u32 %v837, 7
      %v839 = vsub.s32 3, %v838
      %v840 = vrot.slane %v812, %v839
      %842 = vbcast.lane.b32.xlu0 %v840, 256
      %v843 = vpop.permute.xlu0 %842
      %v844 = vlaneseq
      %v845 = vshrl.u32 %v844, 7
      %v846 = vsub.s32 4, %v845
      %v847 = vrot.slane %v812, %v846
      %849 = vbcast.lane.b32.xlu0 %v847, 256
      %v850 = vpop.permute.xlu0 %849
      %v851 = vlaneseq
      %v852 = vshrl.u32 %v851, 7
      %v853 = vsub.s32 5, %v852
      %v854 = vrot.slane %v812, %v853
      %856 = vbcast.lane.b32.xlu0 %v854, 256
      %v857 = vpop.permute.xlu0 %856
      %v858 = vlaneseq
      %v859 = vshrl.u32 %v858, 7
      %v860 = vsub.s32 6, %v859
      %v861 = vrot.slane %v812, %v860
      %863 = vbcast.lane.b32.xlu0 %v861, 256
      %v864 = vpop.permute.xlu0 %863
      %v865 = vlaneseq
      %v866 = vshrl.u32 %v865, 7
      %v867 = vsub.s32 7, %v866
      %v868 = vrot.slane %v812, %v867
      %870 = vbcast.lane.b32.xlu0 %v868, 256
      %v871 = vpop.permute.xlu0 %870
      %v880 = vadd.f32 %v394, %v822
      %v881 = vadd.f32 %v395, %v829
      %v882 = vadd.f32 %v396, %v836
      %v883 = vadd.f32 %v397, %v843
      %v884 = vadd.f32 %v398, %v850
      %v885 = vadd.f32 %v399, %v857
      %v886 = vadd.f32 %v400, %v864
      %v887 = vadd.f32 %v401, %v871
      %v888 = vld [vmem:[%s1 + $0x138] sm:$0x1]
      %v889 = vld [vmem:[%s1 + $0x139] sm:$0x1]
      %898 = vset.pattern.permute.xlu0 0
      %899 = vperm.xlu0 %898, %v880
      %v900 = vpop.permute.xlu0 %899
      %901 = vset.pattern.permute.xlu0 0
      %902 = vperm.xlu0 %901, %v881
      %v903 = vpop.permute.xlu0 %902
      %904 = vset.pattern.permute.xlu0 0
      %905 = vperm.xlu0 %904, %v882
      %v906 = vpop.permute.xlu0 %905
      %907 = vset.pattern.permute.xlu0 0
      %908 = vperm.xlu0 %907, %v883
      %v909 = vpop.permute.xlu0 %908
      %910 = vset.pattern.permute.xlu0 0
      %911 = vperm.xlu0 %910, %v884
      %v912 = vpop.permute.xlu0 %911
      %913 = vset.pattern.permute.xlu0 0
      %914 = vperm.xlu0 %913, %v885
      %v915 = vpop.permute.xlu0 %914
      %916 = vset.pattern.permute.xlu0 0
      %917 = vperm.xlu0 %916, %v886
      %v918 = vpop.permute.xlu0 %917
      %919 = vset.pattern.permute.xlu0 0
      %920 = vperm.xlu0 %919, %v887
      %v921 = vpop.permute.xlu0 %920
      %v922 = vlaneseq
      %v923 = vshrl.u32 %v922, 7
      %v924 = vsub.s32 %v151, %v923
      %v925 = vrot.slane %v900, %v924
      %v926 = vlaneseq
      %v927 = vshrl.u32 %v926, 7
      %v928 = vsub.s32 %v151, %v927
      %v929 = vrot.slane %v903, %v928
      %v930 = vlaneseq
      %v931 = vshrl.u32 %v930, 7
      %v932 = vsub.s32 %v151, %v931
      %v933 = vrot.slane %v906, %v932
      %v934 = vlaneseq
      %v935 = vshrl.u32 %v934, 7
      %v936 = vsub.s32 %v151, %v935
      %v937 = vrot.slane %v909, %v936
      %v938 = vlaneseq
      %v939 = vshrl.u32 %v938, 7
      %v940 = vsub.s32 %v151, %v939
      %v941 = vrot.slane %v912, %v940
      %v942 = vlaneseq
      %v943 = vshrl.u32 %v942, 7
      %v944 = vsub.s32 %v151, %v943
      %v945 = vrot.slane %v915, %v944
      %v946 = vlaneseq
      %v947 = vshrl.u32 %v946, 7
      %v948 = vsub.s32 %v151, %v947
      %v949 = vrot.slane %v918, %v948
      %v950 = vlaneseq
      %v951 = vshrl.u32 %v950, 7
      %v952 = vsub.s32 %v151, %v951
      %v953 = vrot.slane %v921, %v952
      %v954 = vsel %vm472, %v929, %v925
      %v955 = vsel %vm474, %v933, %v954
      %v956 = vsel %vm476, %v937, %v955
      %v957 = vsel %vm478, %v941, %v956
      %v958 = vsel %vm480, %v945, %v957
      %v959 = vsel %vm482, %v949, %v958
      %v960 = vsel %vm484, %v953, %v959
      %v962 = vsel %vm364, %v960, 0.0
      %963 = vadd.xlane.f32.xlu0 %v962
      %v964 = vpop.xlane.xlu0 %963
      %v965 = vrcp.pop 8.0
      %v966 = vmul.f32 %v964, %v965
      %v967 = vmul.f32 %v880, %v880
      %v968 = vmul.f32 %v881, %v881
      %v969 = vmul.f32 %v882, %v882
      %v970 = vmul.f32 %v883, %v883
      %v971 = vmul.f32 %v884, %v884
      %v972 = vmul.f32 %v885, %v885
      %v973 = vmul.f32 %v886, %v886
      %v974 = vmul.f32 %v887, %v887
      %983 = vset.pattern.permute.xlu0 0
      %984 = vperm.xlu0 %983, %v967
      %v985 = vpop.permute.xlu0 %984
      %986 = vset.pattern.permute.xlu0 0
      %987 = vperm.xlu0 %986, %v968
      %v988 = vpop.permute.xlu0 %987
      %989 = vset.pattern.permute.xlu0 0
      %990 = vperm.xlu0 %989, %v969
      %v991 = vpop.permute.xlu0 %990
      %992 = vset.pattern.permute.xlu0 0
      %993 = vperm.xlu0 %992, %v970
      %v994 = vpop.permute.xlu0 %993
      %995 = vset.pattern.permute.xlu0 0
      %996 = vperm.xlu0 %995, %v971
      %v997 = vpop.permute.xlu0 %996
      %998 = vset.pattern.permute.xlu0 0
      %999 = vperm.xlu0 %998, %v972
      %v1000 = vpop.permute.xlu0 %999
      %1001 = vset.pattern.permute.xlu0 0
      %1002 = vperm.xlu0 %1001, %v973
      %v1003 = vpop.permute.xlu0 %1002
      %1004 = vset.pattern.permute.xlu0 0
      %1005 = vperm.xlu0 %1004, %v974
      %v1006 = vpop.permute.xlu0 %1005
      %v1007 = vlaneseq
      %v1008 = vshrl.u32 %v1007, 7
      %v1009 = vsub.s32 %v151, %v1008
      %v1010 = vrot.slane %v985, %v1009
      %v1011 = vlaneseq
      %v1012 = vshrl.u32 %v1011, 7
      %v1013 = vsub.s32 %v151, %v1012
      %v1014 = vrot.slane %v988, %v1013
      %v1015 = vlaneseq
      %v1016 = vshrl.u32 %v1015, 7
      %v1017 = vsub.s32 %v151, %v1016
      %v1018 = vrot.slane %v991, %v1017
      %v1019 = vlaneseq
      %v1020 = vshrl.u32 %v1019, 7
      %v1021 = vsub.s32 %v151, %v1020
      %v1022 = vrot.slane %v994, %v1021
      %v1023 = vlaneseq
      %v1024 = vshrl.u32 %v1023, 7
      %v1025 = vsub.s32 %v151, %v1024
      %v1026 = vrot.slane %v997, %v1025
      %v1027 = vlaneseq
      %v1028 = vshrl.u32 %v1027, 7
      %v1029 = vsub.s32 %v151, %v1028
      %v1030 = vrot.slane %v1000, %v1029
      %v1031 = vlaneseq
      %v1032 = vshrl.u32 %v1031, 7
      %v1033 = vsub.s32 %v151, %v1032
      %v1034 = vrot.slane %v1003, %v1033
      %v1035 = vlaneseq
      %v1036 = vshrl.u32 %v1035, 7
      %v1037 = vsub.s32 %v151, %v1036
      %v1038 = vrot.slane %v1006, %v1037
      %v1039 = vsel %vm472, %v1014, %v1010
      %v1040 = vsel %vm474, %v1018, %v1039
      %v1041 = vsel %vm476, %v1022, %v1040
      %v1042 = vsel %vm478, %v1026, %v1041
      %v1043 = vsel %vm480, %v1030, %v1042
      %v1044 = vsel %vm482, %v1034, %v1043
      %v1045 = vsel %vm484, %v1038, %v1044
      %v1047 = vsel %vm364, %v1045, 0.0
      %1048 = vadd.xlane.f32.xlu0 %v1047
      %v1049 = vpop.xlane.xlu0 %1048
      %v1050 = vmul.f32 %v1049, %v965
      %v1051 = vmul.f32 %v966, %v966
      %v1052 = vsub.f32 %v1050, %v1051
      %v1054 = vlaneseq
      %v1055 = vshrl.u32 %v1054, 7
      %v1056 = vsub.s32 0, %v1055
      %v1057 = vrot.slane %v966, %v1056
      %v1058 = vlaneseq
      %v1059 = vshrl.u32 %v1058, 7
      %v1060 = vsub.s32 1, %v1059
      %v1061 = vrot.slane %v966, %v1060
      %v1062 = vlaneseq
      %v1063 = vshrl.u32 %v1062, 7
      %v1064 = vsub.s32 2, %v1063
      %v1065 = vrot.slane %v966, %v1064
      %v1066 = vlaneseq
      %v1067 = vshrl.u32 %v1066, 7
      %v1068 = vsub.s32 3, %v1067
      %v1069 = vrot.slane %v966, %v1068
      %v1070 = vlaneseq
      %v1071 = vshrl.u32 %v1070, 7
      %v1072 = vsub.s32 4, %v1071
      %v1073 = vrot.slane %v966, %v1072
      %v1074 = vlaneseq
      %v1075 = vshrl.u32 %v1074, 7
      %v1076 = vsub.s32 5, %v1075
      %v1077 = vrot.slane %v966, %v1076
      %v1078 = vlaneseq
      %v1079 = vshrl.u32 %v1078, 7
      %v1080 = vsub.s32 6, %v1079
      %v1081 = vrot.slane %v966, %v1080
      %v1082 = vlaneseq
      %v1083 = vshrl.u32 %v1082, 7
      %v1084 = vsub.s32 7, %v1083
      %v1085 = vrot.slane %v966, %v1084
      %v1094 = vsub.f32 %v880, %v1057
      %v1095 = vsub.f32 %v881, %v1061
      %v1096 = vsub.f32 %v882, %v1065
      %v1097 = vsub.f32 %v883, %v1069
      %v1098 = vsub.f32 %v884, %v1073
      %v1099 = vsub.f32 %v885, %v1077
      %v1100 = vsub.f32 %v886, %v1081
      %v1101 = vsub.f32 %v887, %v1085
      %v1102 = vadd.f32 %v1052, 1e-05
      %v1103 = vrsqrt.pop %v1102
      %v1105 = vlaneseq
      %v1106 = vshrl.u32 %v1105, 7
      %v1107 = vsub.s32 0, %v1106
      %v1108 = vrot.slane %v1103, %v1107
      %v1109 = vlaneseq
      %v1110 = vshrl.u32 %v1109, 7
      %v1111 = vsub.s32 1, %v1110
      %v1112 = vrot.slane %v1103, %v1111
      %v1113 = vlaneseq
      %v1114 = vshrl.u32 %v1113, 7
      %v1115 = vsub.s32 2, %v1114
      %v1116 = vrot.slane %v1103, %v1115
      %v1117 = vlaneseq
      %v1118 = vshrl.u32 %v1117, 7
      %v1119 = vsub.s32 3, %v1118
      %v1120 = vrot.slane %v1103, %v1119
      %v1121 = vlaneseq
      %v1122 = vshrl.u32 %v1121, 7
      %v1123 = vsub.s32 4, %v1122
      %v1124 = vrot.slane %v1103, %v1123
      %v1125 = vlaneseq
      %v1126 = vshrl.u32 %v1125, 7
      %v1127 = vsub.s32 5, %v1126
      %v1128 = vrot.slane %v1103, %v1127
      %v1129 = vlaneseq
      %v1130 = vshrl.u32 %v1129, 7
      %v1131 = vsub.s32 6, %v1130
      %v1132 = vrot.slane %v1103, %v1131
      %v1133 = vlaneseq
      %v1134 = vshrl.u32 %v1133, 7
      %v1135 = vsub.s32 7, %v1134
      %v1136 = vrot.slane %v1103, %v1135
      %v1145 = vmul.f32 %v1094, %v1108
      %v1146 = vmul.f32 %v1095, %v1112
      %v1147 = vmul.f32 %v1096, %v1116
      %v1148 = vmul.f32 %v1097, %v1120
      %v1149 = vmul.f32 %v1098, %v1124
      %v1150 = vmul.f32 %v1099, %v1128
      %v1151 = vmul.f32 %v1100, %v1132
      %v1152 = vmul.f32 %v1101, %v1136
      %v1153 = vlaneseq
      %v1154 = vshrl.u32 %v1153, 7
      %v1155 = vsub.s32 0, %v1154
      %v1156 = vrot.slane %v888, %v1155
      %1159 = vbcast.lane.b32.xlu0 %v1156, 256
      %v1160 = vpop.permute.xlu0 %1159
      %v1162 = vmul.f32 %v1145, %v1160
      %v1163 = vmul.f32 %v1146, %v1160
      %v1164 = vmul.f32 %v1147, %v1160
      %v1165 = vmul.f32 %v1148, %v1160
      %v1166 = vmul.f32 %v1149, %v1160
      %v1167 = vmul.f32 %v1150, %v1160
      %v1168 = vmul.f32 %v1151, %v1160
      %v1169 = vmul.f32 %v1152, %v1160
      %v1170 = vlaneseq
      %v1171 = vshrl.u32 %v1170, 7
      %v1172 = vsub.s32 0, %v1171
      %v1173 = vrot.slane %v889, %v1172
      %1176 = vbcast.lane.b32.xlu0 %v1173, 256
      %v1177 = vpop.permute.xlu0 %1176
      %v1179 = vadd.f32 %v1162, %v1177
      %v1180 = vadd.f32 %v1163, %v1177
      %v1181 = vadd.f32 %v1164, %v1177
      %v1182 = vadd.f32 %v1165, %v1177
      %v1183 = vadd.f32 %v1166, %v1177
      %v1184 = vadd.f32 %v1167, %v1177
      %v1185 = vadd.f32 %v1168, %v1177
      %v1186 = vadd.f32 %v1169, %v1177
      %v1187 = vld [vmem:[%s1 + $0x80] sm:$0xff]
      %v1188 = vld [vmem:[%s1 + $0x13a] sm:$0x1]
      %v1189 = vlaneseq
      %v1190 = vshrl.u32 %v1189, 7
      %v1191 = vsub.s32 0, %v1190
      %v1192 = vrot.slane %v1188, %v1191
      %1201 = vset.pattern.permute.xlu0 0
      %1202 = vperm.xlu0 %1201, %v1179
      %v1203 = vpop.permute.xlu0 %1202
      %1204 = vset.pattern.permute.xlu0 0
      %1205 = vperm.xlu0 %1204, %v1180
      %v1206 = vpop.permute.xlu0 %1205
      %1207 = vset.pattern.permute.xlu0 0
      %1208 = vperm.xlu0 %1207, %v1181
      %v1209 = vpop.permute.xlu0 %1208
      %1210 = vset.pattern.permute.xlu0 0
      %1211 = vperm.xlu0 %1210, %v1182
      %v1212 = vpop.permute.xlu0 %1211
      %1213 = vset.pattern.permute.xlu0 0
      %1214 = vperm.xlu0 %1213, %v1183
      %v1215 = vpop.permute.xlu0 %1214
      %1216 = vset.pattern.permute.xlu0 0
      %1217 = vperm.xlu0 %1216, %v1184
      %v1218 = vpop.permute.xlu0 %1217
      %1219 = vset.pattern.permute.xlu0 0
      %1220 = vperm.xlu0 %1219, %v1185
      %v1221 = vpop.permute.xlu0 %1220
      %1222 = vset.pattern.permute.xlu0 0
      %1223 = vperm.xlu0 %1222, %v1186
      %v1224 = vpop.permute.xlu0 %1223
      %v1225 = vlaneseq
      %v1226 = vshrl.u32 %v1225, 7
      %v1227 = vsub.s32 %v151, %v1226
      %v1228 = vrot.slane %v1203, %v1227
      %v1229 = vlaneseq
      %v1230 = vshrl.u32 %v1229, 7
      %v1231 = vsub.s32 %v151, %v1230
      %v1232 = vrot.slane %v1206, %v1231
      %v1233 = vlaneseq
      %v1234 = vshrl.u32 %v1233, 7
      %v1235 = vsub.s32 %v151, %v1234
      %v1236 = vrot.slane %v1209, %v1235
      %v1237 = vlaneseq
      %v1238 = vshrl.u32 %v1237, 7
      %v1239 = vsub.s32 %v151, %v1238
      %v1240 = vrot.slane %v1212, %v1239
      %v1241 = vlaneseq
      %v1242 = vshrl.u32 %v1241, 7
      %v1243 = vsub.s32 %v151, %v1242
      %v1244 = vrot.slane %v1215, %v1243
      %v1245 = vlaneseq
      %v1246 = vshrl.u32 %v1245, 7
      %v1247 = vsub.s32 %v151, %v1246
      %v1248 = vrot.slane %v1218, %v1247
      %v1249 = vlaneseq
      %v1250 = vshrl.u32 %v1249, 7
      %v1251 = vsub.s32 %v151, %v1250
      %v1252 = vrot.slane %v1221, %v1251
      %v1253 = vlaneseq
      %v1254 = vshrl.u32 %v1253, 7
      %v1255 = vsub.s32 %v151, %v1254
      %v1256 = vrot.slane %v1224, %v1255
      %v1257 = vsel %vm472, %v1232, %v1228
      %v1258 = vsel %vm474, %v1236, %v1257
      %v1259 = vsel %vm476, %v1240, %v1258
      %v1260 = vsel %vm478, %v1244, %v1259
      %v1261 = vsel %vm480, %v1248, %v1260
      %v1262 = vsel %vm482, %v1252, %v1261
      %v1263 = vsel %vm484, %v1256, %v1262
      %v1264 = vsel %vm364, %v1263, 0
      %1266 = vmatprep.subr.mxu0 0.0
      %1267 = vmatpush1.msra.mxu0 %v1187
      %1268 = vmatprep.subr.mxu0 0.0
      %1269 = vmatpush1.msra.mxu0 0.0
      %1270 = vmatprep.subr.mxu0 0.0
      %1271 = vmatpush1.msra.mxu0 0.0
      %1272 = vmatprep.subr.mxu0 0.0
      %1273 = vmatpush1.msra.mxu0 0.0
      %1274 = vmatprep.subr.mxu0 0.0
      %1275 = vmatpush1.msra.mxu0 0.0
      %1276 = vmatprep.subr.mxu0 0.0
      %1277 = vmatpush1.msra.mxu0 0.0
      %1278 = vmatprep.subr.mxu0 0.0
      %1279 = vmatpush1.msra.mxu0 0.0
      %1280 = vmatprep.subr.mxu0 0.0
      %1281 = vmatpush1.msra.mxu0 0.0
      %1282 = vmatprep.subr.mxu0 0.0
      %1283 = vmatpush1.msra.mxu0 0.0
      %1284 = vmatprep.subr.mxu0 0.0
      %1285 = vmatpush1.msra.mxu0 0.0
      %1286 = vmatprep.subr.mxu0 0.0
      %1287 = vmatpush1.msra.mxu0 0.0
      %1288 = vmatprep.subr.mxu0 0.0
      %1289 = vmatpush1.msra.mxu0 0.0
      %1290 = vmatprep.subr.mxu0 0.0
      %1291 = vmatpush1.msra.mxu0 0.0
      %1292 = vmatprep.subr.mxu0 0.0
      %1293 = vmatpush1.msra.mxu0 0.0
      %1294 = vmatprep.subr.mxu0 0.0
      %1295 = vmatpush1.msra.mxu0 0.0
      %1296 = vmatprep.subr.mxu0 0.0
      %1297 = vmatpush1.msra.mxu0 0.0
      %1298 = vmatprep.subr.mxu0 0.0
      %1299 = vmatpush1.msra.mxu0 0.0
      %1300 = vmatprep.subr.mxu0 0.0
      %1301 = vmatpush1.msra.mxu0 0.0
      %1302 = vmatprep.subr.mxu0 0.0
      %1303 = vmatpush1.msra.mxu0 0.0
      %1304 = vmatprep.subr.mxu0 0.0
      %1305 = vmatpush1.msra.mxu0 0.0
      %1306 = vmatprep.subr.mxu0 0.0
      %1307 = vmatpush1.msra.mxu0 0.0
      %1308 = vmatprep.subr.mxu0 0.0
      %1309 = vmatpush1.msra.mxu0 0.0
      %1310 = vmatprep.subr.mxu0 0.0
      %1311 = vmatpush1.msra.mxu0 0.0
      %1312 = vmatprep.subr.mxu0 0.0
      %1313 = vmatpush1.msra.mxu0 0.0
      %1314 = vmatprep.subr.mxu0 0.0
      %1315 = vmatpush1.msra.mxu0 0.0
      %1316 = vmatprep.subr.mxu0 0.0
      %1317 = vmatpush1.msra.mxu0 0.0
      %1318 = vmatprep.subr.mxu0 0.0
      %1319 = vmatpush1.msra.mxu0 0.0
      %1320 = vmatprep.subr.mxu0 0.0
      %1321 = vmatpush1.msra.mxu0 0.0
      %1322 = vmatprep.subr.mxu0 0.0
      %1323 = vmatpush1.msra.mxu0 0.0
      %1324 = vmatprep.subr.mxu0 0.0
      %1325 = vmatpush1.msra.mxu0 0.0
      %1326 = vmatprep.subr.mxu0 0.0
      %1327 = vmatpush1.msra.mxu0 0.0
      %1328 = vmatprep.subr.mxu0 0.0
      %1329 = vmatpush1.msra.mxu0 0.0
      %1330 = vmatprep.mubr.f32.mxu0 0.0
      %1331 = vmatmul.mubr.f32.gmra.mrb[0].mxu0 %v1264
      %v1332 = vpop.f32.mrb[0].mxu0
      %v1333 = vadd.f32 %v1192, %v1332
      %v1334 = vpop.f32.mrb[0].mxu0
      %1335 = vdwg.mxu0
      %v1336 = vmax.f32 %v1333, 0.0
      %v1337 = vld [vmem:[%s1 + $0x88] sm:$0xff]
      %v1338 = vld [vmem:[%s1 + $0x90] sm:$0xff]
      %v1339 = vld [vmem:[%s1 + $0x98] sm:$0xff]
      %v1340 = vld [vmem:[%s1 + $0xa0] sm:$0xff]
      %v1341 = vld [vmem:[%s1 + $0xa8] sm:$0xff]
      %v1342 = vld [vmem:[%s1 + $0xb0] sm:$0xff]
      %v1343 = vld [vmem:[%s1 + $0xb8] sm:$0xff]
      %v1344 = vld [vmem:[%s1 + $0xc0] sm:$0xff]
      %v1345 = vld [vmem:[%s1 + $0x13b] sm:$0x1]
      %v1346 = vlaneseq
      %v1347 = vshrl.u32 %v1346, 7
      %v1348 = vsub.s32 0, %v1347
      %v1349 = vrot.slane %v1345, %v1348
      %v1351 = vsel %vm213, %v1336, 0
      %1353 = vmatprep.subr.mxu0 0.0
      %1354 = vmatpush1.msra.mxu0 %v1337
      %1355 = vmatprep.subr.mxu0 0.0
      %1356 = vmatpush1.msra.mxu0 %v1338
      %1357 = vmatprep.subr.mxu0 0.0
      %1358 = vmatpush1.msra.mxu0 %v1339
      %1359 = vmatprep.subr.mxu0 0.0
      %1360 = vmatpush1.msra.mxu0 %v1340
      %1361 = vmatprep.subr.mxu0 0.0
      %1362 = vmatpush1.msra.mxu0 %v1341
      %1363 = vmatprep.subr.mxu0 0.0
      %1364 = vmatpush1.msra.mxu0 %v1342
      %1365 = vmatprep.subr.mxu0 0.0
      %1366 = vmatpush1.msra.mxu0 %v1343
      %1367 = vmatprep.subr.mxu0 0.0
      %1368 = vmatpush1.msra.mxu0 %v1344
      %1369 = vmatprep.subr.mxu0 0.0
      %1370 = vmatpush1.msra.mxu0 0.0
      %1371 = vmatprep.subr.mxu0 0.0
      %1372 = vmatpush1.msra.mxu0 0.0
      %1373 = vmatprep.subr.mxu0 0.0
      %1374 = vmatpush1.msra.mxu0 0.0
      %1375 = vmatprep.subr.mxu0 0.0
      %1376 = vmatpush1.msra.mxu0 0.0
      %1377 = vmatprep.subr.mxu0 0.0
      %1378 = vmatpush1.msra.mxu0 0.0
      %1379 = vmatprep.subr.mxu0 0.0
      %1380 = vmatpush1.msra.mxu0 0.0
      %1381 = vmatprep.subr.mxu0 0.0
      %1382 = vmatpush1.msra.mxu0 0.0
      %1383 = vmatprep.subr.mxu0 0.0
      %1384 = vmatpush1.msra.mxu0 0.0
      %1385 = vmatprep.subr.mxu0 0.0
      %1386 = vmatpush1.msra.mxu0 0.0
      %1387 = vmatprep.subr.mxu0 0.0
      %1388 = vmatpush1.msra.mxu0 0.0
      %1389 = vmatprep.subr.mxu0 0.0
      %1390 = vmatpush1.msra.mxu0 0.0
      %1391 = vmatprep.subr.mxu0 0.0
      %1392 = vmatpush1.msra.mxu0 0.0
      %1393 = vmatprep.subr.mxu0 0.0
      %1394 = vmatpush1.msra.mxu0 0.0
      %1395 = vmatprep.subr.mxu0 0.0
      %1396 = vmatpush1.msra.mxu0 0.0
      %1397 = vmatprep.subr.mxu0 0.0
      %1398 = vmatpush1.msra.mxu0 0.0
      %1399 = vmatprep.subr.mxu0 0.0
      %1400 = vmatpush1.msra.mxu0 0.0
      %1401 = vmatprep.subr.mxu0 0.0
      %1402 = vmatpush1.msra.mxu0 0.0
      %1403 = vmatprep.subr.mxu0 0.0
      %1404 = vmatpush1.msra.mxu0 0.0
      %1405 = vmatprep.subr.mxu0 0.0
      %1406 = vmatpush1.msra.mxu0 0.0
      %1407 = vmatprep.subr.mxu0 0.0
      %1408 = vmatpush1.msra.mxu0 0.0
      %1409 = vmatprep.subr.mxu0 0.0
      %1410 = vmatpush1.msra.mxu0 0.0
      %1411 = vmatprep.subr.mxu0 0.0
      %1412 = vmatpush1.msra.mxu0 0.0
      %1413 = vmatprep.subr.mxu0 0.0
      %1414 = vmatpush1.msra.mxu0 0.0
      %1415 = vmatprep.subr.mxu0 0.0
      %1416 = vmatpush1.msra.mxu0 0.0
      %1417 = vmatprep.mubr.f32.mxu0 0.0
      %1418 = vmatmul.mubr.f32.gmra.mrb[0].mxu0 %v1351
      %v1419 = vpop.f32.mrb[0].mxu0
      %v1420 = vadd.f32 %v1349, %v1419
      %v1421 = vpop.f32.mrb[0].mxu0
      %1422 = vdwg.mxu0
      %v1424 = vlaneseq
      %v1425 = vshrl.u32 %v1424, 7
      %v1426 = vsub.s32 0, %v1425
      %v1427 = vrot.slane %v1420, %v1426
      %1429 = vbcast.lane.b32.xlu0 %v1427, 256
      %v1430 = vpop.permute.xlu0 %1429
      %v1431 = vlaneseq
      %v1432 = vshrl.u32 %v1431, 7
      %v1433 = vsub.s32 1, %v1432
      %v1434 = vrot.slane %v1420, %v1433
      %1436 = vbcast.lane.b32.xlu0 %v1434, 256
      %v1437 = vpop.permute.xlu0 %1436
      %v1438 = vlaneseq
      %v1439 = vshrl.u32 %v1438, 7
      %v1440 = vsub.s32 2, %v1439
      %v1441 = vrot.slane %v1420, %v1440
      %1443 = vbcast.lane.b32.xlu0 %v1441, 256
      %v1444 = vpop.permute.xlu0 %1443
      %v1445 = vlaneseq
      %v1446 = vshrl.u32 %v1445, 7
      %v1447 = vsub.s32 3, %v1446
      %v1448 = vrot.slane %v1420, %v1447
      %1450 = vbcast.lane.b32.xlu0 %v1448, 256
      %v1451 = vpop.permute.xlu0 %1450
      %v1452 = vlaneseq
      %v1453 = vshrl.u32 %v1452, 7
      %v1454 = vsub.s32 4, %v1453
      %v1455 = vrot.slane %v1420, %v1454
      %1457 = vbcast.lane.b32.xlu0 %v1455, 256
      %v1458 = vpop.permute.xlu0 %1457
      %v1459 = vlaneseq
      %v1460 = vshrl.u32 %v1459, 7
      %v1461 = vsub.s32 5, %v1460
      %v1462 = vrot.slane %v1420, %v1461
      %1464 = vbcast.lane.b32.xlu0 %v1462, 256
      %v1465 = vpop.permute.xlu0 %1464
      %v1466 = vlaneseq
      %v1467 = vshrl.u32 %v1466, 7
      %v1468 = vsub.s32 6, %v1467
      %v1469 = vrot.slane %v1420, %v1468
      %1471 = vbcast.lane.b32.xlu0 %v1469, 256
      %v1472 = vpop.permute.xlu0 %1471
      %v1473 = vlaneseq
      %v1474 = vshrl.u32 %v1473, 7
      %v1475 = vsub.s32 7, %v1474
      %v1476 = vrot.slane %v1420, %v1475
      %1478 = vbcast.lane.b32.xlu0 %v1476, 256
      %v1479 = vpop.permute.xlu0 %1478
      %v1488 = vadd.f32 %v1179, %v1430
      %v1489 = vadd.f32 %v1180, %v1437
      %v1490 = vadd.f32 %v1181, %v1444
      %v1491 = vadd.f32 %v1182, %v1451
      %v1492 = vadd.f32 %v1183, %v1458
      %v1493 = vadd.f32 %v1184, %v1465
      %v1494 = vadd.f32 %v1185, %v1472
      %v1495 = vadd.f32 %v1186, %v1479
      %v1496 = vld [vmem:[%s1 + $0x13c] sm:$0x1]
      %v1497 = vld [vmem:[%s1 + $0x13d] sm:$0x1]
      %1506 = vset.pattern.permute.xlu0 0
      %1507 = vperm.xlu0 %1506, %v1488
      %v1508 = vpop.permute.xlu0 %1507
      %1509 = vset.pattern.permute.xlu0 0
      %1510 = vperm.xlu0 %1509, %v1489
      %v1511 = vpop.permute.xlu0 %1510
      %1512 = vset.pattern.permute.xlu0 0
      %1513 = vperm.xlu0 %1512, %v1490
      %v1514 = vpop.permute.xlu0 %1513
      %1515 = vset.pattern.permute.xlu0 0
      %1516 = vperm.xlu0 %1515, %v1491
      %v1517 = vpop.permute.xlu0 %1516
      %1518 = vset.pattern.permute.xlu0 0
      %1519 = vperm.xlu0 %1518, %v1492
      %v1520 = vpop.permute.xlu0 %1519
      %1521 = vset.pattern.permute.xlu0 0
      %1522 = vperm.xlu0 %1521, %v1493
      %v1523 = vpop.permute.xlu0 %1522
      %1524 = vset.pattern.permute.xlu0 0
      %1525 = vperm.xlu0 %1524, %v1494
      %v1526 = vpop.permute.xlu0 %1525
      %1527 = vset.pattern.permute.xlu0 0
      %1528 = vperm.xlu0 %1527, %v1495
      %v1529 = vpop.permute.xlu0 %1528
      %v1530 = vlaneseq
      %v1531 = vshrl.u32 %v1530, 7
      %v1532 = vsub.s32 %v151, %v1531
      %v1533 = vrot.slane %v1508, %v1532
      %v1534 = vlaneseq
      %v1535 = vshrl.u32 %v1534, 7
      %v1536 = vsub.s32 %v151, %v1535
      %v1537 = vrot.slane %v1511, %v1536
      %v1538 = vlaneseq
      %v1539 = vshrl.u32 %v1538, 7
      %v1540 = vsub.s32 %v151, %v1539
      %v1541 = vrot.slane %v1514, %v1540
      %v1542 = vlaneseq
      %v1543 = vshrl.u32 %v1542, 7
      %v1544 = vsub.s32 %v151, %v1543
      %v1545 = vrot.slane %v1517, %v1544
      %v1546 = vlaneseq
      %v1547 = vshrl.u32 %v1546, 7
      %v1548 = vsub.s32 %v151, %v1547
      %v1549 = vrot.slane %v1520, %v1548
      %v1550 = vlaneseq
      %v1551 = vshrl.u32 %v1550, 7
      %v1552 = vsub.s32 %v151, %v1551
      %v1553 = vrot.slane %v1523, %v1552
      %v1554 = vlaneseq
      %v1555 = vshrl.u32 %v1554, 7
      %v1556 = vsub.s32 %v151, %v1555
      %v1557 = vrot.slane %v1526, %v1556
      %v1558 = vlaneseq
      %v1559 = vshrl.u32 %v1558, 7
      %v1560 = vsub.s32 %v151, %v1559
      %v1561 = vrot.slane %v1529, %v1560
      %v1562 = vsel %vm472, %v1537, %v1533
      %v1563 = vsel %vm474, %v1541, %v1562
      %v1564 = vsel %vm476, %v1545, %v1563
      %v1565 = vsel %vm478, %v1549, %v1564
      %v1566 = vsel %vm480, %v1553, %v1565
      %v1567 = vsel %vm482, %v1557, %v1566
      %v1568 = vsel %vm484, %v1561, %v1567
      %v1570 = vsel %vm364, %v1568, 0.0
      %1571 = vadd.xlane.f32.xlu0 %v1570
      %v1572 = vpop.xlane.xlu0 %1571
      %v1573 = vmul.f32 %v1572, %v965
      %v1574 = vmul.f32 %v1488, %v1488
      %v1575 = vmul.f32 %v1489, %v1489
      %v1576 = vmul.f32 %v1490, %v1490
      %v1577 = vmul.f32 %v1491, %v1491
      %v1578 = vmul.f32 %v1492, %v1492
      %v1579 = vmul.f32 %v1493, %v1493
      %v1580 = vmul.f32 %v1494, %v1494
      %v1581 = vmul.f32 %v1495, %v1495
      %1590 = vset.pattern.permute.xlu0 0
      %1591 = vperm.xlu0 %1590, %v1574
      %v1592 = vpop.permute.xlu0 %1591
      %1593 = vset.pattern.permute.xlu0 0
      %1594 = vperm.xlu0 %1593, %v1575
      %v1595 = vpop.permute.xlu0 %1594
      %1596 = vset.pattern.permute.xlu0 0
      %1597 = vperm.xlu0 %1596, %v1576
      %v1598 = vpop.permute.xlu0 %1597
      %1599 = vset.pattern.permute.xlu0 0
      %1600 = vperm.xlu0 %1599, %v1577
      %v1601 = vpop.permute.xlu0 %1600
      %1602 = vset.pattern.permute.xlu0 0
      %1603 = vperm.xlu0 %1602, %v1578
      %v1604 = vpop.permute.xlu0 %1603
      %1605 = vset.pattern.permute.xlu0 0
      %1606 = vperm.xlu0 %1605, %v1579
      %v1607 = vpop.permute.xlu0 %1606
      %1608 = vset.pattern.permute.xlu0 0
      %1609 = vperm.xlu0 %1608, %v1580
      %v1610 = vpop.permute.xlu0 %1609
      %1611 = vset.pattern.permute.xlu0 0
      %1612 = vperm.xlu0 %1611, %v1581
      %v1613 = vpop.permute.xlu0 %1612
      %v1614 = vlaneseq
      %v1615 = vshrl.u32 %v1614, 7
      %v1616 = vsub.s32 %v151, %v1615
      %v1617 = vrot.slane %v1592, %v1616
      %v1618 = vlaneseq
      %v1619 = vshrl.u32 %v1618, 7
      %v1620 = vsub.s32 %v151, %v1619
      %v1621 = vrot.slane %v1595, %v1620
      %v1622 = vlaneseq
      %v1623 = vshrl.u32 %v1622, 7
      %v1624 = vsub.s32 %v151, %v1623
      %v1625 = vrot.slane %v1598, %v1624
      %v1626 = vlaneseq
      %v1627 = vshrl.u32 %v1626, 7
      %v1628 = vsub.s32 %v151, %v1627
      %v1629 = vrot.slane %v1601, %v1628
      %v1630 = vlaneseq
      %v1631 = vshrl.u32 %v1630, 7
      %v1632 = vsub.s32 %v151, %v1631
      %v1633 = vrot.slane %v1604, %v1632
      %v1634 = vlaneseq
      %v1635 = vshrl.u32 %v1634, 7
      %v1636 = vsub.s32 %v151, %v1635
      %v1637 = vrot.slane %v1607, %v1636
      %v1638 = vlaneseq
      %v1639 = vshrl.u32 %v1638, 7
      %v1640 = vsub.s32 %v151, %v1639
      %v1641 = vrot.slane %v1610, %v1640
      %v1642 = vlaneseq
      %v1643 = vshrl.u32 %v1642, 7
      %v1644 = vsub.s32 %v151, %v1643
      %v1645 = vrot.slane %v1613, %v1644
      %v1646 = vsel %vm472, %v1621, %v1617
      %v1647 = vsel %vm474, %v1625, %v1646
      %v1648 = vsel %vm476, %v1629, %v1647
      %v1649 = vsel %vm478, %v1633, %v1648
      %v1650 = vsel %vm480, %v1637, %v1649
      %v1651 = vsel %vm482, %v1641, %v1650
      %v1652 = vsel %vm484, %v1645, %v1651
      %v1654 = vsel %vm364, %v1652, 0.0
      %1655 = vadd.xlane.f32.xlu0 %v1654
      %v1656 = vpop.xlane.xlu0 %1655
      %v1657 = vmul.f32 %v1656, %v965
      %v1658 = vmul.f32 %v1573, %v1573
      %v1659 = vsub.f32 %v1657, %v1658
      %v1661 = vlaneseq
      %v1662 = vshrl.u32 %v1661, 7
      %v1663 = vsub.s32 0, %v1662
      %v1664 = vrot.slane %v1573, %v1663
      %v1665 = vlaneseq
      %v1666 = vshrl.u32 %v1665, 7
      %v1667 = vsub.s32 1, %v1666
      %v1668 = vrot.slane %v1573, %v1667
      %v1669 = vlaneseq
      %v1670 = vshrl.u32 %v1669, 7
      %v1671 = vsub.s32 2, %v1670
      %v1672 = vrot.slane %v1573, %v1671
      %v1673 = vlaneseq
      %v1674 = vshrl.u32 %v1673, 7
      %v1675 = vsub.s32 3, %v1674
      %v1676 = vrot.slane %v1573, %v1675
      %v1677 = vlaneseq
      %v1678 = vshrl.u32 %v1677, 7
      %v1679 = vsub.s32 4, %v1678
      %v1680 = vrot.slane %v1573, %v1679
      %v1681 = vlaneseq
      %v1682 = vshrl.u32 %v1681, 7
      %v1683 = vsub.s32 5, %v1682
      %v1684 = vrot.slane %v1573, %v1683
      %v1685 = vlaneseq
      %v1686 = vshrl.u32 %v1685, 7
      %v1687 = vsub.s32 6, %v1686
      %v1688 = vrot.slane %v1573, %v1687
      %v1689 = vlaneseq
      %v1690 = vshrl.u32 %v1689, 7
      %v1691 = vsub.s32 7, %v1690
      %v1692 = vrot.slane %v1573, %v1691
      %v1701 = vsub.f32 %v1488, %v1664
      %v1702 = vsub.f32 %v1489, %v1668
      %v1703 = vsub.f32 %v1490, %v1672
      %v1704 = vsub.f32 %v1491, %v1676
      %v1705 = vsub.f32 %v1492, %v1680
      %v1706 = vsub.f32 %v1493, %v1684
      %v1707 = vsub.f32 %v1494, %v1688
      %v1708 = vsub.f32 %v1495, %v1692
      %v1709 = vadd.f32 %v1659, 1e-05
      %v1710 = vrsqrt.pop %v1709
      %v1712 = vlaneseq
      %v1713 = vshrl.u32 %v1712, 7
      %v1714 = vsub.s32 0, %v1713
      %v1715 = vrot.slane %v1710, %v1714
      %v1716 = vlaneseq
      %v1717 = vshrl.u32 %v1716, 7
      %v1718 = vsub.s32 1, %v1717
      %v1719 = vrot.slane %v1710, %v1718
      %v1720 = vlaneseq
      %v1721 = vshrl.u32 %v1720, 7
      %v1722 = vsub.s32 2, %v1721
      %v1723 = vrot.slane %v1710, %v1722
      %v1724 = vlaneseq
      %v1725 = vshrl.u32 %v1724, 7
      %v1726 = vsub.s32 3, %v1725
      %v1727 = vrot.slane %v1710, %v1726
      %v1728 = vlaneseq
      %v1729 = vshrl.u32 %v1728, 7
      %v1730 = vsub.s32 4, %v1729
      %v1731 = vrot.slane %v1710, %v1730
      %v1732 = vlaneseq
      %v1733 = vshrl.u32 %v1732, 7
      %v1734 = vsub.s32 5, %v1733
      %v1735 = vrot.slane %v1710, %v1734
      %v1736 = vlaneseq
      %v1737 = vshrl.u32 %v1736, 7
      %v1738 = vsub.s32 6, %v1737
      %v1739 = vrot.slane %v1710, %v1738
      %v1740 = vlaneseq
      %v1741 = vshrl.u32 %v1740, 7
      %v1742 = vsub.s32 7, %v1741
      %v1743 = vrot.slane %v1710, %v1742
      %v1752 = vmul.f32 %v1701, %v1715
      %v1753 = vmul.f32 %v1702, %v1719
      %v1754 = vmul.f32 %v1703, %v1723
      %v1755 = vmul.f32 %v1704, %v1727
      %v1756 = vmul.f32 %v1705, %v1731
      %v1757 = vmul.f32 %v1706, %v1735
      %v1758 = vmul.f32 %v1707, %v1739
      %v1759 = vmul.f32 %v1708, %v1743
      %v1760 = vlaneseq
      %v1761 = vshrl.u32 %v1760, 7
      %v1762 = vsub.s32 0, %v1761
      %v1763 = vrot.slane %v1496, %v1762
      %1766 = vbcast.lane.b32.xlu0 %v1763, 256
      %v1767 = vpop.permute.xlu0 %1766
      %v1769 = vmul.f32 %v1752, %v1767
      %v1770 = vmul.f32 %v1753, %v1767
      %v1771 = vmul.f32 %v1754, %v1767
      %v1772 = vmul.f32 %v1755, %v1767
      %v1773 = vmul.f32 %v1756, %v1767
      %v1774 = vmul.f32 %v1757, %v1767
      %v1775 = vmul.f32 %v1758, %v1767
      %v1776 = vmul.f32 %v1759, %v1767
      %v1777 = vlaneseq
      %v1778 = vshrl.u32 %v1777, 7
      %v1779 = vsub.s32 0, %v1778
      %v1780 = vrot.slane %v1497, %v1779
      %1783 = vbcast.lane.b32.xlu0 %v1780, 256
      %v1784 = vpop.permute.xlu0 %1783
      %v1786 = vadd.f32 %v1769, %v1784
      %v1787 = vadd.f32 %v1770, %v1784
      %v1788 = vadd.f32 %v1771, %v1784
      %v1789 = vadd.f32 %v1772, %v1784
      %v1790 = vadd.f32 %v1773, %v1784
      %v1791 = vadd.f32 %v1774, %v1784
      %v1792 = vadd.f32 %v1775, %v1784
      %v1793 = vadd.f32 %v1776, %v1784
      %v1794 = vld [vmem:[%s1 + $0xc8] sm:$0xff]
      %v1795 = vld [vmem:[%s1 + $0x13e] sm:$0x1]
      %v1796 = vlaneseq
      %v1797 = vshrl.u32 %v1796, 7
      %v1798 = vsub.s32 0, %v1797
      %v1799 = vrot.slane %v1795, %v1798
      %1808 = vset.pattern.permute.xlu0 0
      %1809 = vperm.xlu0 %1808, %v1786
      %v1810 = vpop.permute.xlu0 %1809
      %1811 = vset.pattern.permute.xlu0 0
      %1812 = vperm.xlu0 %1811, %v1787
      %v1813 = vpop.permute.xlu0 %1812
      %1814 = vset.pattern.permute.xlu0 0
      %1815 = vperm.xlu0 %1814, %v1788
      %v1816 = vpop.permute.xlu0 %1815
      %1817 = vset.pattern.permute.xlu0 0
      %1818 = vperm.xlu0 %1817, %v1789
      %v1819 = vpop.permute.xlu0 %1818
      %1820 = vset.pattern.permute.xlu0 0
      %1821 = vperm.xlu0 %1820, %v1790
      %v1822 = vpop.permute.xlu0 %1821
      %1823 = vset.pattern.permute.xlu0 0
      %1824 = vperm.xlu0 %1823, %v1791
      %v1825 = vpop.permute.xlu0 %1824
      %1826 = vset.pattern.permute.xlu0 0
      %1827 = vperm.xlu0 %1826, %v1792
      %v1828 = vpop.permute.xlu0 %1827
      %1829 = vset.pattern.permute.xlu0 0
      %1830 = vperm.xlu0 %1829, %v1793
      %v1831 = vpop.permute.xlu0 %1830
      %v1832 = vlaneseq
      %v1833 = vshrl.u32 %v1832, 7
      %v1834 = vsub.s32 %v151, %v1833
      %v1835 = vrot.slane %v1810, %v1834
      %v1836 = vlaneseq
      %v1837 = vshrl.u32 %v1836, 7
      %v1838 = vsub.s32 %v151, %v1837
      %v1839 = vrot.slane %v1813, %v1838
      %v1840 = vlaneseq
      %v1841 = vshrl.u32 %v1840, 7
      %v1842 = vsub.s32 %v151, %v1841
      %v1843 = vrot.slane %v1816, %v1842
      %v1844 = vlaneseq
      %v1845 = vshrl.u32 %v1844, 7
      %v1846 = vsub.s32 %v151, %v1845
      %v1847 = vrot.slane %v1819, %v1846
      %v1848 = vlaneseq
      %v1849 = vshrl.u32 %v1848, 7
      %v1850 = vsub.s32 %v151, %v1849
      %v1851 = vrot.slane %v1822, %v1850
      %v1852 = vlaneseq
      %v1853 = vshrl.u32 %v1852, 7
      %v1854 = vsub.s32 %v151, %v1853
      %v1855 = vrot.slane %v1825, %v1854
      %v1856 = vlaneseq
      %v1857 = vshrl.u32 %v1856, 7
      %v1858 = vsub.s32 %v151, %v1857
      %v1859 = vrot.slane %v1828, %v1858
      %v1860 = vlaneseq
      %v1861 = vshrl.u32 %v1860, 7
      %v1862 = vsub.s32 %v151, %v1861
      %v1863 = vrot.slane %v1831, %v1862
      %v1864 = vsel %vm472, %v1839, %v1835
      %v1865 = vsel %vm474, %v1843, %v1864
      %v1866 = vsel %vm476, %v1847, %v1865
      %v1867 = vsel %vm478, %v1851, %v1866
      %v1868 = vsel %vm480, %v1855, %v1867
      %v1869 = vsel %vm482, %v1859, %v1868
      %v1870 = vsel %vm484, %v1863, %v1869
      %v1871 = vsel %vm364, %v1870, 0
      %1873 = vmatprep.subr.mxu0 0.0
      %1874 = vmatpush1.msra.mxu0 %v1794
      %1875 = vmatprep.subr.mxu0 0.0
      %1876 = vmatpush1.msra.mxu0 0.0
      %1877 = vmatprep.subr.mxu0 0.0
      %1878 = vmatpush1.msra.mxu0 0.0
      %1879 = vmatprep.subr.mxu0 0.0
      %1880 = vmatpush1.msra.mxu0 0.0
      %1881 = vmatprep.subr.mxu0 0.0
      %1882 = vmatpush1.msra.mxu0 0.0
      %1883 = vmatprep.subr.mxu0 0.0
      %1884 = vmatpush1.msra.mxu0 0.0
      %1885 = vmatprep.subr.mxu0 0.0
      %1886 = vmatpush1.msra.mxu0 0.0
      %1887 = vmatprep.subr.mxu0 0.0
      %1888 = vmatpush1.msra.mxu0 0.0
      %1889 = vmatprep.subr.mxu0 0.0
      %1890 = vmatpush1.msra.mxu0 0.0
      %1891 = vmatprep.subr.mxu0 0.0
      %1892 = vmatpush1.msra.mxu0 0.0
      %1893 = vmatprep.subr.mxu0 0.0
      %1894 = vmatpush1.msra.mxu0 0.0
      %1895 = vmatprep.subr.mxu0 0.0
      %1896 = vmatpush1.msra.mxu0 0.0
      %1897 = vmatprep.subr.mxu0 0.0
      %1898 = vmatpush1.msra.mxu0 0.0
      %1899 = vmatprep.subr.mxu0 0.0
      %1900 = vmatpush1.msra.mxu0 0.0
      %1901 = vmatprep.subr.mxu0 0.0
      %1902 = vmatpush1.msra.mxu0 0.0
      %1903 = vmatprep.subr.mxu0 0.0
      %1904 = vmatpush1.msra.mxu0 0.0
      %1905 = vmatprep.subr.mxu0 0.0
      %1906 = vmatpush1.msra.mxu0 0.0
      %1907 = vmatprep.subr.mxu0 0.0
      %1908 = vmatpush1.msra.mxu0 0.0
      %1909 = vmatprep.subr.mxu0 0.0
      %1910 = vmatpush1.msra.mxu0 0.0
      %1911 = vmatprep.subr.mxu0 0.0
      %1912 = vmatpush1.msra.mxu0 0.0
      %1913 = vmatprep.subr.mxu0 0.0
      %1914 = vmatpush1.msra.mxu0 0.0
      %1915 = vmatprep.subr.mxu0 0.0
      %1916 = vmatpush1.msra.mxu0 0.0
      %1917 = vmatprep.subr.mxu0 0.0
      %1918 = vmatpush1.msra.mxu0 0.0
      %1919 = vmatprep.subr.mxu0 0.0
      %1920 = vmatpush1.msra.mxu0 0.0
      %1921 = vmatprep.subr.mxu0 0.0
      %1922 = vmatpush1.msra.mxu0 0.0
      %1923 = vmatprep.subr.mxu0 0.0
      %1924 = vmatpush1.msra.mxu0 0.0
      %1925 = vmatprep.subr.mxu0 0.0
      %1926 = vmatpush1.msra.mxu0 0.0
      %1927 = vmatprep.subr.mxu0 0.0
      %1928 = vmatpush1.msra.mxu0 0.0
      %1929 = vmatprep.subr.mxu0 0.0
      %1930 = vmatpush1.msra.mxu0 0.0
      %1931 = vmatprep.subr.mxu0 0.0
      %1932 = vmatpush1.msra.mxu0 0.0
      %1933 = vmatprep.subr.mxu0 0.0
      %1934 = vmatpush1.msra.mxu0 0.0
      %1935 = vmatprep.subr.mxu0 0.0
      %1936 = vmatpush1.msra.mxu0 0.0
      %1937 = vmatprep.mubr.f32.mxu0 0.0
      %1938 = vmatmul.mubr.f32.gmra.mrb[0].mxu0 %v1871
      %v1939 = vpop.f32.mrb[0].mxu0
      %v1940 = vadd.f32 %v1799, %v1939
      %v1941 = vpop.f32.mrb[0].mxu0
      %1942 = vdwg.mxu0
      %v1943 = vld [vmem:[%s1 + $0xd0] sm:$0xff]
      %v1944 = vld [vmem:[%s1 + $0x13f] sm:$0x1]
      %v1945 = vlaneseq
      %v1946 = vshrl.u32 %v1945, 7
      %v1947 = vsub.s32 0, %v1946
      %v1948 = vrot.slane %v1944, %v1947
      %1949 = vmatprep.subr.mxu0 0.0
      %1950 = vmatpush1.msra.mxu0 %v1943
      %1951 = vmatprep.subr.mxu0 0.0
      %1952 = vmatpush1.msra.mxu0 0.0
      %1953 = vmatprep.subr.mxu0 0.0
      %1954 = vmatpush1.msra.mxu0 0.0
      %1955 = vmatprep.subr.mxu0 0.0
      %1956 = vmatpush1.msra.mxu0 0.0
      %1957 = vmatprep.subr.mxu0 0.0
      %1958 = vmatpush1.msra.mxu0 0.0
      %1959 = vmatprep.subr.mxu0 0.0
      %1960 = vmatpush1.msra.mxu0 0.0
      %1961 = vmatprep.subr.mxu0 0.0
      %1962 = vmatpush1.msra.mxu0 0.0
      %1963 = vmatprep.subr.mxu0 0.0
      %1964 = vmatpush1.msra.mxu0 0.0
      %1965 = vmatprep.subr.mxu0 0.0
      %1966 = vmatpush1.msra.mxu0 0.0
      %1967 = vmatprep.subr.mxu0 0.0
      %1968 = vmatpush1.msra.mxu0 0.0
      %1969 = vmatprep.subr.mxu0 0.0
      %1970 = vmatpush1.msra.mxu0 0.0
      %1971 = vmatprep.subr.mxu0 0.0
      %1972 = vmatpush1.msra.mxu0 0.0
      %1973 = vmatprep.subr.mxu0 0.0
      %1974 = vmatpush1.msra.mxu0 0.0
      %1975 = vmatprep.subr.mxu0 0.0
      %1976 = vmatpush1.msra.mxu0 0.0
      %1977 = vmatprep.subr.mxu0 0.0
      %1978 = vmatpush1.msra.mxu0 0.0
      %1979 = vmatprep.subr.mxu0 0.0
      %1980 = vmatpush1.msra.mxu0 0.0
      %1981 = vmatprep.subr.mxu0 0.0
      %1982 = vmatpush1.msra.mxu0 0.0
      %1983 = vmatprep.subr.mxu0 0.0
      %1984 = vmatpush1.msra.mxu0 0.0
      %1985 = vmatprep.subr.mxu0 0.0
      %1986 = vmatpush1.msra.mxu0 0.0
      %1987 = vmatprep.subr.mxu0 0.0
      %1988 = vmatpush1.msra.mxu0 0.0
      %1989 = vmatprep.subr.mxu0 0.0
      %1990 = vmatpush1.msra.mxu0 0.0
      %1991 = vmatprep.subr.mxu0 0.0
      %1992 = vmatpush1.msra.mxu0 0.0
      %1993 = vmatprep.subr.mxu0 0.0
      %1994 = vmatpush1.msra.mxu0 0.0
      %1995 = vmatprep.subr.mxu0 0.0
      %1996 = vmatpush1.msra.mxu0 0.0
      %1997 = vmatprep.subr.mxu0 0.0
      %1998 = vmatpush1.msra.mxu0 0.0
      %1999 = vmatprep.subr.mxu0 0.0
      %2000 = vmatpush1.msra.mxu0 0.0
      %2001 = vmatprep.subr.mxu0 0.0
      %2002 = vmatpush1.msra.mxu0 0.0
      %2003 = vmatprep.subr.mxu0 0.0
      %2004 = vmatpush1.msra.mxu0 0.0
      %2005 = vmatprep.subr.mxu0 0.0
      %2006 = vmatpush1.msra.mxu0 0.0
      %2007 = vmatprep.subr.mxu0 0.0
      %2008 = vmatpush1.msra.mxu0 0.0
      %2009 = vmatprep.subr.mxu0 0.0
      %2010 = vmatpush1.msra.mxu0 0.0
      %2011 = vmatprep.subr.mxu0 0.0
      %2012 = vmatpush1.msra.mxu0 0.0
      %2013 = vmatprep.mubr.f32.mxu0 0.0
      %2014 = vmatmul.mubr.f32.gmra.mrb[0].mxu0 %v1871
      %v2015 = vpop.f32.mrb[0].mxu0
      %v2016 = vadd.f32 %v1948, %v2015
      %v2017 = vpop.f32.mrb[0].mxu0
      %2018 = vdwg.mxu0
      %v2019 = vld [vmem:[%s1 + $0xd8] sm:$0xff]
      %v2020 = vld [vmem:[%s1 + $0x140] sm:$0x1]
      %v2021 = vlaneseq
      %v2022 = vshrl.u32 %v2021, 7
      %v2023 = vsub.s32 0, %v2022
      %v2024 = vrot.slane %v2020, %v2023
      %2025 = vmatprep.subr.mxu0 0.0
      %2026 = vmatpush1.msra.mxu0 %v2019
      %2027 = vmatprep.subr.mxu0 0.0
      %2028 = vmatpush1.msra.mxu0 0.0
      %2029 = vmatprep.subr.mxu0 0.0
      %2030 = vmatpush1.msra.mxu0 0.0
      %2031 = vmatprep.subr.mxu0 0.0
      %2032 = vmatpush1.msra.mxu0 0.0
      %2033 = vmatprep.subr.mxu0 0.0
      %2034 = vmatpush1.msra.mxu0 0.0
      %2035 = vmatprep.subr.mxu0 0.0
      %2036 = vmatpush1.msra.mxu0 0.0
      %2037 = vmatprep.subr.mxu0 0.0
      %2038 = vmatpush1.msra.mxu0 0.0
      %2039 = vmatprep.subr.mxu0 0.0
      %2040 = vmatpush1.msra.mxu0 0.0
      %2041 = vmatprep.subr.mxu0 0.0
      %2042 = vmatpush1.msra.mxu0 0.0
      %2043 = vmatprep.subr.mxu0 0.0
      %2044 = vmatpush1.msra.mxu0 0.0
      %2045 = vmatprep.subr.mxu0 0.0
      %2046 = vmatpush1.msra.mxu0 0.0
      %2047 = vmatprep.subr.mxu0 0.0
      %2048 = vmatpush1.msra.mxu0 0.0
      %2049 = vmatprep.subr.mxu0 0.0
      %2050 = vmatpush1.msra.mxu0 0.0
      %2051 = vmatprep.subr.mxu0 0.0
      %2052 = vmatpush1.msra.mxu0 0.0
      %2053 = vmatprep.subr.mxu0 0.0
      %2054 = vmatpush1.msra.mxu0 0.0
      %2055 = vmatprep.subr.mxu0 0.0
      %2056 = vmatpush1.msra.mxu0 0.0
      %2057 = vmatprep.subr.mxu0 0.0
      %2058 = vmatpush1.msra.mxu0 0.0
      %2059 = vmatprep.subr.mxu0 0.0
      %2060 = vmatpush1.msra.mxu0 0.0
      %2061 = vmatprep.subr.mxu0 0.0
      %2062 = vmatpush1.msra.mxu0 0.0
      %2063 = vmatprep.subr.mxu0 0.0
      %2064 = vmatpush1.msra.mxu0 0.0
      %2065 = vmatprep.subr.mxu0 0.0
      %2066 = vmatpush1.msra.mxu0 0.0
      %2067 = vmatprep.subr.mxu0 0.0
      %2068 = vmatpush1.msra.mxu0 0.0
      %2069 = vmatprep.subr.mxu0 0.0
      %2070 = vmatpush1.msra.mxu0 0.0
      %2071 = vmatprep.subr.mxu0 0.0
      %2072 = vmatpush1.msra.mxu0 0.0
      %2073 = vmatprep.subr.mxu0 0.0
      %2074 = vmatpush1.msra.mxu0 0.0
      %2075 = vmatprep.subr.mxu0 0.0
      %2076 = vmatpush1.msra.mxu0 0.0
      %2077 = vmatprep.subr.mxu0 0.0
      %2078 = vmatpush1.msra.mxu0 0.0
      %2079 = vmatprep.subr.mxu0 0.0
      %2080 = vmatpush1.msra.mxu0 0.0
      %2081 = vmatprep.subr.mxu0 0.0
      %2082 = vmatpush1.msra.mxu0 0.0
      %2083 = vmatprep.subr.mxu0 0.0
      %2084 = vmatpush1.msra.mxu0 0.0
      %2085 = vmatprep.subr.mxu0 0.0
      %2086 = vmatpush1.msra.mxu0 0.0
      %2087 = vmatprep.subr.mxu0 0.0
      %2088 = vmatpush1.msra.mxu0 0.0
      %2089 = vmatprep.mubr.f32.mxu0 0.0
      %2090 = vmatmul.mubr.f32.gmra.mrb[0].mxu0 %v1871
      %v2091 = vpop.f32.mrb[0].mxu0
      %v2092 = vadd.f32 %v2024, %v2091
      %v2093 = vpop.f32.mrb[0].mxu0
      %2094 = vdwg.mxu0
      %v2095 = vrot.slane %v2016, 4
      %v2096 = vrot.slane %v2092, 4
      %v2097 = vmul.f32 %v1940, %v2016
      %v2098 = vsel %vm364, %v2097, 0.0
      %2099 = vadd.xlane.f32.xlu0 %v2098
      %v2100 = vpop.xlane.xlu0 %2099
      %v2101 = vmul.f32 %v2100, 0.35355338
      %v2102 = vmul.f32 %v1940, %v2095
      %v2103 = vsel %vm364, %v2102, 0.0
      %2104 = vadd.xlane.f32.xlu0 %v2103
      %v2105 = vpop.xlane.xlu0 %2104
      %v2106 = vmul.f32 %v2105, 0.35355338
      %v2107 = vmax.f32 %v2101, %v2106
      %v2108 = vsub.f32 %v2101, %v2107
      %v2109 = vmul.f32 %v2108, 1.442695
      %v2110 = vpow.pop %v2109
      %v2111 = vsub.f32 %v2106, %v2107
      %v2112 = vmul.f32 %v2111, 1.442695
      %v2113 = vpow.pop %v2112
      %v2114 = vadd.f32 %v2110, %v2113
      %v2115 = vrcp.pop %v2114
      %v2116 = vmul.f32 %v2110, %v2115
      %v2117 = vmul.f32 %v2116, %v2092
      %v2118 = vmul.f32 %v2113, %v2115
      %v2119 = vmul.f32 %v2118, %v2096
      %v2120 = vadd.f32 %v2117, %v2119
      %v2121 = vld [vmem:[%s1 + $0xe0] sm:$0xff]
      %v2122 = vld [vmem:[%s1 + $0x141] sm:$0x1]
      %v2123 = vlaneseq
      %v2124 = vshrl.u32 %v2123, 7
      %v2125 = vsub.s32 0, %v2124
      %v2126 = vrot.slane %v2122, %v2125
      %v2128 = vsel %vm364, %v2120, 0
      %2130 = vmatprep.subr.mxu0 0.0
      %2131 = vmatpush1.msra.mxu0 %v2121
      %2132 = vmatprep.subr.mxu0 0.0
      %2133 = vmatpush1.msra.mxu0 0.0
      %2134 = vmatprep.subr.mxu0 0.0
      %2135 = vmatpush1.msra.mxu0 0.0
      %2136 = vmatprep.subr.mxu0 0.0
      %2137 = vmatpush1.msra.mxu0 0.0
      %2138 = vmatprep.subr.mxu0 0.0
      %2139 = vmatpush1.msra.mxu0 0.0
      %2140 = vmatprep.subr.mxu0 0.0
      %2141 = vmatpush1.msra.mxu0 0.0
      %2142 = vmatprep.subr.mxu0 0.0
      %2143 = vmatpush1.msra.mxu0 0.0
      %2144 = vmatprep.subr.mxu0 0.0
      %2145 = vmatpush1.msra.mxu0 0.0
      %2146 = vmatprep.subr.mxu0 0.0
      %2147 = vmatpush1.msra.mxu0 0.0
      %2148 = vmatprep.subr.mxu0 0.0
      %2149 = vmatpush1.msra.mxu0 0.0
      %2150 = vmatprep.subr.mxu0 0.0
      %2151 = vmatpush1.msra.mxu0 0.0
      %2152 = vmatprep.subr.mxu0 0.0
      %2153 = vmatpush1.msra.mxu0 0.0
      %2154 = vmatprep.subr.mxu0 0.0
      %2155 = vmatpush1.msra.mxu0 0.0
      %2156 = vmatprep.subr.mxu0 0.0
      %2157 = vmatpush1.msra.mxu0 0.0
      %2158 = vmatprep.subr.mxu0 0.0
      %2159 = vmatpush1.msra.mxu0 0.0
      %2160 = vmatprep.subr.mxu0 0.0
      %2161 = vmatpush1.msra.mxu0 0.0
      %2162 = vmatprep.subr.mxu0 0.0
      %2163 = vmatpush1.msra.mxu0 0.0
      %2164 = vmatprep.subr.mxu0 0.0
      %2165 = vmatpush1.msra.mxu0 0.0
      %2166 = vmatprep.subr.mxu0 0.0
      %2167 = vmatpush1.msra.mxu0 0.0
      %2168 = vmatprep.subr.mxu0 0.0
      %2169 = vmatpush1.msra.mxu0 0.0
      %2170 = vmatprep.subr.mxu0 0.0
      %2171 = vmatpush1.msra.mxu0 0.0
      %2172 = vmatprep.subr.mxu0 0.0
      %2173 = vmatpush1.msra.mxu0 0.0
      %2174 = vmatprep.subr.mxu0 0.0
      %2175 = vmatpush1.msra.mxu0 0.0
      %2176 = vmatprep.subr.mxu0 0.0
      %2177 = vmatpush1.msra.mxu0 0.0
      %2178 = vmatprep.subr.mxu0 0.0
      %2179 = vmatpush1.msra.mxu0 0.0
      %2180 = vmatprep.subr.mxu0 0.0
      %2181 = vmatpush1.msra.mxu0 0.0
      %2182 = vmatprep.subr.mxu0 0.0
      %2183 = vmatpush1.msra.mxu0 0.0
      %2184 = vmatprep.subr.mxu0 0.0
      %2185 = vmatpush1.msra.mxu0 0.0
      %2186 = vmatprep.subr.mxu0 0.0
      %2187 = vmatpush1.msra.mxu0 0.0
      %2188 = vmatprep.subr.mxu0 0.0
      %2189 = vmatpush1.msra.mxu0 0.0
      %2190 = vmatprep.subr.mxu0 0.0
      %2191 = vmatpush1.msra.mxu0 0.0
      %2192 = vmatprep.subr.mxu0 0.0
      %2193 = vmatpush1.msra.mxu0 0.0
      %2194 = vmatprep.mubr.f32.mxu0 0.0
      %2195 = vmatmul.mubr.f32.gmra.mrb[0].mxu0 %v2128
      %v2196 = vpop.f32.mrb[0].mxu0
      %v2197 = vadd.f32 %v2126, %v2196
      %v2198 = vpop.f32.mrb[0].mxu0
      %2199 = vdwg.mxu0
      %v2201 = vlaneseq
      %v2202 = vshrl.u32 %v2201, 7
      %v2203 = vsub.s32 0, %v2202
      %v2204 = vrot.slane %v2197, %v2203
      %2206 = vbcast.lane.b32.xlu0 %v2204, 256
      %v2207 = vpop.permute.xlu0 %2206
      %v2208 = vlaneseq
      %v2209 = vshrl.u32 %v2208, 7
      %v2210 = vsub.s32 1, %v2209
      %v2211 = vrot.slane %v2197, %v2210
      %2213 = vbcast.lane.b32.xlu0 %v2211, 256
      %v2214 = vpop.permute.xlu0 %2213
      %v2215 = vlaneseq
      %v2216 = vshrl.u32 %v2215, 7
      %v2217 = vsub.s32 2, %v2216
      %v2218 = vrot.slane %v2197, %v2217
      %2220 = vbcast.lane.b32.xlu0 %v2218, 256
      %v2221 = vpop.permute.xlu0 %2220
      %v2222 = vlaneseq
      %v2223 = vshrl.u32 %v2222, 7
      %v2224 = vsub.s32 3, %v2223
      %v2225 = vrot.slane %v2197, %v2224
      %2227 = vbcast.lane.b32.xlu0 %v2225, 256
      %v2228 = vpop.permute.xlu0 %2227
      %v2229 = vlaneseq
      %v2230 = vshrl.u32 %v2229, 7
      %v2231 = vsub.s32 4, %v2230
      %v2232 = vrot.slane %v2197, %v2231
      %2234 = vbcast.lane.b32.xlu0 %v2232, 256
      %v2235 = vpop.permute.xlu0 %2234
      %v2236 = vlaneseq
      %v2237 = vshrl.u32 %v2236, 7
      %v2238 = vsub.s32 5, %v2237
      %v2239 = vrot.slane %v2197, %v2238
      %2241 = vbcast.lane.b32.xlu0 %v2239, 256
      %v2242 = vpop.permute.xlu0 %2241
      %v2243 = vlaneseq
      %v2244 = vshrl.u32 %v2243, 7
      %v2245 = vsub.s32 6, %v2244
      %v2246 = vrot.slane %v2197, %v2245
      %2248 = vbcast.lane.b32.xlu0 %v2246, 256
      %v2249 = vpop.permute.xlu0 %2248
      %v2250 = vlaneseq
      %v2251 = vshrl.u32 %v2250, 7
      %v2252 = vsub.s32 7, %v2251
      %v2253 = vrot.slane %v2197, %v2252
      %2255 = vbcast.lane.b32.xlu0 %v2253, 256
      %v2256 = vpop.permute.xlu0 %2255
      %v2265 = vadd.f32 %v1786, %v2207
      %v2266 = vadd.f32 %v1787, %v2214
      %v2267 = vadd.f32 %v1788, %v2221
      %v2268 = vadd.f32 %v1789, %v2228
      %v2269 = vadd.f32 %v1790, %v2235
      %v2270 = vadd.f32 %v1791, %v2242
      %v2271 = vadd.f32 %v1792, %v2249
      %v2272 = vadd.f32 %v1793, %v2256
      %v2273 = vld [vmem:[%s1 + $0x142] sm:$0x1]
      %v2274 = vld [vmem:[%s1 + $0x143] sm:$0x1]
      %2283 = vset.pattern.permute.xlu0 0
      %2284 = vperm.xlu0 %2283, %v2265
      %v2285 = vpop.permute.xlu0 %2284
      %2286 = vset.pattern.permute.xlu0 0
      %2287 = vperm.xlu0 %2286, %v2266
      %v2288 = vpop.permute.xlu0 %2287
      %2289 = vset.pattern.permute.xlu0 0
      %2290 = vperm.xlu0 %2289, %v2267
      %v2291 = vpop.permute.xlu0 %2290
      %2292 = vset.pattern.permute.xlu0 0
      %2293 = vperm.xlu0 %2292, %v2268
      %v2294 = vpop.permute.xlu0 %2293
      %2295 = vset.pattern.permute.xlu0 0
      %2296 = vperm.xlu0 %2295, %v2269
      %v2297 = vpop.permute.xlu0 %2296
      %2298 = vset.pattern.permute.xlu0 0
      %2299 = vperm.xlu0 %2298, %v2270
      %v2300 = vpop.permute.xlu0 %2299
      %2301 = vset.pattern.permute.xlu0 0
      %2302 = vperm.xlu0 %2301, %v2271
      %v2303 = vpop.permute.xlu0 %2302
      %2304 = vset.pattern.permute.xlu0 0
      %2305 = vperm.xlu0 %2304, %v2272
      %v2306 = vpop.permute.xlu0 %2305
      %v2307 = vlaneseq
      %v2308 = vshrl.u32 %v2307, 7
      %v2309 = vsub.s32 %v151, %v2308
      %v2310 = vrot.slane %v2285, %v2309
      %v2311 = vlaneseq
      %v2312 = vshrl.u32 %v2311, 7
      %v2313 = vsub.s32 %v151, %v2312
      %v2314 = vrot.slane %v2288, %v2313
      %v2315 = vlaneseq
      %v2316 = vshrl.u32 %v2315, 7
      %v2317 = vsub.s32 %v151, %v2316
      %v2318 = vrot.slane %v2291, %v2317
      %v2319 = vlaneseq
      %v2320 = vshrl.u32 %v2319, 7
      %v2321 = vsub.s32 %v151, %v2320
      %v2322 = vrot.slane %v2294, %v2321
      %v2323 = vlaneseq
      %v2324 = vshrl.u32 %v2323, 7
      %v2325 = vsub.s32 %v151, %v2324
      %v2326 = vrot.slane %v2297, %v2325
      %v2327 = vlaneseq
      %v2328 = vshrl.u32 %v2327, 7
      %v2329 = vsub.s32 %v151, %v2328
      %v2330 = vrot.slane %v2300, %v2329
      %v2331 = vlaneseq
      %v2332 = vshrl.u32 %v2331, 7
      %v2333 = vsub.s32 %v151, %v2332
      %v2334 = vrot.slane %v2303, %v2333
      %v2335 = vlaneseq
      %v2336 = vshrl.u32 %v2335, 7
      %v2337 = vsub.s32 %v151, %v2336
      %v2338 = vrot.slane %v2306, %v2337
      %v2339 = vsel %vm472, %v2314, %v2310
      %v2340 = vsel %vm474, %v2318, %v2339
      %v2341 = vsel %vm476, %v2322, %v2340
      %v2342 = vsel %vm478, %v2326, %v2341
      %v2343 = vsel %vm480, %v2330, %v2342
      %v2344 = vsel %vm482, %v2334, %v2343
      %v2345 = vsel %vm484, %v2338, %v2344
      %v2347 = vsel %vm364, %v2345, 0.0
      %2348 = vadd.xlane.f32.xlu0 %v2347
      %v2349 = vpop.xlane.xlu0 %2348
      %v2350 = vmul.f32 %v2349, %v965
      %v2351 = vmul.f32 %v2265, %v2265
      %v2352 = vmul.f32 %v2266, %v2266
      %v2353 = vmul.f32 %v2267, %v2267
      %v2354 = vmul.f32 %v2268, %v2268
      %v2355 = vmul.f32 %v2269, %v2269
      %v2356 = vmul.f32 %v2270, %v2270
      %v2357 = vmul.f32 %v2271, %v2271
      %v2358 = vmul.f32 %v2272, %v2272
      %2367 = vset.pattern.permute.xlu0 0
      %2368 = vperm.xlu0 %2367, %v2351
      %v2369 = vpop.permute.xlu0 %2368
      %2370 = vset.pattern.permute.xlu0 0
      %2371 = vperm.xlu0 %2370, %v2352
      %v2372 = vpop.permute.xlu0 %2371
      %2373 = vset.pattern.permute.xlu0 0
      %2374 = vperm.xlu0 %2373, %v2353
      %v2375 = vpop.permute.xlu0 %2374
      %2376 = vset.pattern.permute.xlu0 0
      %2377 = vperm.xlu0 %2376, %v2354
      %v2378 = vpop.permute.xlu0 %2377
      %2379 = vset.pattern.permute.xlu0 0
      %2380 = vperm.xlu0 %2379, %v2355
      %v2381 = vpop.permute.xlu0 %2380
      %2382 = vset.pattern.permute.xlu0 0
      %2383 = vperm.xlu0 %2382, %v2356
      %v2384 = vpop.permute.xlu0 %2383
      %2385 = vset.pattern.permute.xlu0 0
      %2386 = vperm.xlu0 %2385, %v2357
      %v2387 = vpop.permute.xlu0 %2386
      %2388 = vset.pattern.permute.xlu0 0
      %2389 = vperm.xlu0 %2388, %v2358
      %v2390 = vpop.permute.xlu0 %2389
      %v2391 = vlaneseq
      %v2392 = vshrl.u32 %v2391, 7
      %v2393 = vsub.s32 %v151, %v2392
      %v2394 = vrot.slane %v2369, %v2393
      %v2395 = vlaneseq
      %v2396 = vshrl.u32 %v2395, 7
      %v2397 = vsub.s32 %v151, %v2396
      %v2398 = vrot.slane %v2372, %v2397
      %v2399 = vlaneseq
      %v2400 = vshrl.u32 %v2399, 7
      %v2401 = vsub.s32 %v151, %v2400
      %v2402 = vrot.slane %v2375, %v2401
      %v2403 = vlaneseq
      %v2404 = vshrl.u32 %v2403, 7
      %v2405 = vsub.s32 %v151, %v2404
      %v2406 = vrot.slane %v2378, %v2405
      %v2407 = vlaneseq
      %v2408 = vshrl.u32 %v2407, 7
      %v2409 = vsub.s32 %v151, %v2408
      %v2410 = vrot.slane %v2381, %v2409
      %v2411 = vlaneseq
      %v2412 = vshrl.u32 %v2411, 7
      %v2413 = vsub.s32 %v151, %v2412
      %v2414 = vrot.slane %v2384, %v2413
      %v2415 = vlaneseq
      %v2416 = vshrl.u32 %v2415, 7
      %v2417 = vsub.s32 %v151, %v2416
      %v2418 = vrot.slane %v2387, %v2417
      %v2419 = vlaneseq
      %v2420 = vshrl.u32 %v2419, 7
      %v2421 = vsub.s32 %v151, %v2420
      %v2422 = vrot.slane %v2390, %v2421
      %v2423 = vsel %vm472, %v2398, %v2394
      %v2424 = vsel %vm474, %v2402, %v2423
      %v2425 = vsel %vm476, %v2406, %v2424
      %v2426 = vsel %vm478, %v2410, %v2425
      %v2427 = vsel %vm480, %v2414, %v2426
      %v2428 = vsel %vm482, %v2418, %v2427
      %v2429 = vsel %vm484, %v2422, %v2428
      %v2431 = vsel %vm364, %v2429, 0.0
      %2432 = vadd.xlane.f32.xlu0 %v2431
      %v2433 = vpop.xlane.xlu0 %2432
      %v2434 = vmul.f32 %v2433, %v965
      %v2435 = vmul.f32 %v2350, %v2350
      %v2436 = vsub.f32 %v2434, %v2435
      %v2438 = vlaneseq
      %v2439 = vshrl.u32 %v2438, 7
      %v2440 = vsub.s32 0, %v2439
      %v2441 = vrot.slane %v2350, %v2440
      %v2442 = vlaneseq
      %v2443 = vshrl.u32 %v2442, 7
      %v2444 = vsub.s32 1, %v2443
      %v2445 = vrot.slane %v2350, %v2444
      %v2446 = vlaneseq
      %v2447 = vshrl.u32 %v2446, 7
      %v2448 = vsub.s32 2, %v2447
      %v2449 = vrot.slane %v2350, %v2448
      %v2450 = vlaneseq
      %v2451 = vshrl.u32 %v2450, 7
      %v2452 = vsub.s32 3, %v2451
      %v2453 = vrot.slane %v2350, %v2452
      %v2454 = vlaneseq
      %v2455 = vshrl.u32 %v2454, 7
      %v2456 = vsub.s32 4, %v2455
      %v2457 = vrot.slane %v2350, %v2456
      %v2458 = vlaneseq
      %v2459 = vshrl.u32 %v2458, 7
      %v2460 = vsub.s32 5, %v2459
      %v2461 = vrot.slane %v2350, %v2460
      %v2462 = vlaneseq
      %v2463 = vshrl.u32 %v2462, 7
      %v2464 = vsub.s32 6, %v2463
      %v2465 = vrot.slane %v2350, %v2464
      %v2466 = vlaneseq
      %v2467 = vshrl.u32 %v2466, 7
      %v2468 = vsub.s32 7, %v2467
      %v2469 = vrot.slane %v2350, %v2468
      %v2478 = vsub.f32 %v2265, %v2441
      %v2479 = vsub.f32 %v2266, %v2445
      %v2480 = vsub.f32 %v2267, %v2449
      %v2481 = vsub.f32 %v2268, %v2453
      %v2482 = vsub.f32 %v2269, %v2457
      %v2483 = vsub.f32 %v2270, %v2461
      %v2484 = vsub.f32 %v2271, %v2465
      %v2485 = vsub.f32 %v2272, %v2469
      %v2486 = vadd.f32 %v2436, 1e-05
      %v2487 = vrsqrt.pop %v2486
      %v2489 = vlaneseq
      %v2490 = vshrl.u32 %v2489, 7
      %v2491 = vsub.s32 0, %v2490
      %v2492 = vrot.slane %v2487, %v2491
      %v2493 = vlaneseq
      %v2494 = vshrl.u32 %v2493, 7
      %v2495 = vsub.s32 1, %v2494
      %v2496 = vrot.slane %v2487, %v2495
      %v2497 = vlaneseq
      %v2498 = vshrl.u32 %v2497, 7
      %v2499 = vsub.s32 2, %v2498
      %v2500 = vrot.slane %v2487, %v2499
      %v2501 = vlaneseq
      %v2502 = vshrl.u32 %v2501, 7
      %v2503 = vsub.s32 3, %v2502
      %v2504 = vrot.slane %v2487, %v2503
      %v2505 = vlaneseq
      %v2506 = vshrl.u32 %v2505, 7
      %v2507 = vsub.s32 4, %v2506
      %v2508 = vrot.slane %v2487, %v2507
      %v2509 = vlaneseq
      %v2510 = vshrl.u32 %v2509, 7
      %v2511 = vsub.s32 5, %v2510
      %v2512 = vrot.slane %v2487, %v2511
      %v2513 = vlaneseq
      %v2514 = vshrl.u32 %v2513, 7
      %v2515 = vsub.s32 6, %v2514
      %v2516 = vrot.slane %v2487, %v2515
      %v2517 = vlaneseq
      %v2518 = vshrl.u32 %v2517, 7
      %v2519 = vsub.s32 7, %v2518
      %v2520 = vrot.slane %v2487, %v2519
      %v2529 = vmul.f32 %v2478, %v2492
      %v2530 = vmul.f32 %v2479, %v2496
      %v2531 = vmul.f32 %v2480, %v2500
      %v2532 = vmul.f32 %v2481, %v2504
      %v2533 = vmul.f32 %v2482, %v2508
      %v2534 = vmul.f32 %v2483, %v2512
      %v2535 = vmul.f32 %v2484, %v2516
      %v2536 = vmul.f32 %v2485, %v2520
      %v2537 = vlaneseq
      %v2538 = vshrl.u32 %v2537, 7
      %v2539 = vsub.s32 0, %v2538
      %v2540 = vrot.slane %v2273, %v2539
      %2543 = vbcast.lane.b32.xlu0 %v2540, 256
      %v2544 = vpop.permute.xlu0 %2543
      %v2546 = vmul.f32 %v2529, %v2544
      %v2547 = vmul.f32 %v2530, %v2544
      %v2548 = vmul.f32 %v2531, %v2544
      %v2549 = vmul.f32 %v2532, %v2544
      %v2550 = vmul.f32 %v2533, %v2544
      %v2551 = vmul.f32 %v2534, %v2544
      %v2552 = vmul.f32 %v2535, %v2544
      %v2553 = vmul.f32 %v2536, %v2544
      %v2554 = vlaneseq
      %v2555 = vshrl.u32 %v2554, 7
      %v2556 = vsub.s32 0, %v2555
      %v2557 = vrot.slane %v2274, %v2556
      %2560 = vbcast.lane.b32.xlu0 %v2557, 256
      %v2561 = vpop.permute.xlu0 %2560
      %v2563 = vadd.f32 %v2546, %v2561
      %v2564 = vadd.f32 %v2547, %v2561
      %v2565 = vadd.f32 %v2548, %v2561
      %v2566 = vadd.f32 %v2549, %v2561
      %v2567 = vadd.f32 %v2550, %v2561
      %v2568 = vadd.f32 %v2551, %v2561
      %v2569 = vadd.f32 %v2552, %v2561
      %v2570 = vadd.f32 %v2553, %v2561
      %v2571 = vld [vmem:[%s1 + $0xe8] sm:$0xff]
      %v2572 = vld [vmem:[%s1 + $0x144] sm:$0x1]
      %v2573 = vlaneseq
      %v2574 = vshrl.u32 %v2573, 7
      %v2575 = vsub.s32 0, %v2574
      %v2576 = vrot.slane %v2572, %v2575
      %2585 = vset.pattern.permute.xlu0 0
      %2586 = vperm.xlu0 %2585, %v2563
      %v2587 = vpop.permute.xlu0 %2586
      %2588 = vset.pattern.permute.xlu0 0
      %2589 = vperm.xlu0 %2588, %v2564
      %v2590 = vpop.permute.xlu0 %2589
      %2591 = vset.pattern.permute.xlu0 0
      %2592 = vperm.xlu0 %2591, %v2565
      %v2593 = vpop.permute.xlu0 %2592
      %2594 = vset.pattern.permute.xlu0 0
      %2595 = vperm.xlu0 %2594, %v2566
      %v2596 = vpop.permute.xlu0 %2595
      %2597 = vset.pattern.permute.xlu0 0
      %2598 = vperm.xlu0 %2597, %v2567
      %v2599 = vpop.permute.xlu0 %2598
      %2600 = vset.pattern.permute.xlu0 0
      %2601 = vperm.xlu0 %2600, %v2568
      %v2602 = vpop.permute.xlu0 %2601
      %2603 = vset.pattern.permute.xlu0 0
      %2604 = vperm.xlu0 %2603, %v2569
      %v2605 = vpop.permute.xlu0 %2604
      %2606 = vset.pattern.permute.xlu0 0
      %2607 = vperm.xlu0 %2606, %v2570
      %v2608 = vpop.permute.xlu0 %2607
      %v2609 = vlaneseq
      %v2610 = vshrl.u32 %v2609, 7
      %v2611 = vsub.s32 %v151, %v2610
      %v2612 = vrot.slane %v2587, %v2611
      %v2613 = vlaneseq
      %v2614 = vshrl.u32 %v2613, 7
      %v2615 = vsub.s32 %v151, %v2614
      %v2616 = vrot.slane %v2590, %v2615
      %v2617 = vlaneseq
      %v2618 = vshrl.u32 %v2617, 7
      %v2619 = vsub.s32 %v151, %v2618
      %v2620 = vrot.slane %v2593, %v2619
      %v2621 = vlaneseq
      %v2622 = vshrl.u32 %v2621, 7
      %v2623 = vsub.s32 %v151, %v2622
      %v2624 = vrot.slane %v2596, %v2623
      %v2625 = vlaneseq
      %v2626 = vshrl.u32 %v2625, 7
      %v2627 = vsub.s32 %v151, %v2626
      %v2628 = vrot.slane %v2599, %v2627
      %v2629 = vlaneseq
      %v2630 = vshrl.u32 %v2629, 7
      %v2631 = vsub.s32 %v151, %v2630
      %v2632 = vrot.slane %v2602, %v2631
      %v2633 = vlaneseq
      %v2634 = vshrl.u32 %v2633, 7
      %v2635 = vsub.s32 %v151, %v2634
      %v2636 = vrot.slane %v2605, %v2635
      %v2637 = vlaneseq
      %v2638 = vshrl.u32 %v2637, 7
      %v2639 = vsub.s32 %v151, %v2638
      %v2640 = vrot.slane %v2608, %v2639
      %v2641 = vsel %vm472, %v2616, %v2612
      %v2642 = vsel %vm474, %v2620, %v2641
      %v2643 = vsel %vm476, %v2624, %v2642
      %v2644 = vsel %vm478, %v2628, %v2643
      %v2645 = vsel %vm480, %v2632, %v2644
      %v2646 = vsel %vm482, %v2636, %v2645
      %v2647 = vsel %vm484, %v2640, %v2646
      %v2648 = vsel %vm364, %v2647, 0
      %2650 = vmatprep.subr.mxu0 0.0
      %2651 = vmatpush1.msra.mxu0 %v2571
      %2652 = vmatprep.subr.mxu0 0.0
      %2653 = vmatpush1.msra.mxu0 0.0
      %2654 = vmatprep.subr.mxu0 0.0
      %2655 = vmatpush1.msra.mxu0 0.0
      %2656 = vmatprep.subr.mxu0 0.0
      %2657 = vmatpush1.msra.mxu0 0.0
      %2658 = vmatprep.subr.mxu0 0.0
      %2659 = vmatpush1.msra.mxu0 0.0
      %2660 = vmatprep.subr.mxu0 0.0
      %2661 = vmatpush1.msra.mxu0 0.0
      %2662 = vmatprep.subr.mxu0 0.0
      %2663 = vmatpush1.msra.mxu0 0.0
      %2664 = vmatprep.subr.mxu0 0.0
      %2665 = vmatpush1.msra.mxu0 0.0
      %2666 = vmatprep.subr.mxu0 0.0
      %2667 = vmatpush1.msra.mxu0 0.0
      %2668 = vmatprep.subr.mxu0 0.0
      %2669 = vmatpush1.msra.mxu0 0.0
      %2670 = vmatprep.subr.mxu0 0.0
      %2671 = vmatpush1.msra.mxu0 0.0
      %2672 = vmatprep.subr.mxu0 0.0
      %2673 = vmatpush1.msra.mxu0 0.0
      %2674 = vmatprep.subr.mxu0 0.0
      %2675 = vmatpush1.msra.mxu0 0.0
      %2676 = vmatprep.subr.mxu0 0.0
      %2677 = vmatpush1.msra.mxu0 0.0
      %2678 = vmatprep.subr.mxu0 0.0
      %2679 = vmatpush1.msra.mxu0 0.0
      %2680 = vmatprep.subr.mxu0 0.0
      %2681 = vmatpush1.msra.mxu0 0.0
      %2682 = vmatprep.subr.mxu0 0.0
      %2683 = vmatpush1.msra.mxu0 0.0
      %2684 = vmatprep.subr.mxu0 0.0
      %2685 = vmatpush1.msra.mxu0 0.0
      %2686 = vmatprep.subr.mxu0 0.0
      %2687 = vmatpush1.msra.mxu0 0.0
      %2688 = vmatprep.subr.mxu0 0.0
      %2689 = vmatpush1.msra.mxu0 0.0
      %2690 = vmatprep.subr.mxu0 0.0
      %2691 = vmatpush1.msra.mxu0 0.0
      %2692 = vmatprep.subr.mxu0 0.0
      %2693 = vmatpush1.msra.mxu0 0.0
      %2694 = vmatprep.subr.mxu0 0.0
      %2695 = vmatpush1.msra.mxu0 0.0
      %2696 = vmatprep.subr.mxu0 0.0
      %2697 = vmatpush1.msra.mxu0 0.0
      %2698 = vmatprep.subr.mxu0 0.0
      %2699 = vmatpush1.msra.mxu0 0.0
      %2700 = vmatprep.subr.mxu0 0.0
      %2701 = vmatpush1.msra.mxu0 0.0
      %2702 = vmatprep.subr.mxu0 0.0
      %2703 = vmatpush1.msra.mxu0 0.0
      %2704 = vmatprep.subr.mxu0 0.0
      %2705 = vmatpush1.msra.mxu0 0.0
      %2706 = vmatprep.subr.mxu0 0.0
      %2707 = vmatpush1.msra.mxu0 0.0
      %2708 = vmatprep.subr.mxu0 0.0
      %2709 = vmatpush1.msra.mxu0 0.0
      %2710 = vmatprep.subr.mxu0 0.0
      %2711 = vmatpush1.msra.mxu0 0.0
      %2712 = vmatprep.subr.mxu0 0.0
      %2713 = vmatpush1.msra.mxu0 0.0
      %2714 = vmatprep.mubr.f32.mxu0 0.0
      %2715 = vmatmul.mubr.f32.gmra.mrb[0].mxu0 %v2648
      %v2716 = vpop.f32.mrb[0].mxu0
      %v2717 = vadd.f32 %v2576, %v2716
      %v2718 = vpop.f32.mrb[0].mxu0
      %2719 = vdwg.mxu0
      %v2720 = vmax.f32 %v2717, 0.0
      %v2721 = vld [vmem:[%s1 + $0xf0] sm:$0xff]
      %v2722 = vld [vmem:[%s1 + $0xf8] sm:$0xff]
      %v2723 = vld [vmem:[%s1 + $0x100] sm:$0xff]
      %v2724 = vld [vmem:[%s1 + $0x108] sm:$0xff]
      %v2725 = vld [vmem:[%s1 + $0x110] sm:$0xff]
      %v2726 = vld [vmem:[%s1 + $0x118] sm:$0xff]
      %v2727 = vld [vmem:[%s1 + $0x120] sm:$0xff]
      %v2728 = vld [vmem:[%s1 + $0x128] sm:$0xff]
      %v2729 = vld [vmem:[%s1 + $0x145] sm:$0x1]
      %v2730 = vlaneseq
      %v2731 = vshrl.u32 %v2730, 7
      %v2732 = vsub.s32 0, %v2731
      %v2733 = vrot.slane %v2729, %v2732
      %v2735 = vsel %vm213, %v2720, 0
      %2737 = vmatprep.subr.mxu0 0.0
      %2738 = vmatpush1.msra.mxu0 %v2721
      %2739 = vmatprep.subr.mxu0 0.0
      %2740 = vmatpush1.msra.mxu0 %v2722
      %2741 = vmatprep.subr.mxu0 0.0
      %2742 = vmatpush1.msra.mxu0 %v2723
      %2743 = vmatprep.subr.mxu0 0.0
      %2744 = vmatpush1.msra.mxu0 %v2724
      %2745 = vmatprep.subr.mxu0 0.0
      %2746 = vmatpush1.msra.mxu0 %v2725
      %2747 = vmatprep.subr.mxu0 0.0
      %2748 = vmatpush1.msra.mxu0 %v2726
      %2749 = vmatprep.subr.mxu0 0.0
      %2750 = vmatpush1.msra.mxu0 %v2727
      %2751 = vmatprep.subr.mxu0 0.0
      %2752 = vmatpush1.msra.mxu0 %v2728
      %2753 = vmatprep.subr.mxu0 0.0
      %2754 = vmatpush1.msra.mxu0 0.0
      %2755 = vmatprep.subr.mxu0 0.0
      %2756 = vmatpush1.msra.mxu0 0.0
      %2757 = vmatprep.subr.mxu0 0.0
      %2758 = vmatpush1.msra.mxu0 0.0
      %2759 = vmatprep.subr.mxu0 0.0
      %2760 = vmatpush1.msra.mxu0 0.0
      %2761 = vmatprep.subr.mxu0 0.0
      %2762 = vmatpush1.msra.mxu0 0.0
      %2763 = vmatprep.subr.mxu0 0.0
      %2764 = vmatpush1.msra.mxu0 0.0
      %2765 = vmatprep.subr.mxu0 0.0
      %2766 = vmatpush1.msra.mxu0 0.0
      %2767 = vmatprep.subr.mxu0 0.0
      %2768 = vmatpush1.msra.mxu0 0.0
      %2769 = vmatprep.subr.mxu0 0.0
      %2770 = vmatpush1.msra.mxu0 0.0
      %2771 = vmatprep.subr.mxu0 0.0
      %2772 = vmatpush1.msra.mxu0 0.0
      %2773 = vmatprep.subr.mxu0 0.0
      %2774 = vmatpush1.msra.mxu0 0.0
      %2775 = vmatprep.subr.mxu0 0.0
      %2776 = vmatpush1.msra.mxu0 0.0
      %2777 = vmatprep.subr.mxu0 0.0
      %2778 = vmatpush1.msra.mxu0 0.0
      %2779 = vmatprep.subr.mxu0 0.0
      %2780 = vmatpush1.msra.mxu0 0.0
      %2781 = vmatprep.subr.mxu0 0.0
      %2782 = vmatpush1.msra.mxu0 0.0
      %2783 = vmatprep.subr.mxu0 0.0
      %2784 = vmatpush1.msra.mxu0 0.0
      %2785 = vmatprep.subr.mxu0 0.0
      %2786 = vmatpush1.msra.mxu0 0.0
      %2787 = vmatprep.subr.mxu0 0.0
      %2788 = vmatpush1.msra.mxu0 0.0
      %2789 = vmatprep.subr.mxu0 0.0
      %2790 = vmatpush1.msra.mxu0 0.0
      %2791 = vmatprep.subr.mxu0 0.0
      %2792 = vmatpush1.msra.mxu0 0.0
      %2793 = vmatprep.subr.mxu0 0.0
      %2794 = vmatpush1.msra.mxu0 0.0
      %2795 = vmatprep.subr.mxu0 0.0
      %2796 = vmatpush1.msra.mxu0 0.0
      %2797 = vmatprep.subr.mxu0 0.0
      %2798 = vmatpush1.msra.mxu0 0.0
      %2799 = vmatprep.subr.mxu0 0.0
      %2800 = vmatpush1.msra.mxu0 0.0
      %2801 = vmatprep.mubr.f32.mxu0 0.0
      %2802 = vmatmul.mubr.f32.gmra.mrb[0].mxu0 %v2735
      %v2803 = vpop.f32.mrb[0].mxu0
      %v2804 = vadd.f32 %v2733, %v2803
      %v2805 = vpop.f32.mrb[0].mxu0
      %2806 = vdwg.mxu0
      %v2808 = vlaneseq
      %v2809 = vshrl.u32 %v2808, 7
      %v2810 = vsub.s32 0, %v2809
      %v2811 = vrot.slane %v2804, %v2810
      %2813 = vbcast.lane.b32.xlu0 %v2811, 256
      %v2814 = vpop.permute.xlu0 %2813
      %v2815 = vlaneseq
      %v2816 = vshrl.u32 %v2815, 7
      %v2817 = vsub.s32 1, %v2816
      %v2818 = vrot.slane %v2804, %v2817
      %2820 = vbcast.lane.b32.xlu0 %v2818, 256
      %v2821 = vpop.permute.xlu0 %2820
      %v2822 = vlaneseq
      %v2823 = vshrl.u32 %v2822, 7
      %v2824 = vsub.s32 2, %v2823
      %v2825 = vrot.slane %v2804, %v2824
      %2827 = vbcast.lane.b32.xlu0 %v2825, 256
      %v2828 = vpop.permute.xlu0 %2827
      %v2829 = vlaneseq
      %v2830 = vshrl.u32 %v2829, 7
      %v2831 = vsub.s32 3, %v2830
      %v2832 = vrot.slane %v2804, %v2831
      %2834 = vbcast.lane.b32.xlu0 %v2832, 256
      %v2835 = vpop.permute.xlu0 %2834
      %v2836 = vlaneseq
      %v2837 = vshrl.u32 %v2836, 7
      %v2838 = vsub.s32 4, %v2837
      %v2839 = vrot.slane %v2804, %v2838
      %2841 = vbcast.lane.b32.xlu0 %v2839, 256
      %v2842 = vpop.permute.xlu0 %2841
      %v2843 = vlaneseq
      %v2844 = vshrl.u32 %v2843, 7
      %v2845 = vsub.s32 5, %v2844
      %v2846 = vrot.slane %v2804, %v2845
      %2848 = vbcast.lane.b32.xlu0 %v2846, 256
      %v2849 = vpop.permute.xlu0 %2848
      %v2850 = vlaneseq
      %v2851 = vshrl.u32 %v2850, 7
      %v2852 = vsub.s32 6, %v2851
      %v2853 = vrot.slane %v2804, %v2852
      %2855 = vbcast.lane.b32.xlu0 %v2853, 256
      %v2856 = vpop.permute.xlu0 %2855
      %v2857 = vlaneseq
      %v2858 = vshrl.u32 %v2857, 7
      %v2859 = vsub.s32 7, %v2858
      %v2860 = vrot.slane %v2804, %v2859
      %2862 = vbcast.lane.b32.xlu0 %v2860, 256
      %v2863 = vpop.permute.xlu0 %2862
      %v2872 = vadd.f32 %v2563, %v2814
      %v2873 = vadd.f32 %v2564, %v2821
      %v2874 = vadd.f32 %v2565, %v2828
      %v2875 = vadd.f32 %v2566, %v2835
      %v2876 = vadd.f32 %v2567, %v2842
      %v2877 = vadd.f32 %v2568, %v2849
      %v2878 = vadd.f32 %v2569, %v2856
      %v2879 = vadd.f32 %v2570, %v2863
      %v2880 = vld [vmem:[%s1 + $0x146] sm:$0x1]
      %v2881 = vld [vmem:[%s1 + $0x147] sm:$0x1]
      %2890 = vset.pattern.permute.xlu0 0
      %2891 = vperm.xlu0 %2890, %v2872
      %v2892 = vpop.permute.xlu0 %2891
      %2893 = vset.pattern.permute.xlu0 0
      %2894 = vperm.xlu0 %2893, %v2873
      %v2895 = vpop.permute.xlu0 %2894
      %2896 = vset.pattern.permute.xlu0 0
      %2897 = vperm.xlu0 %2896, %v2874
      %v2898 = vpop.permute.xlu0 %2897
      %2899 = vset.pattern.permute.xlu0 0
      %2900 = vperm.xlu0 %2899, %v2875
      %v2901 = vpop.permute.xlu0 %2900
      %2902 = vset.pattern.permute.xlu0 0
      %2903 = vperm.xlu0 %2902, %v2876
      %v2904 = vpop.permute.xlu0 %2903
      %2905 = vset.pattern.permute.xlu0 0
      %2906 = vperm.xlu0 %2905, %v2877
      %v2907 = vpop.permute.xlu0 %2906
      %2908 = vset.pattern.permute.xlu0 0
      %2909 = vperm.xlu0 %2908, %v2878
      %v2910 = vpop.permute.xlu0 %2909
      %2911 = vset.pattern.permute.xlu0 0
      %2912 = vperm.xlu0 %2911, %v2879
      %v2913 = vpop.permute.xlu0 %2912
      %v2914 = vlaneseq
      %v2915 = vshrl.u32 %v2914, 7
      %v2916 = vsub.s32 %v151, %v2915
      %v2917 = vrot.slane %v2892, %v2916
      %v2918 = vlaneseq
      %v2919 = vshrl.u32 %v2918, 7
      %v2920 = vsub.s32 %v151, %v2919
      %v2921 = vrot.slane %v2895, %v2920
      %v2922 = vlaneseq
      %v2923 = vshrl.u32 %v2922, 7
      %v2924 = vsub.s32 %v151, %v2923
      %v2925 = vrot.slane %v2898, %v2924
      %v2926 = vlaneseq
      %v2927 = vshrl.u32 %v2926, 7
      %v2928 = vsub.s32 %v151, %v2927
      %v2929 = vrot.slane %v2901, %v2928
      %v2930 = vlaneseq
      %v2931 = vshrl.u32 %v2930, 7
      %v2932 = vsub.s32 %v151, %v2931
      %v2933 = vrot.slane %v2904, %v2932
      %v2934 = vlaneseq
      %v2935 = vshrl.u32 %v2934, 7
      %v2936 = vsub.s32 %v151, %v2935
      %v2937 = vrot.slane %v2907, %v2936
      %v2938 = vlaneseq
      %v2939 = vshrl.u32 %v2938, 7
      %v2940 = vsub.s32 %v151, %v2939
      %v2941 = vrot.slane %v2910, %v2940
      %v2942 = vlaneseq
      %v2943 = vshrl.u32 %v2942, 7
      %v2944 = vsub.s32 %v151, %v2943
      %v2945 = vrot.slane %v2913, %v2944
      %v2946 = vsel %vm472, %v2921, %v2917
      %v2947 = vsel %vm474, %v2925, %v2946
      %v2948 = vsel %vm476, %v2929, %v2947
      %v2949 = vsel %vm478, %v2933, %v2948
      %v2950 = vsel %vm480, %v2937, %v2949
      %v2951 = vsel %vm482, %v2941, %v2950
      %v2952 = vsel %vm484, %v2945, %v2951
      %v2954 = vsel %vm364, %v2952, 0.0
      %2955 = vadd.xlane.f32.xlu0 %v2954
      %v2956 = vpop.xlane.xlu0 %2955
      %v2957 = vmul.f32 %v2956, %v965
      %v2958 = vmul.f32 %v2872, %v2872
      %v2959 = vmul.f32 %v2873, %v2873
      %v2960 = vmul.f32 %v2874, %v2874
      %v2961 = vmul.f32 %v2875, %v2875
      %v2962 = vmul.f32 %v2876, %v2876
      %v2963 = vmul.f32 %v2877, %v2877
      %v2964 = vmul.f32 %v2878, %v2878
      %v2965 = vmul.f32 %v2879, %v2879
      %2974 = vset.pattern.permute.xlu0 0
      %2975 = vperm.xlu0 %2974, %v2958
      %v2976 = vpop.permute.xlu0 %2975
      %2977 = vset.pattern.permute.xlu0 0
      %2978 = vperm.xlu0 %2977, %v2959
      %v2979 = vpop.permute.xlu0 %2978
      %2980 = vset.pattern.permute.xlu0 0
      %2981 = vperm.xlu0 %2980, %v2960
      %v2982 = vpop.permute.xlu0 %2981
      %2983 = vset.pattern.permute.xlu0 0
      %2984 = vperm.xlu0 %2983, %v2961
      %v2985 = vpop.permute.xlu0 %2984
      %2986 = vset.pattern.permute.xlu0 0
      %2987 = vperm.xlu0 %2986, %v2962
      %v2988 = vpop.permute.xlu0 %2987
      %2989 = vset.pattern.permute.xlu0 0
      %2990 = vperm.xlu0 %2989, %v2963
      %v2991 = vpop.permute.xlu0 %2990
      %2992 = vset.pattern.permute.xlu0 0
      %2993 = vperm.xlu0 %2992, %v2964
      %v2994 = vpop.permute.xlu0 %2993
      %2995 = vset.pattern.permute.xlu0 0
      %2996 = vperm.xlu0 %2995, %v2965
      %v2997 = vpop.permute.xlu0 %2996
      %v2998 = vlaneseq
      %v2999 = vshrl.u32 %v2998, 7
      %v3000 = vsub.s32 %v151, %v2999
      %v3001 = vrot.slane %v2976, %v3000
      %v3002 = vlaneseq
      %v3003 = vshrl.u32 %v3002, 7
      %v3004 = vsub.s32 %v151, %v3003
      %v3005 = vrot.slane %v2979, %v3004
      %v3006 = vlaneseq
      %v3007 = vshrl.u32 %v3006, 7
      %v3008 = vsub.s32 %v151, %v3007
      %v3009 = vrot.slane %v2982, %v3008
      %v3010 = vlaneseq
      %v3011 = vshrl.u32 %v3010, 7
      %v3012 = vsub.s32 %v151, %v3011
      %v3013 = vrot.slane %v2985, %v3012
      %v3014 = vlaneseq
      %v3015 = vshrl.u32 %v3014, 7
      %v3016 = vsub.s32 %v151, %v3015
      %v3017 = vrot.slane %v2988, %v3016
      %v3018 = vlaneseq
      %v3019 = vshrl.u32 %v3018, 7
      %v3020 = vsub.s32 %v151, %v3019
      %v3021 = vrot.slane %v2991, %v3020
      %v3022 = vlaneseq
      %v3023 = vshrl.u32 %v3022, 7
      %v3024 = vsub.s32 %v151, %v3023
      %v3025 = vrot.slane %v2994, %v3024
      %v3026 = vlaneseq
      %v3027 = vshrl.u32 %v3026, 7
      %v3028 = vsub.s32 %v151, %v3027
      %v3029 = vrot.slane %v2997, %v3028
      %v3030 = vsel %vm472, %v3005, %v3001
      %v3031 = vsel %vm474, %v3009, %v3030
      %v3032 = vsel %vm476, %v3013, %v3031
      %v3033 = vsel %vm478, %v3017, %v3032
      %v3034 = vsel %vm480, %v3021, %v3033
      %v3035 = vsel %vm482, %v3025, %v3034
      %v3036 = vsel %vm484, %v3029, %v3035
      %v3038 = vsel %vm364, %v3036, 0.0
      %3039 = vadd.xlane.f32.xlu0 %v3038
      %v3040 = vpop.xlane.xlu0 %3039
      %v3041 = vmul.f32 %v3040, %v965
      %v3042 = vmul.f32 %v2957, %v2957
      %v3043 = vsub.f32 %v3041, %v3042
      %v3045 = vlaneseq
      %v3046 = vshrl.u32 %v3045, 7
      %v3047 = vsub.s32 0, %v3046
      %v3048 = vrot.slane %v2957, %v3047
      %v3049 = vlaneseq
      %v3050 = vshrl.u32 %v3049, 7
      %v3051 = vsub.s32 1, %v3050
      %v3052 = vrot.slane %v2957, %v3051
      %v3053 = vlaneseq
      %v3054 = vshrl.u32 %v3053, 7
      %v3055 = vsub.s32 2, %v3054
      %v3056 = vrot.slane %v2957, %v3055
      %v3057 = vlaneseq
      %v3058 = vshrl.u32 %v3057, 7
      %v3059 = vsub.s32 3, %v3058
      %v3060 = vrot.slane %v2957, %v3059
      %v3061 = vlaneseq
      %v3062 = vshrl.u32 %v3061, 7
      %v3063 = vsub.s32 4, %v3062
      %v3064 = vrot.slane %v2957, %v3063
      %v3065 = vlaneseq
      %v3066 = vshrl.u32 %v3065, 7
      %v3067 = vsub.s32 5, %v3066
      %v3068 = vrot.slane %v2957, %v3067
      %v3069 = vlaneseq
      %v3070 = vshrl.u32 %v3069, 7
      %v3071 = vsub.s32 6, %v3070
      %v3072 = vrot.slane %v2957, %v3071
      %v3073 = vlaneseq
      %v3074 = vshrl.u32 %v3073, 7
      %v3075 = vsub.s32 7, %v3074
      %v3076 = vrot.slane %v2957, %v3075
      %v3085 = vsub.f32 %v2872, %v3048
      %v3086 = vsub.f32 %v2873, %v3052
      %v3087 = vsub.f32 %v2874, %v3056
      %v3088 = vsub.f32 %v2875, %v3060
      %v3089 = vsub.f32 %v2876, %v3064
      %v3090 = vsub.f32 %v2877, %v3068
      %v3091 = vsub.f32 %v2878, %v3072
      %v3092 = vsub.f32 %v2879, %v3076
      %v3093 = vadd.f32 %v3043, 1e-05
      %v3094 = vrsqrt.pop %v3093
      %v3096 = vlaneseq
      %v3097 = vshrl.u32 %v3096, 7
      %v3098 = vsub.s32 0, %v3097
      %v3099 = vrot.slane %v3094, %v3098
      %v3100 = vlaneseq
      %v3101 = vshrl.u32 %v3100, 7
      %v3102 = vsub.s32 1, %v3101
      %v3103 = vrot.slane %v3094, %v3102
      %v3104 = vlaneseq
      %v3105 = vshrl.u32 %v3104, 7
      %v3106 = vsub.s32 2, %v3105
      %v3107 = vrot.slane %v3094, %v3106
      %v3108 = vlaneseq
      %v3109 = vshrl.u32 %v3108, 7
      %v3110 = vsub.s32 3, %v3109
      %v3111 = vrot.slane %v3094, %v3110
      %v3112 = vlaneseq
      %v3113 = vshrl.u32 %v3112, 7
      %v3114 = vsub.s32 4, %v3113
      %v3115 = vrot.slane %v3094, %v3114
      %v3116 = vlaneseq
      %v3117 = vshrl.u32 %v3116, 7
      %v3118 = vsub.s32 5, %v3117
      %v3119 = vrot.slane %v3094, %v3118
      %v3120 = vlaneseq
      %v3121 = vshrl.u32 %v3120, 7
      %v3122 = vsub.s32 6, %v3121
      %v3123 = vrot.slane %v3094, %v3122
      %v3124 = vlaneseq
      %v3125 = vshrl.u32 %v3124, 7
      %v3126 = vsub.s32 7, %v3125
      %v3127 = vrot.slane %v3094, %v3126
      %v3136 = vmul.f32 %v3085, %v3099
      %v3137 = vmul.f32 %v3086, %v3103
      %v3138 = vmul.f32 %v3087, %v3107
      %v3139 = vmul.f32 %v3088, %v3111
      %v3140 = vmul.f32 %v3089, %v3115
      %v3141 = vmul.f32 %v3090, %v3119
      %v3142 = vmul.f32 %v3091, %v3123
      %v3143 = vmul.f32 %v3092, %v3127
      %v3144 = vlaneseq
      %v3145 = vshrl.u32 %v3144, 7
      %v3146 = vsub.s32 0, %v3145
      %v3147 = vrot.slane %v2880, %v3146
      %3150 = vbcast.lane.b32.xlu0 %v3147, 256
      %v3151 = vpop.permute.xlu0 %3150
      %v3153 = vmul.f32 %v3136, %v3151
      %v3154 = vmul.f32 %v3137, %v3151
      %v3155 = vmul.f32 %v3138, %v3151
      %v3156 = vmul.f32 %v3139, %v3151
      %v3157 = vmul.f32 %v3140, %v3151
      %v3158 = vmul.f32 %v3141, %v3151
      %v3159 = vmul.f32 %v3142, %v3151
      %v3160 = vmul.f32 %v3143, %v3151
      %v3161 = vlaneseq
      %v3162 = vshrl.u32 %v3161, 7
      %v3163 = vsub.s32 0, %v3162
      %v3164 = vrot.slane %v2881, %v3163
      %3167 = vbcast.lane.b32.xlu0 %v3164, 256
      %v3168 = vpop.permute.xlu0 %3167
      %v3170 = vadd.f32 %v3153, %v3168
      %v3171 = vadd.f32 %v3154, %v3168
      %v3172 = vadd.f32 %v3155, %v3168
      %v3173 = vadd.f32 %v3156, %v3168
      %v3174 = vadd.f32 %v3157, %v3168
      %v3175 = vadd.f32 %v3158, %v3168
      %v3176 = vadd.f32 %v3159, %v3168
      %v3177 = vadd.f32 %v3160, %v3168
      %v3178 = vld [vmem:[%s1 + $0x40] sm:$0xff]
      %v3179 = vld [vmem:[%s1 + $0x48] sm:$0xff]
      %v3180 = vld [vmem:[%s1 + $0x50] sm:$0xff]
      %v3181 = vld [vmem:[%s1 + $0x58] sm:$0xff]
      %v3182 = vld [vmem:[%s1 + $0x133] sm:$0x1]
      %v3183 = vlaneseq
      %v3184 = vshrl.u32 %v3183, 7
      %v3185 = vsub.s32 0, %v3184
      %v3186 = vrot.slane %v3182, %v3185
      %3195 = vset.pattern.permute.xlu0 0
      %3196 = vperm.xlu0 %3195, %v3170
      %v3197 = vpop.permute.xlu0 %3196
      %3198 = vset.pattern.permute.xlu0 0
      %3199 = vperm.xlu0 %3198, %v3171
      %v3200 = vpop.permute.xlu0 %3199
      %3201 = vset.pattern.permute.xlu0 0
      %3202 = vperm.xlu0 %3201, %v3172
      %v3203 = vpop.permute.xlu0 %3202
      %3204 = vset.pattern.permute.xlu0 0
      %3205 = vperm.xlu0 %3204, %v3173
      %v3206 = vpop.permute.xlu0 %3205
      %3207 = vset.pattern.permute.xlu0 0
      %3208 = vperm.xlu0 %3207, %v3174
      %v3209 = vpop.permute.xlu0 %3208
      %3210 = vset.pattern.permute.xlu0 0
      %3211 = vperm.xlu0 %3210, %v3175
      %v3212 = vpop.permute.xlu0 %3211
      %3213 = vset.pattern.permute.xlu0 0
      %3214 = vperm.xlu0 %3213, %v3176
      %v3215 = vpop.permute.xlu0 %3214
      %3216 = vset.pattern.permute.xlu0 0
      %3217 = vperm.xlu0 %3216, %v3177
      %v3218 = vpop.permute.xlu0 %3217
      %v3219 = vlaneseq
      %v3220 = vshrl.u32 %v3219, 7
      %v3221 = vsub.s32 %v151, %v3220
      %v3222 = vrot.slane %v3197, %v3221
      %v3223 = vadd.s32 %v151, 4294967288
      %v3224 = vlaneseq
      %v3225 = vshrl.u32 %v3224, 7
      %v3226 = vsub.s32 %v3223, %v3225
      %v3227 = vrot.slane %v3200, %v3226
      %vm3228 = vcmask 130112
      %v3229 = vsel %vm3228, %v3227, %v3222
      %v3230 = vadd.s32 %v151, 4294967280
      %v3231 = vlaneseq
      %v3232 = vshrl.u32 %v3231, 7
      %v3233 = vsub.s32 %v3230, %v3232
      %v3234 = vrot.slane %v3203, %v3233
      %vm3235 = vcmask 195712
      %v3236 = vsel %vm3235, %v3234, %v3229
      %v3237 = vadd.s32 %v151, 4294967272
      %v3238 = vlaneseq
      %v3239 = vshrl.u32 %v3238, 7
      %v3240 = vsub.s32 %v3237, %v3239
      %v3241 = vrot.slane %v3206, %v3240
      %vm3242 = vcmask 261312
      %v3243 = vsel %vm3242, %v3241, %v3236
      %v3244 = vlaneseq
      %v3245 = vshrl.u32 %v3244, 7
      %v3246 = vsub.s32 %v151, %v3245
      %v3247 = vrot.slane %v3209, %v3246
      %v3248 = vlaneseq
      %v3249 = vshrl.u32 %v3248, 7
      %v3250 = vsub.s32 %v3223, %v3249
      %v3251 = vrot.slane %v3212, %v3250
      %v3252 = vsel %vm3228, %v3251, %v3247
      %v3253 = vlaneseq
      %v3254 = vshrl.u32 %v3253, 7
      %v3255 = vsub.s32 %v3230, %v3254
      %v3256 = vrot.slane %v3215, %v3255
      %v3257 = vsel %vm3235, %v3256, %v3252
      %v3258 = vlaneseq
      %v3259 = vshrl.u32 %v3258, 7
      %v3260 = vsub.s32 %v3237, %v3259
      %v3261 = vrot.slane %v3218, %v3260
      %v3262 = vsel %vm3242, %v3261, %v3257
      %v3263 = vsel %vm472, %v3262, %v3243
      %vm3264 = vcmask 261120
      %v3265 = vsel %vm3264, %v3263, 0
      %3267 = vmatprep.subr.mxu0 0.0
      %3268 = vmatpush1.msra.mxu0 %v3178
      %3269 = vmatprep.subr.mxu0 0.0
      %3270 = vmatpush1.msra.mxu0 %v3179
      %3271 = vmatprep.subr.mxu0 0.0
      %3272 = vmatpush1.msra.mxu0 %v3180
      %3273 = vmatprep.subr.mxu0 0.0
      %3274 = vmatpush1.msra.mxu0 %v3181
      %3275 = vmatprep.subr.mxu0 0.0
      %3276 = vmatpush1.msra.mxu0 0.0
      %3277 = vmatprep.subr.mxu0 0.0
      %3278 = vmatpush1.msra.mxu0 0.0
      %3279 = vmatprep.subr.mxu0 0.0
      %3280 = vmatpush1.msra.mxu0 0.0
      %3281 = vmatprep.subr.mxu0 0.0
      %3282 = vmatpush1.msra.mxu0 0.0
      %3283 = vmatprep.subr.mxu0 0.0
      %3284 = vmatpush1.msra.mxu0 0.0
      %3285 = vmatprep.subr.mxu0 0.0
      %3286 = vmatpush1.msra.mxu0 0.0
      %3287 = vmatprep.subr.mxu0 0.0
      %3288 = vmatpush1.msra.mxu0 0.0
      %3289 = vmatprep.subr.mxu0 0.0
      %3290 = vmatpush1.msra.mxu0 0.0
      %3291 = vmatprep.subr.mxu0 0.0
      %3292 = vmatpush1.msra.mxu0 0.0
      %3293 = vmatprep.subr.mxu0 0.0
      %3294 = vmatpush1.msra.mxu0 0.0
      %3295 = vmatprep.subr.mxu0 0.0
      %3296 = vmatpush1.msra.mxu0 0.0
      %3297 = vmatprep.subr.mxu0 0.0
      %3298 = vmatpush1.msra.mxu0 0.0
      %3299 = vmatprep.subr.mxu0 0.0
      %3300 = vmatpush1.msra.mxu0 0.0
      %3301 = vmatprep.subr.mxu0 0.0
      %3302 = vmatpush1.msra.mxu0 0.0
      %3303 = vmatprep.subr.mxu0 0.0
      %3304 = vmatpush1.msra.mxu0 0.0
      %3305 = vmatprep.subr.mxu0 0.0
      %3306 = vmatpush1.msra.mxu0 0.0
      %3307 = vmatprep.subr.mxu0 0.0
      %3308 = vmatpush1.msra.mxu0 0.0
      %3309 = vmatprep.subr.mxu0 0.0
      %3310 = vmatpush1.msra.mxu0 0.0
      %3311 = vmatprep.subr.mxu0 0.0
      %3312 = vmatpush1.msra.mxu0 0.0
      %3313 = vmatprep.subr.mxu0 0.0
      %3314 = vmatpush1.msra.mxu0 0.0
      %3315 = vmatprep.subr.mxu0 0.0
      %3316 = vmatpush1.msra.mxu0 0.0
      %3317 = vmatprep.subr.mxu0 0.0
      %3318 = vmatpush1.msra.mxu0 0.0
      %3319 = vmatprep.subr.mxu0 0.0
      %3320 = vmatpush1.msra.mxu0 0.0
      %3321 = vmatprep.subr.mxu0 0.0
      %3322 = vmatpush1.msra.mxu0 0.0
      %3323 = vmatprep.subr.mxu0 0.0
      %3324 = vmatpush1.msra.mxu0 0.0
      %3325 = vmatprep.subr.mxu0 0.0
      %3326 = vmatpush1.msra.mxu0 0.0
      %3327 = vmatprep.subr.mxu0 0.0
      %3328 = vmatpush1.msra.mxu0 0.0
      %3329 = vmatprep.subr.mxu0 0.0
      %3330 = vmatpush1.msra.mxu0 0.0
      %3331 = vmatprep.mubr.f32.mxu0 0.0
      %3332 = vmatmul.mubr.f32.gmra.mrb[0].mxu0 %v3265
      %v3333 = vpop.f32.mrb[0].mxu0
      %v3334 = vadd.f32 %v3186, %v3333
      %v3335 = vpop.f32.mrb[0].mxu0
      %3336 = vdwg.mxu0
      %vm3337 = vcmask 25600
      %3338 = vst.msk [vmem:[%s141] sm:$0x3] %vm3337, %v3334
      %p3339 = scmp.lt.s32.totalorder %s13, 7
      %s3340 = scalar_select %p3339, %s13, 7
      %s3341 = smul.addr %s3340, 2
      %s3342 = scalar_lea.vmem %s2, %s3341
      // Predicated region
      $region29: #{policy_chooser.1} parent=27 // pred_check
        %p3343 = pneg %p78
      $region30: #{policy_chooser.1} parent=27 // pred_check_branch
        %3345 = sbr.rel (%p3343) target = $region32
      $region31: #{policy_chooser.1} parent=27 // pred_region
        _
      $region32: #{policy_chooser.1} parent=27 // pred_fallthru
        _
    $region28: #{policy_chooser.1} parent=5 // pred_fallthru
      _
    %p3346 = scmp.le.s32.totalorder 2, %s8
    // Predicated region
    $region33: #{policy_chooser.1} parent=5 // pred_check
      %p3347 = pneg %p3346
    $region34: #{policy_chooser.1} parent=5 // pred_check_branch
      %3349 = sbr.rel (%p3347) target = $region36
    $region35: #{policy_chooser.1} parent=5 // pred_region
      %s3350 = ssub.s32 %s8, 2
      // Predicated region
      $region37: #{policy_chooser.1} parent=35 // pred_check
        %p3351 = pneg %p84
      $region38: #{policy_chooser.1} parent=35 // pred_check_branch
        %3353 = sbr.rel (%p3351) target = $region40
      $region39: #{policy_chooser.1} parent=35 // pred_region
        %p3354 = scmp.lt.s32.totalorder %s14, 7
        %s3355 = scalar_select %p3354, %s14, 7
        %s3356 = smul.addr %s3355, 2
        %s3357 = scalar_lea.vmem %s2, %s3356
      $region40: #{policy_chooser.1} parent=35 // pred_fallthru
        _
    $region36: #{policy_chooser.1} parent=5 // pred_fallthru
      _
  $region6: #{policy_chooser.1} parent=0 // loop_footer
    %s12 = sadd.s32 1, %s8
  $region7: #{policy_chooser.1} parent=0 // loop_footer_branch
    %7 = sbr.rel target = $region3
  $region8: #{policy_chooser.1} parent=0 // loop_exit
    _

</llo_original>
